<compile_context>
chip_gen: v6e
topology: v6e:2x2x1
jax: 0.10.0
libtpu: 0.0.40
codegen_flags: <defaults>
</compile_context>

<pallas_src>
import math
from functools import partial

import jax
import jax.numpy as jnp
from jax import lax
from jax.experimental import pallas as pl
from jax.experimental.pallas import tpu as pltpu


def encoder_layer_kernel(x_ref, q_ref, k_ref, v_ref,
                         wo_ref, bo_ref,
                         g1_ref, beta1_ref,
                         w1_ref, b1_ref, w2_ref, b2_ref,
                         g2_ref, beta2_ref,
                         out_ref, *, eps, kv_tile):
    f32 = jnp.float32
    bf16 = jnp.bfloat16

    x = x_ref[0].astype(f32)          # (tq, D)   residual path, f32
    qh = q_ref[0]                     # (H, tq, Dh) bf16, 1/sqrt(Dh) pre-folded
    H, tq, Dh = qh.shape
    S = k_ref.shape[2]
    nk = S // kv_tile

    # ---- flash-style attention over K/V tiles (online softmax, mask=None) ----
    def kv_step(kt, carry):
        m, l, acc = carry
        off = pl.multiple_of(kt * kv_tile, kv_tile)
        kb = k_ref[0, :, pl.ds(off, kv_tile), :]          # (H, tk, Dh) bf16
        vb = v_ref[0, :, pl.ds(off, kv_tile), :]          # (H, tk, Dh) bf16
        s = jnp.einsum('hqe,hke->hqk', qh, kb,
                       preferred_element_type=f32)        # (H, tq, tk)
        m_new = jnp.maximum(m, jnp.max(s, axis=-1, keepdims=True))
        p = jnp.exp(s - m_new)
        alpha = jnp.exp(m - m_new)
        l_new = alpha * l + jnp.sum(p, axis=-1, keepdims=True)
        acc_new = alpha * acc + jnp.einsum('hqk,hke->hqe', p.astype(bf16), vb,
                                           preferred_element_type=f32)
        return m_new, l_new, acc_new

    m0 = jnp.full((H, tq, 1), -jnp.inf, f32)
    l0 = jnp.zeros((H, tq, 1), f32)
    acc0 = jnp.zeros((H, tq, Dh), f32)
    _, l, acc = lax.fori_loop(0, nk, kv_step, (m0, l0, acc0))

    # normalize (EUP reciprocal) and drop to bf16 before the relayout/matmul
    o = (acc * pl.reciprocal(l, approx=True)).astype(bf16)      # (H, tq, Dh)

    # ---- concat heads along lanes + single fused output projection (K = D) ----
    o_flat = jnp.concatenate([o[h] for h in range(H)], axis=-1)  # (tq, D) bf16
    attn = jnp.dot(o_flat, wo_ref[...],
                   preferred_element_type=f32) + bo_ref[...]     # (tq, D) f32

    # ---- add & LayerNorm 1 (normalize over d_model) ----
    h1 = x + attn
    mu1 = jnp.mean(h1, axis=-1, keepdims=True)
    var1 = jnp.mean(jnp.square(h1 - mu1), axis=-1, keepdims=True)
    out1 = (h1 - mu1) * lax.rsqrt(var1 + eps) * g1_ref[...] + beta1_ref[...]

    # ---- position-wise feed-forward: Linear -> ReLU -> Linear ----
    f = jnp.dot(out1.astype(bf16), w1_ref[...],
                preferred_element_type=f32) + b1_ref[...]        # (tq, F)
    f = jnp.maximum(f, 0.0)
    f = jnp.dot(f.astype(bf16), w2_ref[...],
                preferred_element_type=f32) + b2_ref[...]        # (tq, D)
    # TODO(synk): dropout inside the FFN is omitted (inference / identity behaviour).

    # ---- add & LayerNorm 2 ----
    h2 = out1 + f
    mu2 = jnp.mean(h2, axis=-1, keepdims=True)
    var2 = jnp.mean(jnp.square(h2 - mu2), axis=-1, keepdims=True)
    out2 = (h2 - mu2) * lax.rsqrt(var2 + eps) * g2_ref[...] + beta2_ref[...]

    out_ref[0] = out2.astype(out_ref.dtype)


def _pick_tile(n, max_tile):
    """Largest tile <= max_tile that divides n (prefers 128-multiples)."""
    if n <= max_tile:
        return n
    for t in (max_tile, 512, 256, 128, 64, 32, 16, 8):
        if t <= max_tile and n % t == 0:
            return t
    return n


def encoder_layer(x, params, *, num_heads, eps=1e-5, q_tile=256, kv_tile=512,
                  compute_dtype=jnp.bfloat16):
    B, S, D = x.shape
    H = num_heads
    assert D % H == 0, "d_model must be divisible by num_heads"
    Dh = D // H

    tq = _pick_tile(S, q_tile)
    tk = _pick_tile(S, kv_tile)
    nq = S // tq
    scale = 1.0 / math.sqrt(Dh)
    f32 = jnp.float32

    # ---- fused QKV projection: one (B*S, D) x (D, 3D) matmul in XLA, computed
    #      once per sequence (NOT per query tile), streamed bf16 head-major. ----
    wqkv = jnp.concatenate([params["wq"] * scale, params["wk"], params["wv"]],
                           axis=1).astype(compute_dtype)                # (D, 3D)
    bqkv = jnp.concatenate([params["bq"] * scale, params["bk"], params["bv"]],
                           axis=1).astype(f32)                          # (1, 3D)
    qkv = (jnp.einsum('bsd,de->bse', x.astype(compute_dtype), wqkv,
                      preferred_element_type=f32) + bqkv).astype(compute_dtype)

    def heads(t):  # (B, S, D) -> (B, H, S, Dh)
        return t.reshape(B, S, H, Dh).transpose(0, 2, 1, 3)

    qh = heads(qkv[..., :D])
    kh = heads(qkv[..., D:2 * D])
    vh = heads(qkv[..., 2 * D:])

    wo = params["wo"].astype(compute_dtype)
    bo = params["bo"].astype(f32)
    g1, beta1 = params["g1"].astype(f32), params["beta1"].astype(f32)
    w1, b1 = params["w1"].astype(compute_dtype), params["b1"].astype(f32)
    w2, b2 = params["w2"].astype(compute_dtype), params["b2"].astype(f32)
    g2, beta2 = params["g2"].astype(f32), params["beta2"].astype(f32)
    F = w1.shape[1]

    args = [x, qh, kh, vh,
            wo, bo, g1, beta1, w1, b1, w2, b2, g2, beta2]

    # generation-aware VMEM budget (~54 MiB on v7x, 100 MiB on v5e/v6e)
    try:
        vmem_cap = pltpu.get_tpu_info().vmem_capacity_bytes
    except Exception:
        vmem_cap = 64 * 1024 * 1024
    vmem_limit = min(100 * 1024 * 1024, int(vmem_cap * 0.85))

    flops = 4 * B * S * S * D + 2 * B * S * D * D + 4 * B * S * D * F
    bytes_accessed = B * S * D * (4 + 3 * 2 + 4) + 2 * (D * D + 2 * D * F)
    cost = pl.CostEstimate(flops=flops, transcendentals=B * H * S * S,
                           bytes_accessed=bytes_accessed)

    kernel = partial(encoder_layer_kernel, eps=eps, kv_tile=tk)

    def build(single_buffer_weights):
        def const_spec(a):
            nd = a.ndim
            idx = lambda b, q, _nd=nd: (0,) * _nd
            if single_buffer_weights:
                # block index never changes -> no double buffering needed
                return pl.BlockSpec(a.shape, idx, pipeline_mode=pl.Buffered(1))
            return pl.BlockSpec(a.shape, idx)

        in_specs = [
            pl.BlockSpec((1, tq, D), lambda b, q: (b, q, 0)),         # residual tile (f32)
            pl.BlockSpec((1, H, tq, Dh), lambda b, q: (b, 0, q, 0)),  # Q heads tile (bf16)
            pl.BlockSpec((1, H, S, Dh), lambda b, q: (b, 0, 0, 0)),   # K heads, per batch
            pl.BlockSpec((1, H, S, Dh), lambda b, q: (b, 0, 0, 0)),   # V heads, per batch
        ] + [const_spec(a) for a in args[4:]]

        return pl.pallas_call(
            kernel,
            out_shape=jax.ShapeDtypeStruct((B, S, D), x.dtype),
            grid=(B, nq),
            in_specs=in_specs,
            out_specs=pl.BlockSpec((1, tq, D), lambda b, q: (b, q, 0)),
            compiler_params=pltpu.CompilerParams(
                dimension_semantics=("parallel", "parallel"),
                vmem_limit_bytes=vmem_limit),
            cost_estimate=cost,
        )

    try:
        return build(True)(*args)
    except Exception:
        # fall back to default double-buffered weights if Buffered(1) is unsupported
        return build(False)(*args)


def init_params(key, d_model, ffn_hidden):
    ks = jax.random.split(key, 8)

    def lin(k, fan_in, fan_out):
        w = jax.random.normal(k, (fan_in, fan_out), jnp.float32) * (1.0 / math.sqrt(fan_in))
        b = jnp.zeros((1, fan_out), jnp.float32)
        return w, b

    wq, bq = lin(ks[0], d_model, d_model)
    wk, bk = lin(ks[1], d_model, d_model)
    wv, bv = lin(ks[2], d_model, d_model)
    wo, bo = lin(ks[3], d_model, d_model)
    w1, b1 = lin(ks[4], d_model, ffn_hidden)
    w2, b2 = lin(ks[5], ffn_hidden, d_model)
    # make biases non-trivial but deterministic
    bq = jax.random.normal(ks[6], (1, d_model), jnp.float32) * 0.02
    b1 = jax.random.normal(ks[7], (1, ffn_hidden), jnp.float32) * 0.02
    return dict(
        wq=wq, bq=bq, wk=wk, bk=bk, wv=wv, bv=bv, wo=wo, bo=bo,
        g1=jnp.ones((1, d_model), jnp.float32), beta1=jnp.zeros((1, d_model), jnp.float32),
        w1=w1, b1=b1, w2=w2, b2=b2,
        g2=jnp.ones((1, d_model), jnp.float32), beta2=jnp.zeros((1, d_model), jnp.float32),
    )


def encoder_layer_ref(x, p, *, num_heads, eps=1e-5):
    """Pure-JAX f32 reference mirroring the PyTorch forward pass."""
    B, S, D = x.shape
    Dh = D // num_heads
    q = x @ p["wq"] + p["bq"]
    k = x @ p["wk"] + p["bk"]
    v = x @ p["wv"] + p["bv"]

    def split(t):  # (B,S,D) -> (B,H,S,Dh)
        return t.reshape(B, S, num_heads, Dh).transpose(0, 2, 1, 3)

    qh, kh, vh = split(q), split(k), split(v)
    s = jnp.einsum("bhqd,bhkd->bhqk", qh, kh) / math.sqrt(Dh)
    p_attn = jax.nn.softmax(s, axis=-1)
    o = jnp.einsum("bhqk,bhkd->bhqd", p_attn, vh).transpose(0, 2, 1, 3).reshape(B, S, D)
    attn = o @ p["wo"] + p["bo"]

    def ln(t, g, b):
        mu = t.mean(-1, keepdims=True)
        var = ((t - mu) ** 2).mean(-1, keepdims=True)
        return (t - mu) / jnp.sqrt(var + eps) * g + b

    out1 = ln(x + attn, p["g1"], p["beta1"])
    f = jnp.maximum(out1 @ p["w1"] + p["b1"], 0.0) @ p["w2"] + p["b2"]
    return ln(out1 + f, p["g2"], p["beta2"])


if __name__ == "__main__":
    B, S, d_model, num_heads, ffn_hidden = 2, 16, 32, 4, 64

    key = jax.random.PRNGKey(0)
    kx, kp = jax.random.split(key)
    x = jax.random.normal(kx, (B, S, d_model), jnp.float32)
    params = init_params(kp, d_model, ffn_hidden)

    # small tiles so the demo exercises both the query-tile grid and the
    # flash-style K/V inner loop (grid=(2,2), nk=2)
    out = encoder_layer(x, params, num_heads=num_heads, q_tile=8, kv_tile=8)
    out = jax.block_until_ready(out)

    ref = encoder_layer_ref(x, params, num_heads=num_heads)
    assert out.shape == (B, S, d_model)
    # bf16 matmul operands (f32 accumulation) + approx reciprocal -> looser tol.
    assert jnp.allclose(out, ref, atol=3e-2, rtol=3e-2), "Pallas output mismatch vs reference"

    print("KERNEL_OK")
</pallas_src>

<mosaic_0001>
module attributes {stable_mosaic.version = 11 : i64} {
  func.func @encoder_layer_kernel(%arg0: i32, %arg1: i32, %arg2: memref<1x8x32xf32, #tpu.memory_space<vmem>>, %arg3: memref<1x4x8x8xbf16, #tpu.memory_space<vmem>>, %arg4: memref<1x4x16x8xbf16, #tpu.memory_space<vmem>>, %arg5: memref<1x4x16x8xbf16, #tpu.memory_space<vmem>>, %arg6: memref<32x32xbf16, #tpu.memory_space<vmem>>, %arg7: memref<1x32xf32, #tpu.memory_space<vmem>>, %arg8: memref<1x32xf32, #tpu.memory_space<vmem>>, %arg9: memref<1x32xf32, #tpu.memory_space<vmem>>, %arg10: memref<32x64xbf16, #tpu.memory_space<vmem>>, %arg11: memref<1x64xf32, #tpu.memory_space<vmem>>, %arg12: memref<64x32xbf16, #tpu.memory_space<vmem>>, %arg13: memref<1x32xf32, #tpu.memory_space<vmem>>, %arg14: memref<1x32xf32, #tpu.memory_space<vmem>>, %arg15: memref<1x32xf32, #tpu.memory_space<vmem>>, %arg16: memref<1x8x32xf32, #tpu.memory_space<vmem>>) attributes {dimension_semantics = [#tpu.dimension_semantics<parallel>, #tpu.dimension_semantics<parallel>], iteration_bounds = array<i64: 2, 2>, scalar_prefetch = 0 : i64, scratch_operands = 0 : i64, tpu.core_type = #tpu.core_type<tc>, window_params = [{transform_indices = @transform_0, window_bounds = array<i64: 1, 8, 32>}, {transform_indices = @transform_1, window_bounds = array<i64: 1, 4, 8, 8>}, {transform_indices = @transform_2, window_bounds = array<i64: 1, 4, 16, 8>}, {transform_indices = @transform_3, window_bounds = array<i64: 1, 4, 16, 8>}, {pipeline_mode = #tpu.pipeline_mode<synchronous>, transform_indices = @transform_4, window_bounds = array<i64: 32, 32>}, {pipeline_mode = #tpu.pipeline_mode<synchronous>, transform_indices = @transform_5, window_bounds = array<i64: 1, 32>}, {pipeline_mode = #tpu.pipeline_mode<synchronous>, transform_indices = @transform_6, window_bounds = array<i64: 1, 32>}, {pipeline_mode = #tpu.pipeline_mode<synchronous>, transform_indices = @transform_7, window_bounds = array<i64: 1, 32>}, {pipeline_mode = #tpu.pipeline_mode<synchronous>, transform_indices = @transform_8, window_bounds = array<i64: 32, 64>}, {pipeline_mode = #tpu.pipeline_mode<synchronous>, transform_indices = @transform_9, window_bounds = array<i64: 1, 64>}, {pipeline_mode = #tpu.pipeline_mode<synchronous>, transform_indices = @transform_10, window_bounds = array<i64: 64, 32>}, {pipeline_mode = #tpu.pipeline_mode<synchronous>, transform_indices = @transform_11, window_bounds = array<i64: 1, 32>}, {pipeline_mode = #tpu.pipeline_mode<synchronous>, transform_indices = @transform_12, window_bounds = array<i64: 1, 32>}, {pipeline_mode = #tpu.pipeline_mode<synchronous>, transform_indices = @transform_13, window_bounds = array<i64: 1, 32>}, {transform_indices = @transform_14, window_bounds = array<i64: 1, 8, 32>}]} {
    %c0 = arith.constant 0 : index
    %c0_0 = arith.constant 0 : index
    %c0_1 = arith.constant 0 : index
    %0 = vector.load %arg2[%c0, %c0_0, %c0_1] : memref<1x8x32xf32, #tpu.memory_space<vmem>>, vector<1x8x32xf32>
    %1 = vector.shape_cast %0 : vector<1x8x32xf32> to vector<8x32xf32>
    %c0_2 = arith.constant 0 : index
    %c0_3 = arith.constant 0 : index
    %c0_4 = arith.constant 0 : index
    %c0_5 = arith.constant 0 : index
    %2 = vector.load %arg3[%c0_2, %c0_3, %c0_4, %c0_5] : memref<1x4x8x8xbf16, #tpu.memory_space<vmem>>, vector<1x4x8x8xbf16>
    %3 = vector.shape_cast %2 : vector<1x4x8x8xbf16> to vector<4x8x8xbf16>
    %cst = arith.constant 0xFF800000 : f32
    %4 = vector.broadcast %cst : f32 to vector<4x8x1xf32>
    %cst_6 = arith.constant 0.000000e+00 : f32
    %5 = vector.broadcast %cst_6 : f32 to vector<4x8x1xf32>
    %cst_7 = arith.constant 0.000000e+00 : f32
    %6 = vector.broadcast %cst_7 : f32 to vector<4x8x8xf32>
    %c0_i32 = arith.constant 0 : i32
    %c2_i32 = arith.constant 2 : i32
    %7 = arith.addi %c0_i32, %c2_i32 : i32
    %c1_i32 = arith.constant 1 : i32
    %8:3 = scf.for %arg17 = %c0_i32 to %7 step %c1_i32 iter_args(%arg18 = %4, %arg19 = %5, %arg20 = %6) -> (vector<4x8x1xf32>, vector<4x8x1xf32>, vector<4x8x8xf32>)  : i32 {
      %c8_i32 = arith.constant 8 : i32
      %94 = arith.muli %arg17, %c8_i32 : i32
      %95 = tpu.assume_multiple %94, 8 : i32
      %c0_46 = arith.constant 0 : index
      %c0_47 = arith.constant 0 : index
      %96 = arith.index_cast %95 : i32 to index
      %c0_48 = arith.constant 0 : index
      %97 = vector.load %arg4[%c0_46, %c0_47, %96, %c0_48] : memref<1x4x16x8xbf16, #tpu.memory_space<vmem>>, vector<1x4x8x8xbf16>
      %98 = vector.shape_cast %97 : vector<1x4x8x8xbf16> to vector<4x8x8xbf16>
      %c0_49 = arith.constant 0 : index
      %c0_50 = arith.constant 0 : index
      %99 = arith.index_cast %95 : i32 to index
      %c0_51 = arith.constant 0 : index
      %100 = vector.load %arg5[%c0_49, %c0_50, %99, %c0_51] : memref<1x4x16x8xbf16, #tpu.memory_space<vmem>>, vector<1x4x8x8xbf16>
      %101 = vector.shape_cast %100 : vector<1x4x8x8xbf16> to vector<4x8x8xbf16>
      "tpu.trace_start"() <{level = 10 : i32, message = "hqe,hke->hqk"}> : () -> ()
      %cst_52 = arith.constant dense<0.000000e+00> : vector<4x8x8xf32>
      %102 = tpu.matmul %3, %98, %cst_52 {dimension_numbers = #tpu.dot_dimension_numbers<[2], [2], [1], [1], [0, 0, 0, 1, 1, 1], [0], [0]>} : vector<4x8x8xbf16>, vector<4x8x8xbf16>, vector<4x8x8xf32> -> vector<4x8x8xf32>
      "tpu.trace_stop"() : () -> ()
      %cst_53 = arith.constant dense<0xFF800000> : vector<4x8xf32>
      %103 = vector.multi_reduction <maximumf>, %102, %cst_53 [2] : vector<4x8x8xf32> to vector<4x8xf32>
      %104 = vector.shape_cast %103 : vector<4x8xf32> to vector<4x8x1xf32>
      %105 = arith.maximumf %arg18, %104 : vector<4x8x1xf32>
      %106 = vector.broadcast %105 : vector<4x8x1xf32> to vector<4x8x8xf32>
      %107 = arith.subf %102, %106 : vector<4x8x8xf32>
      %108 = math.exp %107 : vector<4x8x8xf32>
      %109 = arith.subf %arg18, %105 : vector<4x8x1xf32>
      %110 = math.exp %109 : vector<4x8x1xf32>
      %111 = arith.mulf %110, %arg19 : vector<4x8x1xf32>
      %cst_54 = arith.constant dense<0.000000e+00> : vector<4x8xf32>
      %112 = vector.multi_reduction <add>, %108, %cst_54 [2] : vector<4x8x8xf32> to vector<4x8xf32>
      %113 = vector.shape_cast %112 : vector<4x8xf32> to vector<4x8x1xf32>
      %114 = arith.addf %111, %113 : vector<4x8x1xf32>
      %115 = vector.broadcast %110 : vector<4x8x1xf32> to vector<4x8x8xf32>
      %116 = arith.mulf %115, %arg20 : vector<4x8x8xf32>
      %117 = arith.truncf %108 : vector<4x8x8xf32> to vector<4x8x8xbf16>
      "tpu.trace_start"() <{level = 10 : i32, message = "hqk,hke->hqe"}> : () -> ()
      %cst_55 = arith.constant dense<0.000000e+00> : vector<4x8x8xf32>
      %118 = tpu.matmul %117, %101, %cst_55 {dimension_numbers = #tpu.dot_dimension_numbers<[2], [1], [1], [2], [0, 0, 0, 1, 1, 2], [0], [0]>} : vector<4x8x8xbf16>, vector<4x8x8xbf16>, vector<4x8x8xf32> -> vector<4x8x8xf32>
      "tpu.trace_stop"() : () -> ()
      %119 = arith.addf %116, %118 : vector<4x8x8xf32>
      scf.yield %105, %114, %119 : vector<4x8x1xf32>, vector<4x8x1xf32>, vector<4x8x8xf32>
    }
    %c2_i32_8 = arith.constant 2 : i32
    %9 = tpu.reciprocal %8#1 {approx = true} : vector<4x8x1xf32> -> vector<4x8x1xf32>
    %10 = vector.broadcast %9 : vector<4x8x1xf32> to vector<4x8x8xf32>
    %11 = arith.mulf %8#2, %10 : vector<4x8x8xf32>
    %12 = arith.truncf %11 : vector<4x8x8xf32> to vector<4x8x8xbf16>
    %13 = vector.extract_strided_slice %12 {offsets = [0, 0, 0], sizes = [1, 8, 8], strides = [1, 1, 1]} : vector<4x8x8xbf16> to vector<1x8x8xbf16>
    %14 = vector.shape_cast %13 : vector<1x8x8xbf16> to vector<8x8xbf16>
    %15 = vector.extract_strided_slice %12 {offsets = [1, 0, 0], sizes = [1, 8, 8], strides = [1, 1, 1]} : vector<4x8x8xbf16> to vector<1x8x8xbf16>
    %16 = vector.shape_cast %15 : vector<1x8x8xbf16> to vector<8x8xbf16>
    %17 = vector.extract_strided_slice %12 {offsets = [2, 0, 0], sizes = [1, 8, 8], strides = [1, 1, 1]} : vector<4x8x8xbf16> to vector<1x8x8xbf16>
    %18 = vector.shape_cast %17 : vector<1x8x8xbf16> to vector<8x8xbf16>
    %19 = vector.extract_strided_slice %12 {offsets = [3, 0, 0], sizes = [1, 8, 8], strides = [1, 1, 1]} : vector<4x8x8xbf16> to vector<1x8x8xbf16>
    %20 = vector.shape_cast %19 : vector<1x8x8xbf16> to vector<8x8xbf16>
    %21 = tpu.concatenate %14, %16, %18, %20 in 1 : vector<8x8xbf16>, vector<8x8xbf16>, vector<8x8xbf16>, vector<8x8xbf16> -> vector<8x32xbf16>
    %c0_9 = arith.constant 0 : index
    %c0_10 = arith.constant 0 : index
    %22 = vector.load %arg6[%c0_9, %c0_10] : memref<32x32xbf16, #tpu.memory_space<vmem>>, vector<32x32xbf16>
    %cst_11 = arith.constant dense<0.000000e+00> : vector<8x32xf32>
    %23 = tpu.matmul %21, %22, %cst_11 {dimension_numbers = #tpu.dot_dimension_numbers<[1], [0], [0], [1], [0, 0, 1, 1], [], []>} : vector<8x32xbf16>, vector<32x32xbf16>, vector<8x32xf32> -> vector<8x32xf32>
    %c0_12 = arith.constant 0 : index
    %c0_13 = arith.constant 0 : index
    %24 = vector.load %arg7[%c0_12, %c0_13] : memref<1x32xf32, #tpu.memory_space<vmem>>, vector<1x32xf32>
    %25 = vector.broadcast %24 : vector<1x32xf32> to vector<8x32xf32>
    %26 = arith.addf %23, %25 : vector<8x32xf32>
    %27 = arith.addf %1, %26 : vector<8x32xf32>
    %cst_14 = arith.constant dense<0.000000e+00> : vector<8xf32>
    %28 = vector.multi_reduction <add>, %27, %cst_14 [1] : vector<8x32xf32> to vector<8xf32>
    %29 = vector.shape_cast %28 : vector<8xf32> to vector<8x1xf32>
    %cst_15 = arith.constant 3.200000e+01 : f32
    %30 = vector.broadcast %cst_15 : f32 to vector<8x1xf32>
    %31 = arith.divf %29, %30 : vector<8x1xf32>
    %32 = vector.broadcast %31 : vector<8x1xf32> to vector<8x32xf32>
    %33 = arith.subf %27, %32 : vector<8x32xf32>
    %34 = arith.mulf %33, %33 : vector<8x32xf32>
    %cst_16 = arith.constant dense<0.000000e+00> : vector<8xf32>
    %35 = vector.multi_reduction <add>, %34, %cst_16 [1] : vector<8x32xf32> to vector<8xf32>
    %36 = vector.shape_cast %35 : vector<8xf32> to vector<8x1xf32>
    %cst_17 = arith.constant 3.200000e+01 : f32
    %37 = vector.broadcast %cst_17 : f32 to vector<8x1xf32>
    %38 = arith.divf %36, %37 : vector<8x1xf32>
    %39 = vector.broadcast %31 : vector<8x1xf32> to vector<8x32xf32>
    %40 = arith.subf %27, %39 : vector<8x32xf32>
    %cst_18 = arith.constant 9.99999974E-6 : f32
    %41 = vector.broadcast %cst_18 : f32 to vector<8x1xf32>
    %42 = arith.addf %38, %41 : vector<8x1xf32>
    %43 = math.rsqrt %42 : vector<8x1xf32>
    %44 = vector.broadcast %43 : vector<8x1xf32> to vector<8x32xf32>
    %45 = arith.mulf %40, %44 : vector<8x32xf32>
    %c0_19 = arith.constant 0 : index
    %c0_20 = arith.constant 0 : index
    %46 = vector.load %arg8[%c0_19, %c0_20] : memref<1x32xf32, #tpu.memory_space<vmem>>, vector<1x32xf32>
    %47 = vector.broadcast %46 : vector<1x32xf32> to vector<8x32xf32>
    %48 = arith.mulf %45, %47 : vector<8x32xf32>
    %c0_21 = arith.constant 0 : index
    %c0_22 = arith.constant 0 : index
    %49 = vector.load %arg9[%c0_21, %c0_22] : memref<1x32xf32, #tpu.memory_space<vmem>>, vector<1x32xf32>
    %50 = vector.broadcast %49 : vector<1x32xf32> to vector<8x32xf32>
    %51 = arith.addf %48, %50 : vector<8x32xf32>
    %52 = arith.truncf %51 : vector<8x32xf32> to vector<8x32xbf16>
    %c0_23 = arith.constant 0 : index
    %c0_24 = arith.constant 0 : index
    %53 = vector.load %arg10[%c0_23, %c0_24] : memref<32x64xbf16, #tpu.memory_space<vmem>>, vector<32x64xbf16>
    %cst_25 = arith.constant dense<0.000000e+00> : vector<8x64xf32>
    %54 = tpu.matmul %52, %53, %cst_25 {dimension_numbers = #tpu.dot_dimension_numbers<[1], [0], [0], [1], [0, 0, 1, 1], [], []>} : vector<8x32xbf16>, vector<32x64xbf16>, vector<8x64xf32> -> vector<8x64xf32>
    %c0_26 = arith.constant 0 : index
    %c0_27 = arith.constant 0 : index
    %55 = vector.load %arg11[%c0_26, %c0_27] : memref<1x64xf32, #tpu.memory_space<vmem>>, vector<1x64xf32>
    %56 = vector.broadcast %55 : vector<1x64xf32> to vector<8x64xf32>
    %57 = arith.addf %54, %56 : vector<8x64xf32>
    %cst_28 = arith.constant 0.000000e+00 : f32
    %58 = vector.broadcast %cst_28 : f32 to vector<8x64xf32>
    %59 = arith.maximumf %57, %58 : vector<8x64xf32>
    %60 = arith.truncf %59 : vector<8x64xf32> to vector<8x64xbf16>
    %c0_29 = arith.constant 0 : index
    %c0_30 = arith.constant 0 : index
    %61 = vector.load %arg12[%c0_29, %c0_30] : memref<64x32xbf16, #tpu.memory_space<vmem>>, vector<64x32xbf16>
    %cst_31 = arith.constant dense<0.000000e+00> : vector<8x32xf32>
    %62 = tpu.matmul %60, %61, %cst_31 {dimension_numbers = #tpu.dot_dimension_numbers<[1], [0], [0], [1], [0, 0, 1, 1], [], []>} : vector<8x64xbf16>, vector<64x32xbf16>, vector<8x32xf32> -> vector<8x32xf32>
    %c0_32 = arith.constant 0 : index
    %c0_33 = arith.constant 0 : index
    %63 = vector.load %arg13[%c0_32, %c0_33] : memref<1x32xf32, #tpu.memory_space<vmem>>, vector<1x32xf32>
    %64 = vector.broadcast %63 : vector<1x32xf32> to vector<8x32xf32>
    %65 = arith.addf %62, %64 : vector<8x32xf32>
    %66 = arith.addf %51, %65 : vector<8x32xf32>
    %cst_34 = arith.constant dense<0.000000e+00> : vector<8xf32>
    %67 = vector.multi_reduction <add>, %66, %cst_34 [1] : vector<8x32xf32> to vector<8xf32>
    %68 = vector.shape_cast %67 : vector<8xf32> to vector<8x1xf32>
    %cst_35 = arith.constant 3.200000e+01 : f32
    %69 = vector.broadcast %cst_35 : f32 to vector<8x1xf32>
    %70 = arith.divf %68, %69 : vector<8x1xf32>
    %71 = vector.broadcast %70 : vector<8x1xf32> to vector<8x32xf32>
    %72 = arith.subf %66, %71 : vector<8x32xf32>
    %73 = arith.mulf %72, %72 : vector<8x32xf32>
    %cst_36 = arith.constant dense<0.000000e+00> : vector<8xf32>
    %74 = vector.multi_reduction <add>, %73, %cst_36 [1] : vector<8x32xf32> to vector<8xf32>
    %75 = vector.shape_cast %74 : vector<8xf32> to vector<8x1xf32>
    %cst_37 = arith.constant 3.200000e+01 : f32
    %76 = vector.broadcast %cst_37 : f32 to vector<8x1xf32>
    %77 = arith.divf %75, %76 : vector<8x1xf32>
    %78 = vector.broadcast %70 : vector<8x1xf32> to vector<8x32xf32>
    %79 = arith.subf %66, %78 : vector<8x32xf32>
    %cst_38 = arith.constant 9.99999974E-6 : f32
    %80 = vector.broadcast %cst_38 : f32 to vector<8x1xf32>
    %81 = arith.addf %77, %80 : vector<8x1xf32>
    %82 = math.rsqrt %81 : vector<8x1xf32>
    %83 = vector.broadcast %82 : vector<8x1xf32> to vector<8x32xf32>
    %84 = arith.mulf %79, %83 : vector<8x32xf32>
    %c0_39 = arith.constant 0 : index
    %c0_40 = arith.constant 0 : index
    %85 = vector.load %arg14[%c0_39, %c0_40] : memref<1x32xf32, #tpu.memory_space<vmem>>, vector<1x32xf32>
    %86 = vector.broadcast %85 : vector<1x32xf32> to vector<8x32xf32>
    %87 = arith.mulf %84, %86 : vector<8x32xf32>
    %c0_41 = arith.constant 0 : index
    %c0_42 = arith.constant 0 : index
    %88 = vector.load %arg15[%c0_41, %c0_42] : memref<1x32xf32, #tpu.memory_space<vmem>>, vector<1x32xf32>
    %89 = vector.broadcast %88 : vector<1x32xf32> to vector<8x32xf32>
    %90 = arith.addf %87, %89 : vector<8x32xf32>
    %c0_43 = arith.constant 0 : index
    %c0_44 = arith.constant 0 : index
    %c0_45 = arith.constant 0 : index
    %91 = vector.load %arg16[%c0_43, %c0_44, %c0_45] : memref<1x8x32xf32, #tpu.memory_space<vmem>>, vector<1x8x32xf32>
    %92 = vector.shape_cast %91 : vector<1x8x32xf32> to vector<8x32xf32>
    %93 = vector.shape_cast %90 : vector<8x32xf32> to vector<1x8x32xf32>
    tpu.vector_store %arg16[%c0_43, %c0_44, %c0_45], %93 {strides = array<i32>} : memref<1x8x32xf32, #tpu.memory_space<vmem>>, vector<1x8x32xf32>,
    return
  }
  func.func @transform_0(%arg0: i32, %arg1: i32) -> (i32, i32, i32) {
    %c0_i32 = arith.constant 0 : i32
    %c0_i32_0 = arith.constant 0 : i32
    return %arg0, %arg1, %c0_i32 : i32, i32, i32
  }
  func.func @transform_1(%arg0: i32, %arg1: i32) -> (i32, i32, i32, i32) {
    %c0_i32 = arith.constant 0 : i32
    %c0_i32_0 = arith.constant 0 : i32
    %c0_i32_1 = arith.constant 0 : i32
    return %arg0, %c0_i32, %arg1, %c0_i32_0 : i32, i32, i32, i32
  }
  func.func @transform_2(%arg0: i32, %arg1: i32) -> (i32, i32, i32, i32) {
    %c0_i32 = arith.constant 0 : i32
    %c0_i32_0 = arith.constant 0 : i32
    %c0_i32_1 = arith.constant 0 : i32
    %c0_i32_2 = arith.constant 0 : i32
    return %arg0, %c0_i32, %c0_i32_0, %c0_i32_1 : i32, i32, i32, i32
  }
  func.func @transform_3(%arg0: i32, %arg1: i32) -> (i32, i32, i32, i32) {
    %c0_i32 = arith.constant 0 : i32
    %c0_i32_0 = arith.constant 0 : i32
    %c0_i32_1 = arith.constant 0 : i32
    %c0_i32_2 = arith.constant 0 : i32
    return %arg0, %c0_i32, %c0_i32_0, %c0_i32_1 : i32, i32, i32, i32
  }
  func.func @transform_4(%arg0: i32, %arg1: i32) -> (i32, i32) {
    %c0_i32 = arith.constant 0 : i32
    %c0_i32_0 = arith.constant 0 : i32
    %c0_i32_1 = arith.constant 0 : i32
    return %c0_i32, %c0_i32_0 : i32, i32
  }
  func.func @transform_5(%arg0: i32, %arg1: i32) -> (i32, i32) {
    %c0_i32 = arith.constant 0 : i32
    %c0_i32_0 = arith.constant 0 : i32
    %c0_i32_1 = arith.constant 0 : i32
    return %c0_i32, %c0_i32_0 : i32, i32
  }
  func.func @transform_6(%arg0: i32, %arg1: i32) -> (i32, i32) {
    %c0_i32 = arith.constant 0 : i32
    %c0_i32_0 = arith.constant 0 : i32
    %c0_i32_1 = arith.constant 0 : i32
    return %c0_i32, %c0_i32_0 : i32, i32
  }
  func.func @transform_7(%arg0: i32, %arg1: i32) -> (i32, i32) {
    %c0_i32 = arith.constant 0 : i32
    %c0_i32_0 = arith.constant 0 : i32
    %c0_i32_1 = arith.constant 0 : i32
    return %c0_i32, %c0_i32_0 : i32, i32
  }
  func.func @transform_8(%arg0: i32, %arg1: i32) -> (i32, i32) {
    %c0_i32 = arith.constant 0 : i32
    %c0_i32_0 = arith.constant 0 : i32
    %c0_i32_1 = arith.constant 0 : i32
    return %c0_i32, %c0_i32_0 : i32, i32
  }
  func.func @transform_9(%arg0: i32, %arg1: i32) -> (i32, i32) {
    %c0_i32 = arith.constant 0 : i32
    %c0_i32_0 = arith.constant 0 : i32
    %c0_i32_1 = arith.constant 0 : i32
    return %c0_i32, %c0_i32_0 : i32, i32
  }
  func.func @transform_10(%arg0: i32, %arg1: i32) -> (i32, i32) {
    %c0_i32 = arith.constant 0 : i32
    %c0_i32_0 = arith.constant 0 : i32
    %c0_i32_1 = arith.constant 0 : i32
    return %c0_i32, %c0_i32_0 : i32, i32
  }
  func.func @transform_11(%arg0: i32, %arg1: i32) -> (i32, i32) {
    %c0_i32 = arith.constant 0 : i32
    %c0_i32_0 = arith.constant 0 : i32
    %c0_i32_1 = arith.constant 0 : i32
    return %c0_i32, %c0_i32_0 : i32, i32
  }
  func.func @transform_12(%arg0: i32, %arg1: i32) -> (i32, i32) {
    %c0_i32 = arith.constant 0 : i32
    %c0_i32_0 = arith.constant 0 : i32
    %c0_i32_1 = arith.constant 0 : i32
    return %c0_i32, %c0_i32_0 : i32, i32
  }
  func.func @transform_13(%arg0: i32, %arg1: i32) -> (i32, i32) {
    %c0_i32 = arith.constant 0 : i32
    %c0_i32_0 = arith.constant 0 : i32
    %c0_i32_1 = arith.constant 0 : i32
    return %c0_i32, %c0_i32_0 : i32, i32
  }
  func.func @transform_14(%arg0: i32, %arg1: i32) -> (i32, i32, i32) {
    %c0_i32 = arith.constant 0 : i32
    %c0_i32_0 = arith.constant 0 : i32
    return %arg0, %arg1, %c0_i32 : i32, i32, i32
  }
}

module attributes {stable_mosaic.version = 11 : i64} {
  func.func @encoder_layer_kernel(%arg0: i32, %arg1: i32, %arg2: memref<1x8x32xf32, #tpu.memory_space<vmem>>, %arg3: memref<1x4x8x8xbf16, #tpu.memory_space<vmem>>, %arg4: memref<1x4x16x8xbf16, #tpu.memory_space<vmem>>, %arg5: memref<1x4x16x8xbf16, #tpu.memory_space<vmem>>, %arg6: memref<32x32xbf16, #tpu.memory_space<vmem>>, %arg7: memref<1x32xf32, #tpu.memory_space<vmem>>, %arg8: memref<1x32xf32, #tpu.memory_space<vmem>>, %arg9: memref<1x32xf32, #tpu.memory_space<vmem>>, %arg10: memref<32x64xbf16, #tpu.memory_space<vmem>>, %arg11: memref<1x64xf32, #tpu.memory_space<vmem>>, %arg12: memref<64x32xbf16, #tpu.memory_space<vmem>>, %arg13: memref<1x32xf32, #tpu.memory_space<vmem>>, %arg14: memref<1x32xf32, #tpu.memory_space<vmem>>, %arg15: memref<1x32xf32, #tpu.memory_space<vmem>>, %arg16: memref<1x8x32xf32, #tpu.memory_space<vmem>>) attributes {dimension_semantics = [#tpu.dimension_semantics<parallel>, #tpu.dimension_semantics<parallel>], iteration_bounds = array<i64: 2, 2>, scalar_prefetch = 0 : i64, scratch_operands = 0 : i64, tpu.core_type = #tpu.core_type<tc>, window_params = [{transform_indices = @transform_0, window_bounds = array<i64: 1, 8, 32>}, {transform_indices = @transform_1, window_bounds = array<i64: 1, 4, 8, 8>}, {transform_indices = @transform_2, window_bounds = array<i64: 1, 4, 16, 8>}, {transform_indices = @transform_3, window_bounds = array<i64: 1, 4, 16, 8>}, {pipeline_mode = #tpu.pipeline_mode<synchronous>, transform_indices = @transform_4, window_bounds = array<i64: 32, 32>}, {pipeline_mode = #tpu.pipeline_mode<synchronous>, transform_indices = @transform_5, window_bounds = array<i64: 1, 32>}, {pipeline_mode = #tpu.pipeline_mode<synchronous>, transform_indices = @transform_6, window_bounds = array<i64: 1, 32>}, {pipeline_mode = #tpu.pipeline_mode<synchronous>, transform_indices = @transform_7, window_bounds = array<i64: 1, 32>}, {pipeline_mode = #tpu.pipeline_mode<synchronous>, transform_indices = @transform_8, window_bounds = array<i64: 32, 64>}, {pipeline_mode = #tpu.pipeline_mode<synchronous>, transform_indices = @transform_9, window_bounds = array<i64: 1, 64>}, {pipeline_mode = #tpu.pipeline_mode<synchronous>, transform_indices = @transform_10, window_bounds = array<i64: 64, 32>}, {pipeline_mode = #tpu.pipeline_mode<synchronous>, transform_indices = @transform_11, window_bounds = array<i64: 1, 32>}, {pipeline_mode = #tpu.pipeline_mode<synchronous>, transform_indices = @transform_12, window_bounds = array<i64: 1, 32>}, {pipeline_mode = #tpu.pipeline_mode<synchronous>, transform_indices = @transform_13, window_bounds = array<i64: 1, 32>}, {transform_indices = @transform_14, window_bounds = array<i64: 1, 8, 32>}]} {
    %c0 = arith.constant 0 : index
    %c0_0 = arith.constant 0 : index
    %c0_1 = arith.constant 0 : index
    %0 = vector.load %arg2[%c0, %c0_0, %c0_1] : memref<1x8x32xf32, #tpu.memory_space<vmem>>, vector<1x8x32xf32>
    %1 = vector.shape_cast %0 : vector<1x8x32xf32> to vector<8x32xf32>
    %c0_2 = arith.constant 0 : index
    %c0_3 = arith.constant 0 : index
    %c0_4 = arith.constant 0 : index
    %c0_5 = arith.constant 0 : index
    %2 = vector.load %arg3[%c0_2, %c0_3, %c0_4, %c0_5] : memref<1x4x8x8xbf16, #tpu.memory_space<vmem>>, vector<1x4x8x8xbf16>
    %3 = vector.shape_cast %2 : vector<1x4x8x8xbf16> to vector<4x8x8xbf16>
    %cst = arith.constant 0xFF800000 : f32
    %4 = vector.broadcast %cst : f32 to vector<4x8x1xf32>
    %cst_6 = arith.constant 0.000000e+00 : f32
    %5 = vector.broadcast %cst_6 : f32 to vector<4x8x1xf32>
    %cst_7 = arith.constant 0.000000e+00 : f32
    %6 = vector.broadcast %cst_7 : f32 to vector<4x8x8xf32>
    %c0_i32 = arith.constant 0 : i32
    %c2_i32 = arith.constant 2 : i32
    %7 = arith.addi %c0_i32, %c2_i32 : i32
    %c1_i32 = arith.constant 1 : i32
    %8:3 = scf.for %arg17 = %c0_i32 to %7 step %c1_i32 iter_args(%arg18 = %4, %arg19 = %5, %arg20 = %6) -> (vector<4x8x1xf32>, vector<4x8x1xf32>, vector<4x8x8xf32>)  : i32 {
      %c8_i32 = arith.constant 8 : i32
      %94 = arith.muli %arg17, %c8_i32 : i32
      %95 = tpu.assume_multiple %94, 8 : i32
      %c0_46 = arith.constant 0 : index
      %c0_47 = arith.constant 0 : index
      %96 = arith.index_cast %95 : i32 to index
      %c0_48 = arith.constant 0 : index
      %97 = vector.load %arg4[%c0_46, %c0_47, %96, %c0_48] : memref<1x4x16x8xbf16, #tpu.memory_space<vmem>>, vector<1x4x8x8xbf16>
      %98 = vector.shape_cast %97 : vector<1x4x8x8xbf16> to vector<4x8x8xbf16>
      %c0_49 = arith.constant 0 : index
      %c0_50 = arith.constant 0 : index
      %99 = arith.index_cast %95 : i32 to index
      %c0_51 = arith.constant 0 : index
      %100 = vector.load %arg5[%c0_49, %c0_50, %99, %c0_51] : memref<1x4x16x8xbf16, #tpu.memory_space<vmem>>, vector<1x4x8x8xbf16>
      %101 = vector.shape_cast %100 : vector<1x4x8x8xbf16> to vector<4x8x8xbf16>
      "tpu.trace_start"() <{level = 10 : i32, message = "hqe,hke->hqk"}> : () -> ()
      %cst_52 = arith.constant dense<0.000000e+00> : vector<4x8x8xf32>
      %102 = tpu.matmul %3, %98, %cst_52 {dimension_numbers = #tpu.dot_dimension_numbers<[2], [2], [1], [1], [0, 0, 0, 1, 1, 1], [0], [0]>} : vector<4x8x8xbf16>, vector<4x8x8xbf16>, vector<4x8x8xf32> -> vector<4x8x8xf32>
      "tpu.trace_stop"() : () -> ()
      %cst_53 = arith.constant dense<0xFF800000> : vector<4x8xf32>
      %103 = vector.multi_reduction <maximumf>, %102, %cst_53 [2] : vector<4x8x8xf32> to vector<4x8xf32>
      %104 = vector.shape_cast %103 : vector<4x8xf32> to vector<4x8x1xf32>
      %105 = arith.maximumf %arg18, %104 : vector<4x8x1xf32>
      %106 = vector.broadcast %105 : vector<4x8x1xf32> to vector<4x8x8xf32>
      %107 = arith.subf %102, %106 : vector<4x8x8xf32>
      %108 = math.exp %107 : vector<4x8x8xf32>
      %109 = arith.subf %arg18, %105 : vector<4x8x1xf32>
      %110 = math.exp %109 : vector<4x8x1xf32>
      %111 = arith.mulf %110, %arg19 : vector<4x8x1xf32>
      %cst_54 = arith.constant dense<0.000000e+00> : vector<4x8xf32>
      %112 = vector.multi_reduction <add>, %108, %cst_54 [2] : vector<4x8x8xf32> to vector<4x8xf32>
      %113 = vector.shape_cast %112 : vector<4x8xf32> to vector<4x8x1xf32>
      %114 = arith.addf %111, %113 : vector<4x8x1xf32>
      %115 = vector.broadcast %110 : vector<4x8x1xf32> to vector<4x8x8xf32>
      %116 = arith.mulf %115, %arg20 : vector<4x8x8xf32>
      %117 = arith.truncf %108 : vector<4x8x8xf32> to vector<4x8x8xbf16>
      "tpu.trace_start"() <{level = 10 : i32, message = "hqk,hke->hqe"}> : () -> ()
      %cst_55 = arith.constant dense<0.000000e+00> : vector<4x8x8xf32>
      %118 = tpu.matmul %117, %101, %cst_55 {dimension_numbers = #tpu.dot_dimension_numbers<[2], [1], [1], [2], [0, 0, 0, 1, 1, 2], [0], [0]>} : vector<4x8x8xbf16>, vector<4x8x8xbf16>, vector<4x8x8xf32> -> vector<4x8x8xf32>
      "tpu.trace_stop"() : () -> ()
      %119 = arith.addf %116, %118 : vector<4x8x8xf32>
      scf.yield %105, %114, %119 : vector<4x8x1xf32>, vector<4x8x1xf32>, vector<4x8x8xf32>
    }
    %c2_i32_8 = arith.constant 2 : i32
    %9 = tpu.reciprocal %8#1 {approx = true} : vector<4x8x1xf32> -> vector<4x8x1xf32>
    %10 = vector.broadcast %9 : vector<4x8x1xf32> to vector<4x8x8xf32>
    %11 = arith.mulf %8#2, %10 : vector<4x8x8xf32>
    %12 = arith.truncf %11 : vector<4x8x8xf32> to vector<4x8x8xbf16>
    %13 = vector.extract_strided_slice %12 {offsets = [0, 0, 0], sizes = [1, 8, 8], strides = [1, 1, 1]} : vector<4x8x8xbf16> to vector<1x8x8xbf16>
    %14 = vector.shape_cast %13 : vector<1x8x8xbf16> to vector<8x8xbf16>
    %15 = vector.extract_strided_slice %12 {offsets = [1, 0, 0], sizes = [1, 8, 8], strides = [1, 1, 1]} : vector<4x8x8xbf16> to vector<1x8x8xbf16>
    %16 = vector.shape_cast %15 : vector<1x8x8xbf16> to vector<8x8xbf16>
    %17 = vector.extract_strided_slice %12 {offsets = [2, 0, 0], sizes = [1, 8, 8], strides = [1, 1, 1]} : vector<4x8x8xbf16> to vector<1x8x8xbf16>
    %18 = vector.shape_cast %17 : vector<1x8x8xbf16> to vector<8x8xbf16>
    %19 = vector.extract_strided_slice %12 {offsets = [3, 0, 0], sizes = [1, 8, 8], strides = [1, 1, 1]} : vector<4x8x8xbf16> to vector<1x8x8xbf16>
    %20 = vector.shape_cast %19 : vector<1x8x8xbf16> to vector<8x8xbf16>
    %21 = tpu.concatenate %14, %16, %18, %20 in 1 : vector<8x8xbf16>, vector<8x8xbf16>, vector<8x8xbf16>, vector<8x8xbf16> -> vector<8x32xbf16>
    %c0_9 = arith.constant 0 : index
    %c0_10 = arith.constant 0 : index
    %22 = vector.load %arg6[%c0_9, %c0_10] : memref<32x32xbf16, #tpu.memory_space<vmem>>, vector<32x32xbf16>
    %cst_11 = arith.constant dense<0.000000e+00> : vector<8x32xf32>
    %23 = tpu.matmul %21, %22, %cst_11 {dimension_numbers = #tpu.dot_dimension_numbers<[1], [0], [0], [1], [0, 0, 1, 1], [], []>} : vector<8x32xbf16>, vector<32x32xbf16>, vector<8x32xf32> -> vector<8x32xf32>
    %c0_12 = arith.constant 0 : index
    %c0_13 = arith.constant 0 : index
    %24 = vector.load %arg7[%c0_12, %c0_13] : memref<1x32xf32, #tpu.memory_space<vmem>>, vector<1x32xf32>
    %25 = vector.broadcast %24 : vector<1x32xf32> to vector<8x32xf32>
    %26 = arith.addf %23, %25 : vector<8x32xf32>
    %27 = arith.addf %1, %26 : vector<8x32xf32>
    %cst_14 = arith.constant dense<0.000000e+00> : vector<8xf32>
    %28 = vector.multi_reduction <add>, %27, %cst_14 [1] : vector<8x32xf32> to vector<8xf32>
    %29 = vector.shape_cast %28 : vector<8xf32> to vector<8x1xf32>
    %cst_15 = arith.constant 3.200000e+01 : f32
    %30 = vector.broadcast %cst_15 : f32 to vector<8x1xf32>
    %31 = arith.divf %29, %30 : vector<8x1xf32>
    %32 = vector.broadcast %31 : vector<8x1xf32> to vector<8x32xf32>
    %33 = arith.subf %27, %32 : vector<8x32xf32>
    %34 = arith.mulf %33, %33 : vector<8x32xf32>
    %cst_16 = arith.constant dense<0.000000e+00> : vector<8xf32>
    %35 = vector.multi_reduction <add>, %34, %cst_16 [1] : vector<8x32xf32> to vector<8xf32>
    %36 = vector.shape_cast %35 : vector<8xf32> to vector<8x1xf32>
    %cst_17 = arith.constant 3.200000e+01 : f32
    %37 = vector.broadcast %cst_17 : f32 to vector<8x1xf32>
    %38 = arith.divf %36, %37 : vector<8x1xf32>
    %39 = vector.broadcast %31 : vector<8x1xf32> to vector<8x32xf32>
    %40 = arith.subf %27, %39 : vector<8x32xf32>
    %cst_18 = arith.constant 9.99999974E-6 : f32
    %41 = vector.broadcast %cst_18 : f32 to vector<8x1xf32>
    %42 = arith.addf %38, %41 : vector<8x1xf32>
    %43 = math.rsqrt %42 : vector<8x1xf32>
    %44 = vector.broadcast %43 : vector<8x1xf32> to vector<8x32xf32>
    %45 = arith.mulf %40, %44 : vector<8x32xf32>
    %c0_19 = arith.constant 0 : index
    %c0_20 = arith.constant 0 : index
    %46 = vector.load %arg8[%c0_19, %c0_20] : memref<1x32xf32, #tpu.memory_space<vmem>>, vector<1x32xf32>
    %47 = vector.broadcast %46 : vector<1x32xf32> to vector<8x32xf32>
    %48 = arith.mulf %45, %47 : vector<8x32xf32>
    %c0_21 = arith.constant 0 : index
    %c0_22 = arith.constant 0 : index
    %49 = vector.load %arg9[%c0_21, %c0_22] : memref<1x32xf32, #tpu.memory_space<vmem>>, vector<1x32xf32>
    %50 = vector.broadcast %49 : vector<1x32xf32> to vector<8x32xf32>
    %51 = arith.addf %48, %50 : vector<8x32xf32>
    %52 = arith.truncf %51 : vector<8x32xf32> to vector<8x32xbf16>
    %c0_23 = arith.constant 0 : index
    %c0_24 = arith.constant 0 : index
    %53 = vector.load %arg10[%c0_23, %c0_24] : memref<32x64xbf16, #tpu.memory_space<vmem>>, vector<32x64xbf16>
    %cst_25 = arith.constant dense<0.000000e+00> : vector<8x64xf32>
    %54 = tpu.matmul %52, %53, %cst_25 {dimension_numbers = #tpu.dot_dimension_numbers<[1], [0], [0], [1], [0, 0, 1, 1], [], []>} : vector<8x32xbf16>, vector<32x64xbf16>, vector<8x64xf32> -> vector<8x64xf32>
    %c0_26 = arith.constant 0 : index
    %c0_27 = arith.constant 0 : index
    %55 = vector.load %arg11[%c0_26, %c0_27] : memref<1x64xf32, #tpu.memory_space<vmem>>, vector<1x64xf32>
    %56 = vector.broadcast %55 : vector<1x64xf32> to vector<8x64xf32>
    %57 = arith.addf %54, %56 : vector<8x64xf32>
    %cst_28 = arith.constant 0.000000e+00 : f32
    %58 = vector.broadcast %cst_28 : f32 to vector<8x64xf32>
    %59 = arith.maximumf %57, %58 : vector<8x64xf32>
    %60 = arith.truncf %59 : vector<8x64xf32> to vector<8x64xbf16>
    %c0_29 = arith.constant 0 : index
    %c0_30 = arith.constant 0 : index
    %61 = vector.load %arg12[%c0_29, %c0_30] : memref<64x32xbf16, #tpu.memory_space<vmem>>, vector<64x32xbf16>
    %cst_31 = arith.constant dense<0.000000e+00> : vector<8x32xf32>
    %62 = tpu.matmul %60, %61, %cst_31 {dimension_numbers = #tpu.dot_dimension_numbers<[1], [0], [0], [1], [0, 0, 1, 1], [], []>} : vector<8x64xbf16>, vector<64x32xbf16>, vector<8x32xf32> -> vector<8x32xf32>
    %c0_32 = arith.constant 0 : index
    %c0_33 = arith.constant 0 : index
    %63 = vector.load %arg13[%c0_32, %c0_33] : memref<1x32xf32, #tpu.memory_space<vmem>>, vector<1x32xf32>
    %64 = vector.broadcast %63 : vector<1x32xf32> to vector<8x32xf32>
    %65 = arith.addf %62, %64 : vector<8x32xf32>
    %66 = arith.addf %51, %65 : vector<8x32xf32>
    %cst_34 = arith.constant dense<0.000000e+00> : vector<8xf32>
    %67 = vector.multi_reduction <add>, %66, %cst_34 [1] : vector<8x32xf32> to vector<8xf32>
    %68 = vector.shape_cast %67 : vector<8xf32> to vector<8x1xf32>
    %cst_35 = arith.constant 3.200000e+01 : f32
    %69 = vector.broadcast %cst_35 : f32 to vector<8x1xf32>
    %70 = arith.divf %68, %69 : vector<8x1xf32>
    %71 = vector.broadcast %70 : vector<8x1xf32> to vector<8x32xf32>
    %72 = arith.subf %66, %71 : vector<8x32xf32>
    %73 = arith.mulf %72, %72 : vector<8x32xf32>
    %cst_36 = arith.constant dense<0.000000e+00> : vector<8xf32>
    %74 = vector.multi_reduction <add>, %73, %cst_36 [1] : vector<8x32xf32> to vector<8xf32>
    %75 = vector.shape_cast %74 : vector<8xf32> to vector<8x1xf32>
    %cst_37 = arith.constant 3.200000e+01 : f32
    %76 = vector.broadcast %cst_37 : f32 to vector<8x1xf32>
    %77 = arith.divf %75, %76 : vector<8x1xf32>
    %78 = vector.broadcast %70 : vector<8x1xf32> to vector<8x32xf32>
    %79 = arith.subf %66, %78 : vector<8x32xf32>
    %cst_38 = arith.constant 9.99999974E-6 : f32
    %80 = vector.broadcast %cst_38 : f32 to vector<8x1xf32>
    %81 = arith.addf %77, %80 : vector<8x1xf32>
    %82 = math.rsqrt %81 : vector<8x1xf32>
    %83 = vector.broadcast %82 : vector<8x1xf32> to vector<8x32xf32>
    %84 = arith.mulf %79, %83 : vector<8x32xf32>
    %c0_39 = arith.constant 0 : index
    %c0_40 = arith.constant 0 : index
    %85 = vector.load %arg14[%c0_39, %c0_40] : memref<1x32xf32, #tpu.memory_space<vmem>>, vector<1x32xf32>
    %86 = vector.broadcast %85 : vector<1x32xf32> to vector<8x32xf32>
    %87 = arith.mulf %84, %86 : vector<8x32xf32>
    %c0_41 = arith.constant 0 : index
    %c0_42 = arith.constant 0 : index
    %88 = vector.load %arg15[%c0_41, %c0_42] : memref<1x32xf32, #tpu.memory_space<vmem>>, vector<1x32xf32>
    %89 = vector.broadcast %88 : vector<1x32xf32> to vector<8x32xf32>
    %90 = arith.addf %87, %89 : vector<8x32xf32>
    %c0_43 = arith.constant 0 : index
    %c0_44 = arith.constant 0 : index
    %c0_45 = arith.constant 0 : index
    %91 = vector.load %arg16[%c0_43, %c0_44, %c0_45] : memref<1x8x32xf32, #tpu.memory_space<vmem>>, vector<1x8x32xf32>
    %92 = vector.shape_cast %91 : vector<1x8x32xf32> to vector<8x32xf32>
    %93 = vector.shape_cast %90 : vector<8x32xf32> to vector<1x8x32xf32>
    tpu.vector_store %arg16[%c0_43, %c0_44, %c0_45], %93 {strides = array<i32>} : memref<1x8x32xf32, #tpu.memory_space<vmem>>, vector<1x8x32xf32>,
    return
  }
  func.func @transform_0(%arg0: i32, %arg1: i32) -> (i32, i32, i32) {
    %c0_i32 = arith.constant 0 : i32
    %c0_i32_0 = arith.constant 0 : i32
    return %arg0, %arg1, %c0_i32 : i32, i32, i32
  }
  func.func @transform_1(%arg0: i32, %arg1: i32) -> (i32, i32, i32, i32) {
    %c0_i32 = arith.constant 0 : i32
    %c0_i32_0 = arith.constant 0 : i32
    %c0_i32_1 = arith.constant 0 : i32
    return %arg0, %c0_i32, %arg1, %c0_i32_0 : i32, i32, i32, i32
  }
  func.func @transform_2(%arg0: i32, %arg1: i32) -> (i32, i32, i32, i32) {
    %c0_i32 = arith.constant 0 : i32
    %c0_i32_0 = arith.constant 0 : i32
    %c0_i32_1 = arith.constant 0 : i32
    %c0_i32_2 = arith.constant 0 : i32
    return %arg0, %c0_i32, %c0_i32_0, %c0_i32_1 : i32, i32, i32, i32
  }
  func.func @transform_3(%arg0: i32, %arg1: i32) -> (i32, i32, i32, i32) {
    %c0_i32 = arith.constant 0 : i32
    %c0_i32_0 = arith.constant 0 : i32
    %c0_i32_1 = arith.constant 0 : i32
    %c0_i32_2 = arith.constant 0 : i32
    return %arg0, %c0_i32, %c0_i32_0, %c0_i32_1 : i32, i32, i32, i32
  }
  func.func @transform_4(%arg0: i32, %arg1: i32) -> (i32, i32) {
    %c0_i32 = arith.constant 0 : i32
    %c0_i32_0 = arith.constant 0 : i32
    %c0_i32_1 = arith.constant 0 : i32
    return %c0_i32, %c0_i32_0 : i32, i32
  }
  func.func @transform_5(%arg0: i32, %arg1: i32) -> (i32, i32) {
    %c0_i32 = arith.constant 0 : i32
    %c0_i32_0 = arith.constant 0 : i32
    %c0_i32_1 = arith.constant 0 : i32
    return %c0_i32, %c0_i32_0 : i32, i32
  }
  func.func @transform_6(%arg0: i32, %arg1: i32) -> (i32, i32) {
    %c0_i32 = arith.constant 0 : i32
    %c0_i32_0 = arith.constant 0 : i32
    %c0_i32_1 = arith.constant 0 : i32
    return %c0_i32, %c0_i32_0 : i32, i32
  }
  func.func @transform_7(%arg0: i32, %arg1: i32) -> (i32, i32) {
    %c0_i32 = arith.constant 0 : i32
    %c0_i32_0 = arith.constant 0 : i32
    %c0_i32_1 = arith.constant 0 : i32
    return %c0_i32, %c0_i32_0 : i32, i32
  }
  func.func @transform_8(%arg0: i32, %arg1: i32) -> (i32, i32) {
    %c0_i32 = arith.constant 0 : i32
    %c0_i32_0 = arith.constant 0 : i32
    %c0_i32_1 = arith.constant 0 : i32
    return %c0_i32, %c0_i32_0 : i32, i32
  }
  func.func @transform_9(%arg0: i32, %arg1: i32) -> (i32, i32) {
    %c0_i32 = arith.constant 0 : i32
    %c0_i32_0 = arith.constant 0 : i32
    %c0_i32_1 = arith.constant 0 : i32
    return %c0_i32, %c0_i32_0 : i32, i32
  }
  func.func @transform_10(%arg0: i32, %arg1: i32) -> (i32, i32) {
    %c0_i32 = arith.constant 0 : i32
    %c0_i32_0 = arith.constant 0 : i32
    %c0_i32_1 = arith.constant 0 : i32
    return %c0_i32, %c0_i32_0 : i32, i32
  }
  func.func @transform_11(%arg0: i32, %arg1: i32) -> (i32, i32) {
    %c0_i32 = arith.constant 0 : i32
    %c0_i32_0 = arith.constant 0 : i32
    %c0_i32_1 = arith.constant 0 : i32
    return %c0_i32, %c0_i32_0 : i32, i32
  }
  func.func @transform_12(%arg0: i32, %arg1: i32) -> (i32, i32) {
    %c0_i32 = arith.constant 0 : i32
    %c0_i32_0 = arith.constant 0 : i32
    %c0_i32_1 = arith.constant 0 : i32
    return %c0_i32, %c0_i32_0 : i32, i32
  }
  func.func @transform_13(%arg0: i32, %arg1: i32) -> (i32, i32) {
    %c0_i32 = arith.constant 0 : i32
    %c0_i32_0 = arith.constant 0 : i32
    %c0_i32_1 = arith.constant 0 : i32
    return %c0_i32, %c0_i32_0 : i32, i32
  }
  func.func @transform_14(%arg0: i32, %arg1: i32) -> (i32, i32, i32) {
    %c0_i32 = arith.constant 0 : i32
    %c0_i32_0 = arith.constant 0 : i32
    return %arg0, %arg1, %c0_i32 : i32, i32, i32
  }
}

</mosaic_0001>

<llo_original>
// kernel: tpu_custom_call.1
$region0: #{tpu_custom_call.1}
  #allocation0 [shape = 'u32[]', space=smem, size = 0x4, offset = 0x4, fixed_abs, tag = 'smem constant byte address 0x4 - core index']
  #allocation1 [shape = 'u32[144,128]{1,0:T(1,128)}', space=vmem, size = 0x12000, scoped, tag = 'internal scratch']
  %s0 = inlined_call_operand.vmem [shape: f32[2,16,32], index: 0, kind: input, shape index: {}]
  %s1 = inlined_call_operand.vmem [shape: bf16[2,4,16,8], index: 1, kind: input, shape index: {}]
  %s2 = inlined_call_operand.vmem [shape: bf16[2,4,16,8], index: 2, kind: input, shape index: {}]
  %s3 = inlined_call_operand.vmem [shape: bf16[2,4,16,8], index: 3, kind: input, shape index: {}]
  %s4 = inlined_call_operand.vmem [shape: bf16[32,32], index: 4, kind: input, shape index: {}]
  %s5 = inlined_call_operand.vmem [shape: f32[1,32], index: 5, kind: input, shape index: {}]
  %s6 = inlined_call_operand.vmem [shape: f32[1,32], index: 6, kind: input, shape index: {}]
  %s7 = inlined_call_operand.vmem [shape: f32[1,32], index: 7, kind: input, shape index: {}]
  %s8 = inlined_call_operand.vmem [shape: bf16[32,64], index: 8, kind: input, shape index: {}]
  %s9 = inlined_call_operand.vmem [shape: f32[1,64], index: 9, kind: input, shape index: {}]
  %s10 = inlined_call_operand.vmem [shape: bf16[64,32], index: 10, kind: input, shape index: {}]
  %s11 = inlined_call_operand.vmem [shape: f32[1,32], index: 11, kind: input, shape index: {}]
  %s12 = inlined_call_operand.vmem [shape: f32[1,32], index: 12, kind: input, shape index: {}]
  %s13 = inlined_call_operand.vmem [shape: f32[1,32], index: 13, kind: input, shape index: {}]
  %s14 = inlined_call_operand.hbm [shape: f32[2,16,32], index: 14, kind: output, shape index: {}]
  %s15 = sld [smem:[#allocation0]]
  $region137: #{tpu_custom_call.1} parent=0
    _
  %s17 = ssub.s32 1, %s15
  %s18 = scalar_select 0, %s17, %s15
  $region1: #{tpu_custom_call.1} parent=0
    #allocation2 [shape = 'u8[16384]{0}', space=vmem, size = 0x4000, scoped, tag = 'input window, operand 1']
    #allocation3 [shape = 'u8[8192]{0}', space=vmem, size = 0x2000, scoped, tag = 'output window, operand 0']
    #allocation4 [shape = 's32[2]{0}', space=sflag, size = 0x8, scoped, tag = 'scoped memory for tpu_custom_call.1']
    %19 = vsyncpa [#allocation4], 0
    %s20 = scalar_lea.sflag [#allocation4], 1
    %21 = vsyncpa %s20, 0
    loop: start=0, step=1, limit=6
    $region2: #{tpu_custom_call.1} parent=1 // loop_pre_header
      _
    $region3: #{tpu_custom_call.1} parent=1 // loop_header
      %s23 = sphi 0, %s27
      %p24 = scmp.ge.s32.totalorder %s23, 6
      %s30 = sphi 0, %s42
      %s31 = sphi 0, %s38
      %s32 = sphi 0, %s30
      %s33 = sphi 0, %s31
      %s34 = sphi 0, %s32
      %s35 = sphi 0, %s33
      %s47 = sphi 0, %s49
      %s50 = sphi 0, %s47
      %s51 = sphi 0, %s50
      %s67 = sphi 0, %s51
      %s75 = sphi 0, %s77
      %s78 = sphi 0, %s75
      %s79 = sphi 0, %s78
      %s95 = sphi 0, %s79
      %s101 = sphi 0, %s103
      %s104 = sphi 0, %s101
      %s105 = sphi 0, %s104
      %s121 = sphi 0, %s105
      %s127 = sphi 0, %s129
      %s130 = sphi 0, %s127
      %s131 = sphi 0, %s130
      %s147 = sphi 0, %s131
      %s151 = sphi 0, %s151
      %s153 = sphi 0, %s151
      %s154 = sphi 0, %s153
      %s168 = sphi 0, %s154
      %s172 = sphi 0, %s172
      %s174 = sphi 0, %s172
      %s175 = sphi 0, %s174
      %s189 = sphi 0, %s175
      %s193 = sphi 0, %s193
      %s195 = sphi 0, %s193
      %s196 = sphi 0, %s195
      %s210 = sphi 0, %s196
      %s214 = sphi 0, %s214
      %s216 = sphi 0, %s214
      %s217 = sphi 0, %s216
      %s231 = sphi 0, %s217
      %s235 = sphi 0, %s235
      %s237 = sphi 0, %s235
      %s238 = sphi 0, %s237
      %s252 = sphi 0, %s238
      %s256 = sphi 0, %s256
      %s258 = sphi 0, %s256
      %s259 = sphi 0, %s258
      %s273 = sphi 0, %s259
      %s277 = sphi 0, %s277
      %s279 = sphi 0, %s277
      %s280 = sphi 0, %s279
      %s294 = sphi 0, %s280
      %s298 = sphi 0, %s298
      %s300 = sphi 0, %s298
      %s301 = sphi 0, %s300
      %s315 = sphi 0, %s301
      %s319 = sphi 0, %s319
      %s321 = sphi 0, %s319
      %s322 = sphi 0, %s321
      %s336 = sphi 0, %s322
      %s340 = sphi 0, %s340
      %s342 = sphi 0, %s340
      %s343 = sphi 0, %s342
      %s357 = sphi 0, %s343
      %s365 = sphi 0, %s367
      %s368 = sphi 0, %s365
      %s369 = sphi 0, %s368
      %s385 = sphi 0, %s369
    $region4: #{tpu_custom_call.1} parent=1 // loop_header_branch
      %26 = sbr.rel (%p24) target = $region8
    $region5: #{tpu_custom_call.1} parent=1 // loop_body
      %s28 = ssub.s32 %s23, 1
      %s29 = ssub.s32 %s23, 2
      %s36 = sadd.s32 1, %s31
      %p37 = scmp.ge.s32.totalorder %s36, 2
      %s38 = scalar_select %p37, 0, %s36
      %s39 = sadd.s32 1, %s30
      %s40 = scalar_select %p37, %s39, %s30
      %p41 = scmp.ge.s32.totalorder %s40, 2
      %s42 = scalar_select %p41, 0, %s40
      %s43 = ssub.s32 %s30, %s42
      %s44 = ssub.s32 %s31, %s38
      %s45 = sor.u32 %s43, %s44
      %p46 = scmp.eq.s32.totalorder %s45, 0
      %s48 = sadd.s32 %s47, 1
      %s49 = scalar_select %p46, %s47, %s48
      %p52 = pneg %p46
      %p53 = scmp.eq.s32.totalorder %s23, 3
      %p54 = por %p52, %p53
      %p55 = scmp.ne.s32.totalorder %s47, %s50
      %p56 = scmp.eq.s32.totalorder %s23, 0
      %p57 = por %p55, %p56
      %p58 = scmp.ne.s32.totalorder %s47, %s50
      %p59 = scmp.eq.s32.totalorder %s28, 3
      %p60 = por %p58, %p59
      %p61 = scmp.ne.s32.totalorder %s50, %s51
      %p62 = scmp.eq.s32.totalorder %s28, 0
      %p63 = por %p61, %p62
      %p64 = scmp.ne.s32.totalorder %s50, %s51
      %p65 = scmp.eq.s32.totalorder %s29, 3
      %p66 = por %p64, %p65
      %p68 = scmp.ne.s32.totalorder %s51, %s67
      %p69 = scmp.eq.s32.totalorder %s29, 0
      %p70 = por %p68, %p69
      %s71 = ssub.s32 %s30, %s42
      %s72 = ssub.s32 %s31, %s38
      %s73 = sor.u32 %s71, %s72
      %p74 = scmp.eq.s32.totalorder %s73, 0
      %s76 = sadd.s32 %s75, 1
      %s77 = scalar_select %p74, %s75, %s76
      %p80 = pneg %p74
      %p81 = scmp.eq.s32.totalorder %s23, 3
      %p82 = por %p80, %p81
      %p83 = scmp.ne.s32.totalorder %s75, %s78
      %p84 = scmp.eq.s32.totalorder %s23, 0
      %p85 = por %p83, %p84
      %p86 = scmp.ne.s32.totalorder %s75, %s78
      %p87 = scmp.eq.s32.totalorder %s28, 3
      %p88 = por %p86, %p87
      %p89 = scmp.ne.s32.totalorder %s78, %s79
      %p90 = scmp.eq.s32.totalorder %s28, 0
      %p91 = por %p89, %p90
      %p92 = scmp.ne.s32.totalorder %s78, %s79
      %p93 = scmp.eq.s32.totalorder %s29, 3
      %p94 = por %p92, %p93
      %p96 = scmp.ne.s32.totalorder %s79, %s95
      %p97 = scmp.eq.s32.totalorder %s29, 0
      %p98 = por %p96, %p97
      %s99 = ssub.s32 %s30, %s42
      %p100 = scmp.eq.s32.totalorder %s99, 0
      %s102 = sadd.s32 %s101, 1
      %s103 = scalar_select %p100, %s101, %s102
      %p106 = pneg %p100
      %p107 = scmp.eq.s32.totalorder %s23, 3
      %p108 = por %p106, %p107
      %p109 = scmp.ne.s32.totalorder %s101, %s104
      %p110 = scmp.eq.s32.totalorder %s23, 0
      %p111 = por %p109, %p110
      %p112 = scmp.ne.s32.totalorder %s101, %s104
      %p113 = scmp.eq.s32.totalorder %s28, 3
      %p114 = por %p112, %p113
      %p115 = scmp.ne.s32.totalorder %s104, %s105
      %p116 = scmp.eq.s32.totalorder %s28, 0
      %p117 = por %p115, %p116
      %p118 = scmp.ne.s32.totalorder %s104, %s105
      %p119 = scmp.eq.s32.totalorder %s29, 3
      %p120 = por %p118, %p119
      %p122 = scmp.ne.s32.totalorder %s105, %s121
      %p123 = scmp.eq.s32.totalorder %s29, 0
      %p124 = por %p122, %p123
      %s125 = ssub.s32 %s30, %s42
      %p126 = scmp.eq.s32.totalorder %s125, 0
      %s128 = sadd.s32 %s127, 1
      %s129 = scalar_select %p126, %s127, %s128
      %p132 = pneg %p126
      %p133 = scmp.eq.s32.totalorder %s23, 3
      %p134 = por %p132, %p133
      %p135 = scmp.ne.s32.totalorder %s127, %s130
      %p136 = scmp.eq.s32.totalorder %s23, 0
      %p137 = por %p135, %p136
      %p138 = scmp.ne.s32.totalorder %s127, %s130
      %p139 = scmp.eq.s32.totalorder %s28, 3
      %p140 = por %p138, %p139
      %p141 = scmp.ne.s32.totalorder %s130, %s131
      %p142 = scmp.eq.s32.totalorder %s28, 0
      %p143 = por %p141, %p142
      %p144 = scmp.ne.s32.totalorder %s130, %s131
      %p145 = scmp.eq.s32.totalorder %s29, 3
      %p146 = por %p144, %p145
      %p148 = scmp.ne.s32.totalorder %s131, %s147
      %p149 = scmp.eq.s32.totalorder %s29, 0
      %p150 = por %p148, %p149
      %s152 = sadd.s32 %s151, 1
      %p155 = scmp.eq.s32.totalorder %s23, 3
      %p156 = scmp.ne.s32.totalorder %s151, %s153
      %p157 = scmp.eq.s32.totalorder %s23, 0
      %p158 = por %p156, %p157
      %p159 = scmp.ne.s32.totalorder %s151, %s153
      %p160 = scmp.eq.s32.totalorder %s28, 3
      %p161 = por %p159, %p160
      %p162 = scmp.ne.s32.totalorder %s153, %s154
      %p163 = scmp.eq.s32.totalorder %s28, 0
      %p164 = por %p162, %p163
      %p165 = scmp.ne.s32.totalorder %s153, %s154
      %p166 = scmp.eq.s32.totalorder %s29, 3
      %p167 = por %p165, %p166
      %p169 = scmp.ne.s32.totalorder %s154, %s168
      %p170 = scmp.eq.s32.totalorder %s29, 0
      %p171 = por %p169, %p170
      %s173 = sadd.s32 %s172, 1
      %p176 = scmp.eq.s32.totalorder %s23, 3
      %p177 = scmp.ne.s32.totalorder %s172, %s174
      %p178 = scmp.eq.s32.totalorder %s23, 0
      %p179 = por %p177, %p178
      %p180 = scmp.ne.s32.totalorder %s172, %s174
      %p181 = scmp.eq.s32.totalorder %s28, 3
      %p182 = por %p180, %p181
      %p183 = scmp.ne.s32.totalorder %s174, %s175
      %p184 = scmp.eq.s32.totalorder %s28, 0
      %p185 = por %p183, %p184
      %p186 = scmp.ne.s32.totalorder %s174, %s175
      %p187 = scmp.eq.s32.totalorder %s29, 3
      %p188 = por %p186, %p187
      %p190 = scmp.ne.s32.totalorder %s175, %s189
      %p191 = scmp.eq.s32.totalorder %s29, 0
      %p192 = por %p190, %p191
      %s194 = sadd.s32 %s193, 1
      %p197 = scmp.eq.s32.totalorder %s23, 3
      %p198 = scmp.ne.s32.totalorder %s193, %s195
      %p199 = scmp.eq.s32.totalorder %s23, 0
      %p200 = por %p198, %p199
      %p201 = scmp.ne.s32.totalorder %s193, %s195
      %p202 = scmp.eq.s32.totalorder %s28, 3
      %p203 = por %p201, %p202
      %p204 = scmp.ne.s32.totalorder %s195, %s196
      %p205 = scmp.eq.s32.totalorder %s28, 0
      %p206 = por %p204, %p205
      %p207 = scmp.ne.s32.totalorder %s195, %s196
      %p208 = scmp.eq.s32.totalorder %s29, 3
      %p209 = por %p207, %p208
      %p211 = scmp.ne.s32.totalorder %s196, %s210
      %p212 = scmp.eq.s32.totalorder %s29, 0
      %p213 = por %p211, %p212
      %s215 = sadd.s32 %s214, 1
      %p218 = scmp.eq.s32.totalorder %s23, 3
      %p219 = scmp.ne.s32.totalorder %s214, %s216
      %p220 = scmp.eq.s32.totalorder %s23, 0
      %p221 = por %p219, %p220
      %p222 = scmp.ne.s32.totalorder %s214, %s216
      %p223 = scmp.eq.s32.totalorder %s28, 3
      %p224 = por %p222, %p223
      %p225 = scmp.ne.s32.totalorder %s216, %s217
      %p226 = scmp.eq.s32.totalorder %s28, 0
      %p227 = por %p225, %p226
      %p228 = scmp.ne.s32.totalorder %s216, %s217
      %p229 = scmp.eq.s32.totalorder %s29, 3
      %p230 = por %p228, %p229
      %p232 = scmp.ne.s32.totalorder %s217, %s231
      %p233 = scmp.eq.s32.totalorder %s29, 0
      %p234 = por %p232, %p233
      %s236 = sadd.s32 %s235, 1
      %p239 = scmp.eq.s32.totalorder %s23, 3
      %p240 = scmp.ne.s32.totalorder %s235, %s237
      %p241 = scmp.eq.s32.totalorder %s23, 0
      %p242 = por %p240, %p241
      %p243 = scmp.ne.s32.totalorder %s235, %s237
      %p244 = scmp.eq.s32.totalorder %s28, 3
      %p245 = por %p243, %p244
      %p246 = scmp.ne.s32.totalorder %s237, %s238
      %p247 = scmp.eq.s32.totalorder %s28, 0
      %p248 = por %p246, %p247
      %p249 = scmp.ne.s32.totalorder %s237, %s238
      %p250 = scmp.eq.s32.totalorder %s29, 3
      %p251 = por %p249, %p250
      %p253 = scmp.ne.s32.totalorder %s238, %s252
      %p254 = scmp.eq.s32.totalorder %s29, 0
      %p255 = por %p253, %p254
      %s257 = sadd.s32 %s256, 1
      %p260 = scmp.eq.s32.totalorder %s23, 3
      %p261 = scmp.ne.s32.totalorder %s256, %s258
      %p262 = scmp.eq.s32.totalorder %s23, 0
      %p263 = por %p261, %p262
      %p264 = scmp.ne.s32.totalorder %s256, %s258
      %p265 = scmp.eq.s32.totalorder %s28, 3
      %p266 = por %p264, %p265
      %p267 = scmp.ne.s32.totalorder %s258, %s259
      %p268 = scmp.eq.s32.totalorder %s28, 0
      %p269 = por %p267, %p268
      %p270 = scmp.ne.s32.totalorder %s258, %s259
      %p271 = scmp.eq.s32.totalorder %s29, 3
      %p272 = por %p270, %p271
      %p274 = scmp.ne.s32.totalorder %s259, %s273
      %p275 = scmp.eq.s32.totalorder %s29, 0
      %p276 = por %p274, %p275
      %s278 = sadd.s32 %s277, 1
      %p281 = scmp.eq.s32.totalorder %s23, 3
      %p282 = scmp.ne.s32.totalorder %s277, %s279
      %p283 = scmp.eq.s32.totalorder %s23, 0
      %p284 = por %p282, %p283
      %p285 = scmp.ne.s32.totalorder %s277, %s279
      %p286 = scmp.eq.s32.totalorder %s28, 3
      %p287 = por %p285, %p286
      %p288 = scmp.ne.s32.totalorder %s279, %s280
      %p289 = scmp.eq.s32.totalorder %s28, 0
      %p290 = por %p288, %p289
      %p291 = scmp.ne.s32.totalorder %s279, %s280
      %p292 = scmp.eq.s32.totalorder %s29, 3
      %p293 = por %p291, %p292
      %p295 = scmp.ne.s32.totalorder %s280, %s294
      %p296 = scmp.eq.s32.totalorder %s29, 0
      %p297 = por %p295, %p296
      %s299 = sadd.s32 %s298, 1
      %p302 = scmp.eq.s32.totalorder %s23, 3
      %p303 = scmp.ne.s32.totalorder %s298, %s300
      %p304 = scmp.eq.s32.totalorder %s23, 0
      %p305 = por %p303, %p304
      %p306 = scmp.ne.s32.totalorder %s298, %s300
      %p307 = scmp.eq.s32.totalorder %s28, 3
      %p308 = por %p306, %p307
      %p309 = scmp.ne.s32.totalorder %s300, %s301
      %p310 = scmp.eq.s32.totalorder %s28, 0
      %p311 = por %p309, %p310
      %p312 = scmp.ne.s32.totalorder %s300, %s301
      %p313 = scmp.eq.s32.totalorder %s29, 3
      %p314 = por %p312, %p313
      %p316 = scmp.ne.s32.totalorder %s301, %s315
      %p317 = scmp.eq.s32.totalorder %s29, 0
      %p318 = por %p316, %p317
      %s320 = sadd.s32 %s319, 1
      %p323 = scmp.eq.s32.totalorder %s23, 3
      %p324 = scmp.ne.s32.totalorder %s319, %s321
      %p325 = scmp.eq.s32.totalorder %s23, 0
      %p326 = por %p324, %p325
      %p327 = scmp.ne.s32.totalorder %s319, %s321
      %p328 = scmp.eq.s32.totalorder %s28, 3
      %p329 = por %p327, %p328
      %p330 = scmp.ne.s32.totalorder %s321, %s322
      %p331 = scmp.eq.s32.totalorder %s28, 0
      %p332 = por %p330, %p331
      %p333 = scmp.ne.s32.totalorder %s321, %s322
      %p334 = scmp.eq.s32.totalorder %s29, 3
      %p335 = por %p333, %p334
      %p337 = scmp.ne.s32.totalorder %s322, %s336
      %p338 = scmp.eq.s32.totalorder %s29, 0
      %p339 = por %p337, %p338
      %s341 = sadd.s32 %s340, 1
      %p344 = scmp.eq.s32.totalorder %s23, 3
      %p345 = scmp.ne.s32.totalorder %s340, %s342
      %p346 = scmp.eq.s32.totalorder %s23, 0
      %p347 = por %p345, %p346
      %p348 = scmp.ne.s32.totalorder %s340, %s342
      %p349 = scmp.eq.s32.totalorder %s28, 3
      %p350 = por %p348, %p349
      %p351 = scmp.ne.s32.totalorder %s342, %s343
      %p352 = scmp.eq.s32.totalorder %s28, 0
      %p353 = por %p351, %p352
      %p354 = scmp.ne.s32.totalorder %s342, %s343
      %p355 = scmp.eq.s32.totalorder %s29, 3
      %p356 = por %p354, %p355
      %p358 = scmp.ne.s32.totalorder %s343, %s357
      %p359 = scmp.eq.s32.totalorder %s29, 0
      %p360 = por %p358, %p359
      %s361 = ssub.s32 %s30, %s42
      %s362 = ssub.s32 %s31, %s38
      %s363 = sor.u32 %s361, %s362
      %p364 = scmp.eq.s32.totalorder %s363, 0
      %s366 = sadd.s32 %s365, 1
      %s367 = scalar_select %p364, %s365, %s366
      %p370 = pneg %p364
      %p371 = scmp.eq.s32.totalorder %s23, 3
      %p372 = por %p370, %p371
      %p373 = scmp.ne.s32.totalorder %s365, %s368
      %p374 = scmp.eq.s32.totalorder %s23, 0
      %p375 = por %p373, %p374
      %p376 = scmp.ne.s32.totalorder %s365, %s368
      %p377 = scmp.eq.s32.totalorder %s28, 3
      %p378 = por %p376, %p377
      %p379 = scmp.ne.s32.totalorder %s368, %s369
      %p380 = scmp.eq.s32.totalorder %s28, 0
      %p381 = por %p379, %p380
      %p382 = scmp.ne.s32.totalorder %s368, %s369
      %p383 = scmp.eq.s32.totalorder %s29, 3
      %p384 = por %p382, %p383
      %p386 = scmp.ne.s32.totalorder %s369, %s385
      %p387 = scmp.eq.s32.totalorder %s29, 0
      %p388 = por %p386, %p387
      %p389 = scmp.le.s32.totalorder 1, %s23
      %p390 = scmp.lt.s32.totalorder %s23, 5
      %p391 = pnand %p389, %p390
      %p392 = pneg %p391
      // Predicated region
      $region9: #{tpu_custom_call.1} parent=5 // pred_check
        _
      $region10: #{tpu_custom_call.1} parent=5 // pred_check_branch
        %394 = sbr.rel (%p391) target = $region12
      $region11: #{tpu_custom_call.1} parent=5 // pred_region
        %s395 = ssub.s32 %s23, 1
        // Predicated region
        $region13: #{tpu_custom_call.1} parent=11 // pred_check
          %p396 = pneg %p164
        $region14: #{tpu_custom_call.1} parent=11 // pred_check_branch
          %398 = sbr.rel (%p396) target = $region16
        $region15: #{tpu_custom_call.1} parent=11 // pred_region
          _
        $region16: #{tpu_custom_call.1} parent=11 // pred_fallthru
          _
        // Predicated region
        $region17: #{tpu_custom_call.1} parent=11 // pred_check
          %p399 = pneg %p185
        $region18: #{tpu_custom_call.1} parent=11 // pred_check_branch
          %401 = sbr.rel (%p399) target = $region20
        $region19: #{tpu_custom_call.1} parent=11 // pred_region
          _
        $region20: #{tpu_custom_call.1} parent=11 // pred_fallthru
          _
        // Predicated region
        $region21: #{tpu_custom_call.1} parent=11 // pred_check
          %p402 = pneg %p206
        $region22: #{tpu_custom_call.1} parent=11 // pred_check_branch
          %404 = sbr.rel (%p402) target = $region24
        $region23: #{tpu_custom_call.1} parent=11 // pred_region
          _
        $region24: #{tpu_custom_call.1} parent=11 // pred_fallthru
          _
        // Predicated region
        $region25: #{tpu_custom_call.1} parent=11 // pred_check
          %p405 = pneg %p227
        $region26: #{tpu_custom_call.1} parent=11 // pred_check_branch
          %407 = sbr.rel (%p405) target = $region28
        $region27: #{tpu_custom_call.1} parent=11 // pred_region
          _
        $region28: #{tpu_custom_call.1} parent=11 // pred_fallthru
          _
        // Predicated region
        $region29: #{tpu_custom_call.1} parent=11 // pred_check
          %p408 = pneg %p248
        $region30: #{tpu_custom_call.1} parent=11 // pred_check_branch
          %410 = sbr.rel (%p408) target = $region32
        $region31: #{tpu_custom_call.1} parent=11 // pred_region
          _
        $region32: #{tpu_custom_call.1} parent=11 // pred_fallthru
          _
        // Predicated region
        $region33: #{tpu_custom_call.1} parent=11 // pred_check
          %p411 = pneg %p269
        $region34: #{tpu_custom_call.1} parent=11 // pred_check_branch
          %413 = sbr.rel (%p411) target = $region36
        $region35: #{tpu_custom_call.1} parent=11 // pred_region
          _
        $region36: #{tpu_custom_call.1} parent=11 // pred_fallthru
          _
        // Predicated region
        $region37: #{tpu_custom_call.1} parent=11 // pred_check
          %p414 = pneg %p290
        $region38: #{tpu_custom_call.1} parent=11 // pred_check_branch
          %416 = sbr.rel (%p414) target = $region40
        $region39: #{tpu_custom_call.1} parent=11 // pred_region
          _
        $region40: #{tpu_custom_call.1} parent=11 // pred_fallthru
          _
        // Predicated region
        $region41: #{tpu_custom_call.1} parent=11 // pred_check
          %p417 = pneg %p311
        $region42: #{tpu_custom_call.1} parent=11 // pred_check_branch
          %419 = sbr.rel (%p417) target = $region44
        $region43: #{tpu_custom_call.1} parent=11 // pred_region
          _
        $region44: #{tpu_custom_call.1} parent=11 // pred_fallthru
          _
        // Predicated region
        $region45: #{tpu_custom_call.1} parent=11 // pred_check
          %p420 = pneg %p332
        $region46: #{tpu_custom_call.1} parent=11 // pred_check_branch
          %422 = sbr.rel (%p420) target = $region48
        $region47: #{tpu_custom_call.1} parent=11 // pred_region
          _
        $region48: #{tpu_custom_call.1} parent=11 // pred_fallthru
          _
        // Predicated region
        $region49: #{tpu_custom_call.1} parent=11 // pred_check
          %p423 = pneg %p353
        $region50: #{tpu_custom_call.1} parent=11 // pred_check_branch
          %425 = sbr.rel (%p423) target = $region52
        $region51: #{tpu_custom_call.1} parent=11 // pred_region
          _
        $region52: #{tpu_custom_call.1} parent=11 // pred_fallthru
          _
      $region12: #{tpu_custom_call.1} parent=5 // pred_fallthru
        _
      %p426 = scmp.lt.s32.totalorder %s23, 4
      // Predicated region
      $region53: #{tpu_custom_call.1} parent=5 // pred_check
        %p427 = pneg %p426
      $region54: #{tpu_custom_call.1} parent=5 // pred_check_branch
        %429 = sbr.rel (%p427) target = $region56
      $region55: #{tpu_custom_call.1} parent=5 // pred_region
        // Predicated region
        $region57: #{tpu_custom_call.1} parent=55 // pred_check
          %p430 = pneg %p57
        $region58: #{tpu_custom_call.1} parent=55 // pred_check_branch
          %432 = sbr.rel (%p430) target = $region60
        $region59: #{tpu_custom_call.1} parent=55 // pred_region
          %p433 = scmp.lt.s32.totalorder %s30, 1
          %s434 = scalar_select %p433, %s30, 1
          %p435 = scmp.lt.s32.totalorder %s31, 1
          %s436 = scalar_select %p435, %s31, 1
          %s437 = smul.addr %s434, 2
          %s438 = sadd.s32 %s436, %s437
          %s439 = smul.addr %s438, 8
          %s440 = scalar_lea.vmem %s0, %s439
        $region60: #{tpu_custom_call.1} parent=55 // pred_fallthru
          _
        // Predicated region
        $region61: #{tpu_custom_call.1} parent=55 // pred_check
          %p441 = pneg %p85
        $region62: #{tpu_custom_call.1} parent=55 // pred_check_branch
          %443 = sbr.rel (%p441) target = $region64
        $region63: #{tpu_custom_call.1} parent=55 // pred_region
          %s444 = sand.u32 %s75, 1
          %s445 = sand.u32 %s75, 1
          %s446 = smul.addr %s445, 16
          %s447 = scalar_lea.vmem [#allocation2], %s446
          %s448 = smul.addr %s30, 8
          %s449 = sadd.s32 %s31, %s448
          %s450 = smul.addr %s449, 4
          %s451 = scalar_lea.vmem %s1, %s450
          // Predicated region
          $region65: #{tpu_custom_call.1} parent=63 // pred_check
            _
          $region66: #{tpu_custom_call.1} parent=63 // pred_check_branch
            %453 = sbr.rel (0) target = $region68
          $region67: #{tpu_custom_call.1} parent=63 // pred_region
            // Predicated region
            $region69: #{tpu_custom_call.1} parent=67 // pred_check
              _
            $region70: #{tpu_custom_call.1} parent=67 // pred_check_branch
              %455 = sbr.rel target = $region72
            $region71: #{tpu_custom_call.1} parent=67 // pred_region
              // Predicated region
              $region84: #{tpu_custom_call.1} parent=71 // pred_check
                _
              $region85: #{tpu_custom_call.1} parent=71 // pred_check_branch
                %477 = sbr.rel (0) target = $region87
              $region86: #{tpu_custom_call.1} parent=71 // pred_region
                loop: start=0, step=1, limit=1
                $region88: #{tpu_custom_call.1} parent=86 // loop_pre_header
                  _
                $region89: #{tpu_custom_call.1} parent=86 // loop_header
                  %s479 = sphi 0, %s483
                  %p480 = scmp.ge.s32.totalorder %s479, 1
                  %s484 = sphi %s451, %s451
                  %s485 = sphi %s447, %s447
                $region90: #{tpu_custom_call.1} parent=86 // loop_header_branch
                  %482 = sbr.rel (%p480) target = $region94
                $region91: #{tpu_custom_call.1} parent=86 // loop_body
                  _
                $region92: #{tpu_custom_call.1} parent=86 // loop_footer
                  %s483 = sadd.s32 1, %s479
                $region93: #{tpu_custom_call.1} parent=86 // loop_footer_branch
                  %478 = sbr.rel target = $region89
                $region94: #{tpu_custom_call.1} parent=86 // loop_exit
                  _
                %s487 = ssub.s32 16, 1
                loop: start=0, step=1, limit=1
                $region95: #{tpu_custom_call.1} parent=86 // loop_pre_header
                  _
                $region96: #{tpu_custom_call.1} parent=86 // loop_header
                  %s489 = sphi 0, %s493
                  %p490 = scmp.ge.s32.totalorder %s489, 1
                  %s494 = sphi %s451, %s451
                  %s495 = sphi %s447, %s447
                $region97: #{tpu_custom_call.1} parent=86 // loop_header_branch
                  %492 = sbr.rel (%p490) target = $region101
                $region98: #{tpu_custom_call.1} parent=86 // loop_body
                  %v496 = vld [vmem:[%s494] sm:%s487]
                  %497 = vst [vmem:[%s495] sm:%s487] %v496
                  %v498 = vld [vmem:[%s494 + $0x8] sm:%s487]
                  %499 = vst [vmem:[%s495 + $0x4] sm:%s487] %v498
                  %v500 = vld [vmem:[%s494 + $0x10] sm:%s487]
                  %501 = vst [vmem:[%s495 + $0x8] sm:%s487] %v500
                  %v502 = vld [vmem:[%s494 + $0x18] sm:%s487]
                  %503 = vst [vmem:[%s495 + $0xc] sm:%s487] %v502
                $region99: #{tpu_custom_call.1} parent=86 // loop_footer
                  %s493 = sadd.s32 1, %s489
                $region100: #{tpu_custom_call.1} parent=86 // loop_footer_branch
                  %488 = sbr.rel target = $region96
                $region101: #{tpu_custom_call.1} parent=86 // loop_exit
                  _
              $region87: #{tpu_custom_call.1} parent=71 // pred_fallthru
                _
            $region72: #{tpu_custom_call.1} parent=67 // pred_fallthru
              _
            // Predicated region
            $region73: #{tpu_custom_call.1} parent=67 // pred_check
              _
            $region74: #{tpu_custom_call.1} parent=67 // pred_check_branch
              %457 = sbr.rel (0) target = $region76
            $region75: #{tpu_custom_call.1} parent=67 // pred_region
              %s459 = ssub.s32 16, 1
              loop: start=0, step=1, limit=1
              $region77: #{tpu_custom_call.1} parent=75 // loop_pre_header
                _
              $region78: #{tpu_custom_call.1} parent=75 // loop_header
                %s461 = sphi 0, %s465
                %p462 = scmp.ge.s32.totalorder %s461, 1
                %s466 = sphi %s451, %s451
                %s467 = sphi %s447, %s447
              $region79: #{tpu_custom_call.1} parent=75 // loop_header_branch
                %464 = sbr.rel (%p462) target = $region83
              $region80: #{tpu_custom_call.1} parent=75 // loop_body
                %v468 = vld [vmem:[%s466] sm:%s459]
                %469 = vst [vmem:[%s467] sm:%s459] %v468
                %v470 = vld [vmem:[%s466 + $0x8] sm:%s459]
                %471 = vst [vmem:[%s467 + $0x4] sm:%s459] %v470
                %v472 = vld [vmem:[%s466 + $0x10] sm:%s459]
                %473 = vst [vmem:[%s467 + $0x8] sm:%s459] %v472
                %v474 = vld [vmem:[%s466 + $0x18] sm:%s459]
                %475 = vst [vmem:[%s467 + $0xc] sm:%s459] %v474
              $region81: #{tpu_custom_call.1} parent=75 // loop_footer
                %s465 = sadd.s32 1, %s461
              $region82: #{tpu_custom_call.1} parent=75 // loop_footer_branch
                %460 = sbr.rel target = $region78
              $region83: #{tpu_custom_call.1} parent=75 // loop_exit
                _
            $region76: #{tpu_custom_call.1} parent=67 // pred_fallthru
              _
          $region68: #{tpu_custom_call.1} parent=63 // pred_fallthru
            _
          %504 = vnop
        $region64: #{tpu_custom_call.1} parent=55 // pred_fallthru
          _
        // Predicated region
        $region102: #{tpu_custom_call.1} parent=55 // pred_check
          %p505 = pneg %p111
        $region103: #{tpu_custom_call.1} parent=55 // pred_check_branch
          %507 = sbr.rel (%p505) target = $region105
        $region104: #{tpu_custom_call.1} parent=55 // pred_region
          %p508 = scmp.lt.s32.totalorder %s30, 1
          %s509 = scalar_select %p508, %s30, 1
          %s510 = smul.addr %s509, 8
          %s511 = smul.addr %s510, 4
          %s512 = scalar_lea.vmem %s2, %s511
        $region105: #{tpu_custom_call.1} parent=55 // pred_fallthru
          _
        // Predicated region
        $region106: #{tpu_custom_call.1} parent=55 // pred_check
          %p513 = pneg %p137
        $region107: #{tpu_custom_call.1} parent=55 // pred_check_branch
          %515 = sbr.rel (%p513) target = $region109
        $region108: #{tpu_custom_call.1} parent=55 // pred_region
          %p516 = scmp.lt.s32.totalorder %s30, 1
          %s517 = scalar_select %p516, %s30, 1
          %s518 = smul.addr %s517, 8
          %s519 = smul.addr %s518, 4
          %s520 = scalar_lea.vmem %s3, %s519
        $region109: #{tpu_custom_call.1} parent=55 // pred_fallthru
          _
      $region56: #{tpu_custom_call.1} parent=5 // pred_fallthru
        _
      %p521 = scmp.le.s32.totalorder 1, %s23
      %p522 = scmp.lt.s32.totalorder %s23, 5
      %p523 = pnand %p521, %p522
      %p524 = pneg %p523
      // Predicated region
      $region110: #{tpu_custom_call.1} parent=5 // pred_check
        _
      $region111: #{tpu_custom_call.1} parent=5 // pred_check_branch
        %526 = sbr.rel (%p523) target = $region113
      $region112: #{tpu_custom_call.1} parent=5 // pred_region
        %s527 = ssub.s32 %s23, 1
        %s528 = sand.u32 %s78, 1
        %s529 = sand.u32 %s78, 1
        %s530 = smul.addr %s529, 16
        %s531 = scalar_lea.vmem [#allocation2], %s530
        // Predicated region
        $region114: #{tpu_custom_call.1} parent=112 // pred_check
          %p532 = pneg %p91
        $region115: #{tpu_custom_call.1} parent=112 // pred_check_branch
          %534 = sbr.rel (%p532) target = $region117
        $region116: #{tpu_custom_call.1} parent=112 // pred_region
          _
        $region117: #{tpu_custom_call.1} parent=112 // pred_fallthru
          _
        %p535 = scmp.lt.s32.totalorder %s32, 1
        %s536 = scalar_select %p535, %s32, 1
        %p537 = scmp.lt.s32.totalorder %s33, 1
        %s538 = scalar_select %p537, %s33, 1
        %s539 = smul.addr %s536, 2
        %s540 = sadd.s32 %s538, %s539
        %s541 = smul.addr %s540, 8
        %s542 = scalar_lea.vmem %s0, %s541
        %p543 = pneg %p63
        %p544 = pneg %p60
        %s545 = sand.u32 %s78, 1
        %s546 = sand.u32 %s78, 1
        %s547 = smul.addr %s546, 16
        %s548 = scalar_lea.vmem [#allocation2], %s547
        %p549 = pneg %p91
        %p550 = pneg %p88
        %p551 = scmp.lt.s32.totalorder %s32, 1
        %s552 = scalar_select %p551, %s32, 1
        %s553 = smul.addr %s552, 8
        %s554 = smul.addr %s553, 4
        %s555 = scalar_lea.vmem %s2, %s554
        %p556 = pneg %p117
        %p557 = pneg %p114
        %p558 = scmp.lt.s32.totalorder %s32, 1
        %s559 = scalar_select %p558, %s32, 1
        %s560 = smul.addr %s559, 8
        %s561 = smul.addr %s560, 4
        %s562 = scalar_lea.vmem %s3, %s561
        %p563 = pneg %p143
        %p564 = pneg %p140
        %p565 = pneg %p164
        %p566 = pneg %p161
        %p567 = pneg %p185
        %p568 = pneg %p182
        %p569 = pneg %p206
        %p570 = pneg %p203
        %p571 = pneg %p227
        %p572 = pneg %p224
        %p573 = pneg %p248
        %p574 = pneg %p245
        %p575 = pneg %p269
        %p576 = pneg %p266
        %p577 = pneg %p290
        %p578 = pneg %p287
        %p579 = pneg %p311
        %p580 = pneg %p308
        %p581 = pneg %p332
        %p582 = pneg %p329
        %p583 = pneg %p353
        %p584 = pneg %p350
        %p585 = pneg %p381
        %p586 = pneg %p378
        %s587 = sand.u32 %s368, 1
        %s588 = scalar_lea.sflag [#allocation4], %s587
        %s589 = sand.u32 %s368, 1
        %s590 = smul.addr %s589, 8
        %s591 = scalar_lea.vmem [#allocation3], %s590
        %p592 = scmp.lt.s32.totalorder %s32, 1
        %s593 = scalar_select %p592, %s32, 1
        %p594 = scmp.lt.s32.totalorder %s33, 1
        %s595 = scalar_select %p594, %s33, 1
        %s596 = smul.addr %s593, 2
        %s597 = sadd.s32 %s595, %s596
        %s598 = smul.addr %s597, 8
        %s599 = scalar_lea.vmem %s0, %s598
        %p600 = scmp.lt.s32.totalorder %s32, 1
        %s601 = scalar_select %p600, %s32, 1
        %s602 = smul.addr %s601, 8
        %s603 = smul.addr %s602, 4
        %s604 = scalar_lea.vmem %s2, %s603
        %p605 = scmp.lt.s32.totalorder %s32, 1
        %s606 = scalar_select %p605, %s32, 1
        %s607 = smul.addr %s606, 8
        %s608 = smul.addr %s607, 4
        %s609 = scalar_lea.vmem %s3, %s608
        %v611 = vld [vmem:[%s599] sm:$0xff]
        %v612 = vld [vmem:[%s531] sm:$0xf]
        %v613 = vld [vmem:[%s531 + $0x4] sm:$0xf]
        %v614 = vld [vmem:[%s531 + $0x8] sm:$0xf]
        %v615 = vld [vmem:[%s531 + $0xc] sm:$0xf]
        loop: start=0, step=1, limit=2
        $region118: #{tpu_custom_call.1} parent=112 // loop_pre_header
          _
        $region119: #{tpu_custom_call.1} parent=112 // loop_header
          %s617 = sphi 0, %s621
          %p618 = scmp.ge.s32.totalorder %s617, 2
          %v622 = vphi -inf, %v846
          %v623 = vphi -inf, %v847
          %v624 = vphi -inf, %v848
          %v625 = vphi -inf, %v849
          %v626 = vphi 0.0, %v890
          %v627 = vphi 0.0, %v891
          %v628 = vphi 0.0, %v892
          %v629 = vphi 0.0, %v893
          %v630 = vphi 0.0, %v1087
          %v631 = vphi 0.0, %v1088
          %v632 = vphi 0.0, %v1089
          %v633 = vphi 0.0, %v1090
        $region120: #{tpu_custom_call.1} parent=112 // loop_header_branch
          %620 = sbr.rel (%p618) target = $region124
        $region121: #{tpu_custom_call.1} parent=112 // loop_body
          %s634 = smul.u32 %s617, 8
          %s635 = sshra.s32 %s634, 3
          %s636 = sand.u32 %s634, 7
          %s637 = smul.addr %s635, 4
          %s638 = scalar_lea.vmem %s604, %s637
          %v639 = vld [vmem:[%s638] sm:$0xf]
          %v640 = vld [vmem:[%s638 + $0x8] sm:$0xf]
          %v641 = vld [vmem:[%s638 + $0x10] sm:$0xf]
          %v642 = vld [vmem:[%s638 + $0x18] sm:$0xf]
          %s643 = smul.addr %s635, 4
          %s644 = scalar_lea.vmem %s609, %s643
          %v645 = vld [vmem:[%s644] sm:$0xf]
          %v646 = vld [vmem:[%s644 + $0x8] sm:$0xf]
          %v647 = vld [vmem:[%s644 + $0x10] sm:$0xf]
          %v648 = vld [vmem:[%s644 + $0x18] sm:$0xf]
          %vm649 = vcmask 64512
          %v651 = vsel %vm649, %v612, 0
          %v654 = vsel %vm649, %v639, 0
          %656 = vmatprep.subr.bf16.mxu0 0
          %657 = vmatpush1.bf16.xpose.msra.mxu0 0
          %658 = vmatprep.subr.bf16.mxu0 0
          %659 = vmatpush1.bf16.xpose.msra.mxu0 0
          %660 = vmatprep.subr.bf16.mxu0 0
          %661 = vmatpush1.bf16.xpose.msra.mxu0 0
          %662 = vmatprep.subr.bf16.mxu0 0
          %663 = vmatpush1.bf16.xpose.msra.mxu0 0
          %664 = vmatprep.subr.bf16.mxu0 0
          %665 = vmatpush1.bf16.xpose.msra.mxu0 0
          %666 = vmatprep.subr.bf16.mxu0 0
          %667 = vmatpush1.bf16.xpose.msra.mxu0 0
          %668 = vmatprep.subr.bf16.mxu0 0
          %669 = vmatpush1.bf16.xpose.msra.mxu0 0
          %670 = vmatprep.subr.bf16.mxu0 0
          %671 = vmatpush1.bf16.xpose.msra.mxu0 %v654
          %672 = vmatprep.subr.bf16.mxu0 0
          %673 = vmatpush2.bf16.xpose.msra.mxu0 0
          %674 = vmatprep.subr.bf16.mxu0 0
          %675 = vmatpush2.bf16.xpose.msra.mxu0 0
          %676 = vmatprep.subr.bf16.mxu0 0
          %677 = vmatpush2.bf16.xpose.msra.mxu0 0
          %678 = vmatprep.subr.bf16.mxu0 0
          %679 = vmatpush2.bf16.xpose.msra.mxu0 0
          %680 = vmatprep.subr.bf16.mxu0 0
          %681 = vmatpush2.bf16.xpose.msra.mxu0 0
          %682 = vmatprep.subr.bf16.mxu0 0
          %683 = vmatpush2.bf16.xpose.msra.mxu0 0
          %684 = vmatprep.subr.bf16.mxu0 0
          %685 = vmatpush2.bf16.xpose.msra.mxu0 0
          %686 = vmatprep.subr.bf16.mxu0 0
          %687 = vmatpush2.bf16.xpose.msra.mxu0 0
          %688 = vmatprep.mubr.bf16.mxu0 0
          %689 = vmatmul.mubr.bf16.gmra.mxu0 %v651
          %v690 = vpop.f32.mrf.mxu0
          %v691 = vadd.f32 0.0, %v690
          %v692 = vpop.f32.mrf.mxu0
          %v693 = vpop.f32.mrf.mxu0
          %v694 = vpop.f32.mrf.mxu0
          %695 = vdwg.mxu0
          %v697 = vsel %vm649, %v613, 0
          %v700 = vsel %vm649, %v640, 0
          %702 = vmatprep.subr.bf16.mxu0 0
          %703 = vmatpush1.bf16.xpose.msra.mxu0 0
          %704 = vmatprep.subr.bf16.mxu0 0
          %705 = vmatpush1.bf16.xpose.msra.mxu0 0
          %706 = vmatprep.subr.bf16.mxu0 0
          %707 = vmatpush1.bf16.xpose.msra.mxu0 0
          %708 = vmatprep.subr.bf16.mxu0 0
          %709 = vmatpush1.bf16.xpose.msra.mxu0 0
          %710 = vmatprep.subr.bf16.mxu0 0
          %711 = vmatpush1.bf16.xpose.msra.mxu0 0
          %712 = vmatprep.subr.bf16.mxu0 0
          %713 = vmatpush1.bf16.xpose.msra.mxu0 0
          %714 = vmatprep.subr.bf16.mxu0 0
          %715 = vmatpush1.bf16.xpose.msra.mxu0 0
          %716 = vmatprep.subr.bf16.mxu0 0
          %717 = vmatpush1.bf16.xpose.msra.mxu0 %v700
          %718 = vmatprep.subr.bf16.mxu0 0
          %719 = vmatpush2.bf16.xpose.msra.mxu0 0
          %720 = vmatprep.subr.bf16.mxu0 0
          %721 = vmatpush2.bf16.xpose.msra.mxu0 0
          %722 = vmatprep.subr.bf16.mxu0 0
          %723 = vmatpush2.bf16.xpose.msra.mxu0 0
          %724 = vmatprep.subr.bf16.mxu0 0
          %725 = vmatpush2.bf16.xpose.msra.mxu0 0
          %726 = vmatprep.subr.bf16.mxu0 0
          %727 = vmatpush2.bf16.xpose.msra.mxu0 0
          %728 = vmatprep.subr.bf16.mxu0 0
          %729 = vmatpush2.bf16.xpose.msra.mxu0 0
          %730 = vmatprep.subr.bf16.mxu0 0
          %731 = vmatpush2.bf16.xpose.msra.mxu0 0
          %732 = vmatprep.subr.bf16.mxu0 0
          %733 = vmatpush2.bf16.xpose.msra.mxu0 0
          %734 = vmatprep.mubr.bf16.mxu0 0
          %735 = vmatmul.mubr.bf16.gmra.mxu0 %v697
          %v736 = vpop.f32.mrf.mxu0
          %v737 = vadd.f32 0.0, %v736
          %v738 = vpop.f32.mrf.mxu0
          %v739 = vpop.f32.mrf.mxu0
          %v740 = vpop.f32.mrf.mxu0
          %741 = vdwg.mxu0
          %v743 = vsel %vm649, %v614, 0
          %v746 = vsel %vm649, %v641, 0
          %748 = vmatprep.subr.bf16.mxu0 0
          %749 = vmatpush1.bf16.xpose.msra.mxu0 0
          %750 = vmatprep.subr.bf16.mxu0 0
          %751 = vmatpush1.bf16.xpose.msra.mxu0 0
          %752 = vmatprep.subr.bf16.mxu0 0
          %753 = vmatpush1.bf16.xpose.msra.mxu0 0
          %754 = vmatprep.subr.bf16.mxu0 0
          %755 = vmatpush1.bf16.xpose.msra.mxu0 0
          %756 = vmatprep.subr.bf16.mxu0 0
          %757 = vmatpush1.bf16.xpose.msra.mxu0 0
          %758 = vmatprep.subr.bf16.mxu0 0
          %759 = vmatpush1.bf16.xpose.msra.mxu0 0
          %760 = vmatprep.subr.bf16.mxu0 0
          %761 = vmatpush1.bf16.xpose.msra.mxu0 0
          %762 = vmatprep.subr.bf16.mxu0 0
          %763 = vmatpush1.bf16.xpose.msra.mxu0 %v746
          %764 = vmatprep.subr.bf16.mxu0 0
          %765 = vmatpush2.bf16.xpose.msra.mxu0 0
          %766 = vmatprep.subr.bf16.mxu0 0
          %767 = vmatpush2.bf16.xpose.msra.mxu0 0
          %768 = vmatprep.subr.bf16.mxu0 0
          %769 = vmatpush2.bf16.xpose.msra.mxu0 0
          %770 = vmatprep.subr.bf16.mxu0 0
          %771 = vmatpush2.bf16.xpose.msra.mxu0 0
          %772 = vmatprep.subr.bf16.mxu0 0
          %773 = vmatpush2.bf16.xpose.msra.mxu0 0
          %774 = vmatprep.subr.bf16.mxu0 0
          %775 = vmatpush2.bf16.xpose.msra.mxu0 0
          %776 = vmatprep.subr.bf16.mxu0 0
          %777 = vmatpush2.bf16.xpose.msra.mxu0 0
          %778 = vmatprep.subr.bf16.mxu0 0
          %779 = vmatpush2.bf16.xpose.msra.mxu0 0
          %780 = vmatprep.mubr.bf16.mxu0 0
          %781 = vmatmul.mubr.bf16.gmra.mxu0 %v743
          %v782 = vpop.f32.mrf.mxu0
          %v783 = vadd.f32 0.0, %v782
          %v784 = vpop.f32.mrf.mxu0
          %v785 = vpop.f32.mrf.mxu0
          %v786 = vpop.f32.mrf.mxu0
          %787 = vdwg.mxu0
          %v789 = vsel %vm649, %v615, 0
          %v792 = vsel %vm649, %v642, 0
          %794 = vmatprep.subr.bf16.mxu0 0
          %795 = vmatpush1.bf16.xpose.msra.mxu0 0
          %796 = vmatprep.subr.bf16.mxu0 0
          %797 = vmatpush1.bf16.xpose.msra.mxu0 0
          %798 = vmatprep.subr.bf16.mxu0 0
          %799 = vmatpush1.bf16.xpose.msra.mxu0 0
          %800 = vmatprep.subr.bf16.mxu0 0
          %801 = vmatpush1.bf16.xpose.msra.mxu0 0
          %802 = vmatprep.subr.bf16.mxu0 0
          %803 = vmatpush1.bf16.xpose.msra.mxu0 0
          %804 = vmatprep.subr.bf16.mxu0 0
          %805 = vmatpush1.bf16.xpose.msra.mxu0 0
          %806 = vmatprep.subr.bf16.mxu0 0
          %807 = vmatpush1.bf16.xpose.msra.mxu0 0
          %808 = vmatprep.subr.bf16.mxu0 0
          %809 = vmatpush1.bf16.xpose.msra.mxu0 %v792
          %810 = vmatprep.subr.bf16.mxu0 0
          %811 = vmatpush2.bf16.xpose.msra.mxu0 0
          %812 = vmatprep.subr.bf16.mxu0 0
          %813 = vmatpush2.bf16.xpose.msra.mxu0 0
          %814 = vmatprep.subr.bf16.mxu0 0
          %815 = vmatpush2.bf16.xpose.msra.mxu0 0
          %816 = vmatprep.subr.bf16.mxu0 0
          %817 = vmatpush2.bf16.xpose.msra.mxu0 0
          %818 = vmatprep.subr.bf16.mxu0 0
          %819 = vmatpush2.bf16.xpose.msra.mxu0 0
          %820 = vmatprep.subr.bf16.mxu0 0
          %821 = vmatpush2.bf16.xpose.msra.mxu0 0
          %822 = vmatprep.subr.bf16.mxu0 0
          %823 = vmatpush2.bf16.xpose.msra.mxu0 0
          %824 = vmatprep.subr.bf16.mxu0 0
          %825 = vmatpush2.bf16.xpose.msra.mxu0 0
          %826 = vmatprep.mubr.bf16.mxu0 0
          %827 = vmatmul.mubr.bf16.gmra.mxu0 %v789
          %v828 = vpop.f32.mrf.mxu0
          %v829 = vadd.f32 0.0, %v828
          %v830 = vpop.f32.mrf.mxu0
          %v831 = vpop.f32.mrf.mxu0
          %v832 = vpop.f32.mrf.mxu0
          %833 = vdwg.mxu0
          %v834 = vsel %vm649, %v691, -inf
          %835 = vmax.xlane.f32.xlu0 %v834
          %v836 = vpop.xlane.xlu0 %835
          %v837 = vsel %vm649, %v737, -inf
          %838 = vmax.xlane.f32.xlu0 %v837
          %v839 = vpop.xlane.xlu0 %838
          %v840 = vsel %vm649, %v783, -inf
          %841 = vmax.xlane.f32.xlu0 %v840
          %v842 = vpop.xlane.xlu0 %841
          %v843 = vsel %vm649, %v829, -inf
          %844 = vmax.xlane.f32.xlu0 %v843
          %v845 = vpop.xlane.xlu0 %844
          %v846 = vmax.f32 %v622, %v836
          %v847 = vmax.f32 %v623, %v839
          %v848 = vmax.f32 %v624, %v842
          %v849 = vmax.f32 %v625, %v845
          %v850 = vsub.f32 %v691, %v846
          %v851 = vsub.f32 %v737, %v847
          %v852 = vsub.f32 %v783, %v848
          %v853 = vsub.f32 %v829, %v849
          %v854 = vmul.f32 %v850, 1.442695
          %v855 = vpow.pop %v854
          %v856 = vmul.f32 %v851, 1.442695
          %v857 = vpow.pop %v856
          %v858 = vmul.f32 %v852, 1.442695
          %v859 = vpow.pop %v858
          %v860 = vmul.f32 %v853, 1.442695
          %v861 = vpow.pop %v860
          %v862 = vsub.f32 %v622, %v846
          %v863 = vsub.f32 %v623, %v847
          %v864 = vsub.f32 %v624, %v848
          %v865 = vsub.f32 %v625, %v849
          %v866 = vmul.f32 %v862, 1.442695
          %v867 = vpow.pop %v866
          %v868 = vmul.f32 %v863, 1.442695
          %v869 = vpow.pop %v868
          %v870 = vmul.f32 %v864, 1.442695
          %v871 = vpow.pop %v870
          %v872 = vmul.f32 %v865, 1.442695
          %v873 = vpow.pop %v872
          %v874 = vmul.f32 %v867, %v626
          %v875 = vmul.f32 %v869, %v627
          %v876 = vmul.f32 %v871, %v628
          %v877 = vmul.f32 %v873, %v629
          %v878 = vsel %vm649, %v855, 0.0
          %879 = vadd.xlane.f32.xlu0 %v878
          %v880 = vpop.xlane.xlu0 %879
          %v881 = vsel %vm649, %v857, 0.0
          %882 = vadd.xlane.f32.xlu0 %v881
          %v883 = vpop.xlane.xlu0 %882
          %v884 = vsel %vm649, %v859, 0.0
          %885 = vadd.xlane.f32.xlu0 %v884
          %v886 = vpop.xlane.xlu0 %885
          %v887 = vsel %vm649, %v861, 0.0
          %888 = vadd.xlane.f32.xlu0 %v887
          %v889 = vpop.xlane.xlu0 %888
          %v890 = vadd.f32 %v874, %v880
          %v891 = vadd.f32 %v875, %v883
          %v892 = vadd.f32 %v876, %v886
          %v893 = vadd.f32 %v877, %v889
          %v894 = vmul.f32 %v867, %v630
          %v895 = vmul.f32 %v869, %v631
          %v896 = vmul.f32 %v871, %v632
          %v897 = vmul.f32 %v873, %v633
          %v898 = vpack.c.bf16 %v855, %v855
          %v899 = vpack.c.bf16 %v857, %v857
          %v900 = vpack.c.bf16 %v859, %v859
          %v901 = vpack.c.bf16 %v861, %v861
          %v903 = vsel %vm649, %v898, 0
          %vm905 = vcmask 1043456
          %v907 = vsel %vm905, %v645, 0
          %909 = vmatprep.subr.bf16.mxu0 0
          %910 = vmatpush1.bf16.msra.mxu0 0
          %911 = vmatprep.subr.bf16.mxu0 0
          %912 = vmatpush1.bf16.msra.mxu0 0
          %913 = vmatprep.subr.bf16.mxu0 0
          %914 = vmatpush1.bf16.msra.mxu0 0
          %915 = vmatprep.subr.bf16.mxu0 0
          %916 = vmatpush1.bf16.msra.mxu0 0
          %917 = vmatprep.subr.bf16.mxu0 0
          %918 = vmatpush1.bf16.msra.mxu0 0
          %919 = vmatprep.subr.bf16.mxu0 0
          %920 = vmatpush1.bf16.msra.mxu0 0
          %921 = vmatprep.subr.bf16.mxu0 0
          %922 = vmatpush1.bf16.msra.mxu0 0
          %923 = vmatprep.subr.bf16.mxu0 0
          %924 = vmatpush1.bf16.msra.mxu0 %v907
          %925 = vmatprep.subr.bf16.mxu0 0
          %926 = vmatpush2.bf16.msra.mxu0 0
          %927 = vmatprep.subr.bf16.mxu0 0
          %928 = vmatpush2.bf16.msra.mxu0 0
          %929 = vmatprep.subr.bf16.mxu0 0
          %930 = vmatpush2.bf16.msra.mxu0 0
          %931 = vmatprep.subr.bf16.mxu0 0
          %932 = vmatpush2.bf16.msra.mxu0 0
          %933 = vmatprep.subr.bf16.mxu0 0
          %934 = vmatpush2.bf16.msra.mxu0 0
          %935 = vmatprep.subr.bf16.mxu0 0
          %936 = vmatpush2.bf16.msra.mxu0 0
          %937 = vmatprep.subr.bf16.mxu0 0
          %938 = vmatpush2.bf16.msra.mxu0 0
          %939 = vmatprep.subr.bf16.mxu0 0
          %940 = vmatpush2.bf16.msra.mxu0 0
          %941 = vmatprep.mubr.bf16.mxu0 0
          %942 = vmatmul.mubr.bf16.gmra.mxu0 %v903
          %v943 = vpop.f32.mrf.mxu0
          %v944 = vadd.f32 0.0, %v943
          %v945 = vpop.f32.mrf.mxu0
          %v946 = vpop.f32.mrf.mxu0
          %v947 = vpop.f32.mrf.mxu0
          %948 = vdwg.mxu0
          %v950 = vsel %vm649, %v899, 0
          %v953 = vsel %vm905, %v646, 0
          %955 = vmatprep.subr.bf16.mxu0 0
          %956 = vmatpush1.bf16.msra.mxu0 0
          %957 = vmatprep.subr.bf16.mxu0 0
          %958 = vmatpush1.bf16.msra.mxu0 0
          %959 = vmatprep.subr.bf16.mxu0 0
          %960 = vmatpush1.bf16.msra.mxu0 0
          %961 = vmatprep.subr.bf16.mxu0 0
          %962 = vmatpush1.bf16.msra.mxu0 0
          %963 = vmatprep.subr.bf16.mxu0 0
          %964 = vmatpush1.bf16.msra.mxu0 0
          %965 = vmatprep.subr.bf16.mxu0 0
          %966 = vmatpush1.bf16.msra.mxu0 0
          %967 = vmatprep.subr.bf16.mxu0 0
          %968 = vmatpush1.bf16.msra.mxu0 0
          %969 = vmatprep.subr.bf16.mxu0 0
          %970 = vmatpush1.bf16.msra.mxu0 %v953
          %971 = vmatprep.subr.bf16.mxu0 0
          %972 = vmatpush2.bf16.msra.mxu0 0
          %973 = vmatprep.subr.bf16.mxu0 0
          %974 = vmatpush2.bf16.msra.mxu0 0
          %975 = vmatprep.subr.bf16.mxu0 0
          %976 = vmatpush2.bf16.msra.mxu0 0
          %977 = vmatprep.subr.bf16.mxu0 0
          %978 = vmatpush2.bf16.msra.mxu0 0
          %979 = vmatprep.subr.bf16.mxu0 0
          %980 = vmatpush2.bf16.msra.mxu0 0
          %981 = vmatprep.subr.bf16.mxu0 0
          %982 = vmatpush2.bf16.msra.mxu0 0
          %983 = vmatprep.subr.bf16.mxu0 0
          %984 = vmatpush2.bf16.msra.mxu0 0
          %985 = vmatprep.subr.bf16.mxu0 0
          %986 = vmatpush2.bf16.msra.mxu0 0
          %987 = vmatprep.mubr.bf16.mxu0 0
          %988 = vmatmul.mubr.bf16.gmra.mxu0 %v950
          %v989 = vpop.f32.mrf.mxu0
          %v990 = vadd.f32 0.0, %v989
          %v991 = vpop.f32.mrf.mxu0
          %v992 = vpop.f32.mrf.mxu0
          %v993 = vpop.f32.mrf.mxu0
          %994 = vdwg.mxu0
          %v996 = vsel %vm649, %v900, 0
          %v999 = vsel %vm905, %v647, 0
          %1001 = vmatprep.subr.bf16.mxu0 0
          %1002 = vmatpush1.bf16.msra.mxu0 0
          %1003 = vmatprep.subr.bf16.mxu0 0
          %1004 = vmatpush1.bf16.msra.mxu0 0
          %1005 = vmatprep.subr.bf16.mxu0 0
          %1006 = vmatpush1.bf16.msra.mxu0 0
          %1007 = vmatprep.subr.bf16.mxu0 0
          %1008 = vmatpush1.bf16.msra.mxu0 0
          %1009 = vmatprep.subr.bf16.mxu0 0
          %1010 = vmatpush1.bf16.msra.mxu0 0
          %1011 = vmatprep.subr.bf16.mxu0 0
          %1012 = vmatpush1.bf16.msra.mxu0 0
          %1013 = vmatprep.subr.bf16.mxu0 0
          %1014 = vmatpush1.bf16.msra.mxu0 0
          %1015 = vmatprep.subr.bf16.mxu0 0
          %1016 = vmatpush1.bf16.msra.mxu0 %v999
          %1017 = vmatprep.subr.bf16.mxu0 0
          %1018 = vmatpush2.bf16.msra.mxu0 0
          %1019 = vmatprep.subr.bf16.mxu0 0
          %1020 = vmatpush2.bf16.msra.mxu0 0
          %1021 = vmatprep.subr.bf16.mxu0 0
          %1022 = vmatpush2.bf16.msra.mxu0 0
          %1023 = vmatprep.subr.bf16.mxu0 0
          %1024 = vmatpush2.bf16.msra.mxu0 0
          %1025 = vmatprep.subr.bf16.mxu0 0
          %1026 = vmatpush2.bf16.msra.mxu0 0
          %1027 = vmatprep.subr.bf16.mxu0 0
          %1028 = vmatpush2.bf16.msra.mxu0 0
          %1029 = vmatprep.subr.bf16.mxu0 0
          %1030 = vmatpush2.bf16.msra.mxu0 0
          %1031 = vmatprep.subr.bf16.mxu0 0
          %1032 = vmatpush2.bf16.msra.mxu0 0
          %1033 = vmatprep.mubr.bf16.mxu0 0
          %1034 = vmatmul.mubr.bf16.gmra.mxu0 %v996
          %v1035 = vpop.f32.mrf.mxu0
          %v1036 = vadd.f32 0.0, %v1035
          %v1037 = vpop.f32.mrf.mxu0
          %v1038 = vpop.f32.mrf.mxu0
          %v1039 = vpop.f32.mrf.mxu0
          %1040 = vdwg.mxu0
          %v1042 = vsel %vm649, %v901, 0
          %v1045 = vsel %vm905, %v648, 0
          %1047 = vmatprep.subr.bf16.mxu0 0
          %1048 = vmatpush1.bf16.msra.mxu0 0
          %1049 = vmatprep.subr.bf16.mxu0 0
          %1050 = vmatpush1.bf16.msra.mxu0 0
          %1051 = vmatprep.subr.bf16.mxu0 0
          %1052 = vmatpush1.bf16.msra.mxu0 0
          %1053 = vmatprep.subr.bf16.mxu0 0
          %1054 = vmatpush1.bf16.msra.mxu0 0
          %1055 = vmatprep.subr.bf16.mxu0 0
          %1056 = vmatpush1.bf16.msra.mxu0 0
          %1057 = vmatprep.subr.bf16.mxu0 0
          %1058 = vmatpush1.bf16.msra.mxu0 0
          %1059 = vmatprep.subr.bf16.mxu0 0
          %1060 = vmatpush1.bf16.msra.mxu0 0
          %1061 = vmatprep.subr.bf16.mxu0 0
          %1062 = vmatpush1.bf16.msra.mxu0 %v1045
          %1063 = vmatprep.subr.bf16.mxu0 0
          %1064 = vmatpush2.bf16.msra.mxu0 0
          %1065 = vmatprep.subr.bf16.mxu0 0
          %1066 = vmatpush2.bf16.msra.mxu0 0
          %1067 = vmatprep.subr.bf16.mxu0 0
          %1068 = vmatpush2.bf16.msra.mxu0 0
          %1069 = vmatprep.subr.bf16.mxu0 0
          %1070 = vmatpush2.bf16.msra.mxu0 0
          %1071 = vmatprep.subr.bf16.mxu0 0
          %1072 = vmatpush2.bf16.msra.mxu0 0
          %1073 = vmatprep.subr.bf16.mxu0 0
          %1074 = vmatpush2.bf16.msra.mxu0 0
          %1075 = vmatprep.subr.bf16.mxu0 0
          %1076 = vmatpush2.bf16.msra.mxu0 0
          %1077 = vmatprep.subr.bf16.mxu0 0
          %1078 = vmatpush2.bf16.msra.mxu0 0
          %1079 = vmatprep.mubr.bf16.mxu0 0
          %1080 = vmatmul.mubr.bf16.gmra.mxu0 %v1042
          %v1081 = vpop.f32.mrf.mxu0
          %v1082 = vadd.f32 0.0, %v1081
          %v1083 = vpop.f32.mrf.mxu0
          %v1084 = vpop.f32.mrf.mxu0
          %v1085 = vpop.f32.mrf.mxu0
          %1086 = vdwg.mxu0
          %v1087 = vadd.f32 %v894, %v944
          %v1088 = vadd.f32 %v895, %v990
          %v1089 = vadd.f32 %v896, %v1036
          %v1090 = vadd.f32 %v897, %v1082
        $region122: #{tpu_custom_call.1} parent=112 // loop_footer
          %s621 = sadd.s32 1, %s617
        $region123: #{tpu_custom_call.1} parent=112 // loop_footer_branch
          %616 = sbr.rel target = $region119
        $region124: #{tpu_custom_call.1} parent=112 // loop_exit
          _
        %v1091 = vrcp.pop %v626
        %v1092 = vrcp.pop %v627
        %v1093 = vrcp.pop %v628
        %v1094 = vrcp.pop %v629
        %v1095 = vmul.f32 %v630, %v1091
        %v1096 = vmul.f32 %v631, %v1092
        %v1097 = vmul.f32 %v632, %v1093
        %v1098 = vmul.f32 %v633, %v1094
        %v1099 = vpack.c.bf16 %v1095, %v1095
        %v1100 = vpack.c.bf16 %v1096, %v1096
        %v1101 = vpack.c.bf16 %v1097, %v1097
        %v1102 = vpack.c.bf16 %v1098, %v1098
        %1104 = vrot.lane.b32.xlu0 %v1100, 8
        %v1105 = vpop.permute.xlu0 %1104
        %1107 = vrot.lane.b32.xlu0 %v1101, 16
        %v1108 = vpop.permute.xlu0 %1107
        %1110 = vrot.lane.b32.xlu0 %v1102, 24
        %v1111 = vpop.permute.xlu0 %1110
        %vm1112 = vcmask 64512
        %v1115 = vsel %vm1112, %v1099, %v1105
        %vm1116 = vcmask 130048
        %v1118 = vsel %vm1116, %v1115, %v1108
        %vm1119 = vcmask 195584
        %v1121 = vsel %vm1119, %v1118, %v1111
        %v1122 = vld [vmem:[%s4] sm:$0xf]
        %v1123 = vld [vmem:[%s4 + $0x4] sm:$0xf]
        %v1124 = vld [vmem:[%s4 + $0x8] sm:$0xf]
        %v1125 = vld [vmem:[%s4 + $0xc] sm:$0xf]
        %v1126 = vld [vmem:[%s5] sm:$0x1]
        %v1128 = vlaneseq
        %v1129 = vshrl.u32 %v1128, 7
        %v1130 = vsub.s32 0, %v1129
        %v1131 = vrot.slane %v1126, %v1130
        %v1137 = vunpack.c.l.b16 %v1122
        %v1138 = vunpack.c.l.b16 %v1123
        %v1139 = vunpack.c.l.b16 %v1124
        %v1140 = vunpack.c.l.b16 %v1125
        %v1141 = vpack.c.b16 %v1138, %v1137
        %v1142 = vpack.c.b16 %v1140, %v1139
        %vm1145 = vcmask 261120
        %v1146 = vsel %vm1145, %v1121, 0
        %1148 = vmatprep.subr.bf16.mxu0 0
        %1149 = vmatpush1.bf16.msra.mxu0 0
        %1150 = vmatprep.subr.bf16.mxu0 0
        %1151 = vmatpush1.bf16.msra.mxu0 0
        %1152 = vmatprep.subr.bf16.mxu0 0
        %1153 = vmatpush1.bf16.msra.mxu0 0
        %1154 = vmatprep.subr.bf16.mxu0 0
        %1155 = vmatpush1.bf16.msra.mxu0 0
        %1156 = vmatprep.subr.bf16.mxu0 0
        %1157 = vmatpush1.bf16.msra.mxu0 0
        %1158 = vmatprep.subr.bf16.mxu0 0
        %1159 = vmatpush1.bf16.msra.mxu0 0
        %1160 = vmatprep.subr.bf16.mxu0 0
        %1161 = vmatpush1.bf16.msra.mxu0 %v1142
        %1162 = vmatprep.subr.bf16.mxu0 0
        %1163 = vmatpush1.bf16.msra.mxu0 %v1141
        %1164 = vmatprep.subr.bf16.mxu0 0
        %1165 = vmatpush2.bf16.msra.mxu0 0
        %1166 = vmatprep.subr.bf16.mxu0 0
        %1167 = vmatpush2.bf16.msra.mxu0 0
        %1168 = vmatprep.subr.bf16.mxu0 0
        %1169 = vmatpush2.bf16.msra.mxu0 0
        %1170 = vmatprep.subr.bf16.mxu0 0
        %1171 = vmatpush2.bf16.msra.mxu0 0
        %1172 = vmatprep.subr.bf16.mxu0 0
        %1173 = vmatpush2.bf16.msra.mxu0 0
        %1174 = vmatprep.subr.bf16.mxu0 0
        %1175 = vmatpush2.bf16.msra.mxu0 0
        %1176 = vmatprep.subr.bf16.mxu0 0
        %1177 = vmatpush2.bf16.msra.mxu0 0
        %1178 = vmatprep.subr.bf16.mxu0 0
        %1179 = vmatpush2.bf16.msra.mxu0 0
        %1180 = vmatprep.mubr.bf16.mxu0 0
        %1181 = vmatmul.mubr.bf16.gmra.mxu0 %v1146
        %v1182 = vpop.f32.mrf.mxu0
        %v1183 = vadd.f32 %v1131, %v1182
        %v1184 = vpop.f32.mrf.mxu0
        %v1185 = vpop.f32.mrf.mxu0
        %v1186 = vpop.f32.mrf.mxu0
        %1187 = vdwg.mxu0
        %v1188 = vadd.f32 %v611, %v1183
        %v1189 = vsel %vm1145, %v1188, 0.0
        %1190 = vadd.xlane.f32.xlu0 %v1189
        %v1191 = vpop.xlane.xlu0 %1190
        %v1192 = vrcp.pop 32.0
        %v1193 = vmul.f32 %v1191, %v1192
        %v1194 = vsub.f32 %v1188, %v1193
        %v1195 = vmul.f32 %v1194, %v1194
        %v1196 = vsel %vm1145, %v1195, 0.0
        %1197 = vadd.xlane.f32.xlu0 %v1196
        %v1198 = vpop.xlane.xlu0 %1197
        %v1199 = vmul.f32 %v1198, %v1192
        %v1200 = vadd.f32 %v1199, 1e-05
        %v1201 = vrsqrt.pop %v1200
        %v1202 = vmul.f32 %v1194, %v1201
        %v1203 = vld [vmem:[%s6] sm:$0x1]
        %v1205 = vlaneseq
        %v1206 = vshrl.u32 %v1205, 7
        %v1207 = vsub.s32 0, %v1206
        %v1208 = vrot.slane %v1203, %v1207
        %v1210 = vmul.f32 %v1202, %v1208
        %v1211 = vld [vmem:[%s7] sm:$0x1]
        %v1213 = vlaneseq
        %v1214 = vshrl.u32 %v1213, 7
        %v1215 = vsub.s32 0, %v1214
        %v1216 = vrot.slane %v1211, %v1215
        %v1218 = vadd.f32 %v1210, %v1216
        %v1219 = vpack.c.bf16 %v1218, %v1218
        %v1220 = vld [vmem:[%s8] sm:$0xf]
        %v1221 = vld [vmem:[%s8 + $0x4] sm:$0xf]
        %v1222 = vld [vmem:[%s8 + $0x8] sm:$0xf]
        %v1223 = vld [vmem:[%s8 + $0xc] sm:$0xf]
        %v1224 = vld [vmem:[%s9] sm:$0x1]
        %v1226 = vlaneseq
        %v1227 = vshrl.u32 %v1226, 7
        %v1228 = vsub.s32 0, %v1227
        %v1229 = vrot.slane %v1224, %v1228
        %v1235 = vunpack.c.l.b16 %v1220
        %v1236 = vunpack.c.l.b16 %v1221
        %v1237 = vunpack.c.l.b16 %v1222
        %v1238 = vunpack.c.l.b16 %v1223
        %v1239 = vpack.c.b16 %v1236, %v1235
        %v1240 = vpack.c.b16 %v1238, %v1237
        %v1244 = vsel %vm1145, %v1219, 0
        %1246 = vmatprep.subr.bf16.mxu0 0
        %1247 = vmatpush1.bf16.msra.mxu0 0
        %1248 = vmatprep.subr.bf16.mxu0 0
        %1249 = vmatpush1.bf16.msra.mxu0 0
        %1250 = vmatprep.subr.bf16.mxu0 0
        %1251 = vmatpush1.bf16.msra.mxu0 0
        %1252 = vmatprep.subr.bf16.mxu0 0
        %1253 = vmatpush1.bf16.msra.mxu0 0
        %1254 = vmatprep.subr.bf16.mxu0 0
        %1255 = vmatpush1.bf16.msra.mxu0 0
        %1256 = vmatprep.subr.bf16.mxu0 0
        %1257 = vmatpush1.bf16.msra.mxu0 0
        %1258 = vmatprep.subr.bf16.mxu0 0
        %1259 = vmatpush1.bf16.msra.mxu0 %v1240
        %1260 = vmatprep.subr.bf16.mxu0 0
        %1261 = vmatpush1.bf16.msra.mxu0 %v1239
        %1262 = vmatprep.subr.bf16.mxu0 0
        %1263 = vmatpush2.bf16.msra.mxu0 0
        %1264 = vmatprep.subr.bf16.mxu0 0
        %1265 = vmatpush2.bf16.msra.mxu0 0
        %1266 = vmatprep.subr.bf16.mxu0 0
        %1267 = vmatpush2.bf16.msra.mxu0 0
        %1268 = vmatprep.subr.bf16.mxu0 0
        %1269 = vmatpush2.bf16.msra.mxu0 0
        %1270 = vmatprep.subr.bf16.mxu0 0
        %1271 = vmatpush2.bf16.msra.mxu0 0
        %1272 = vmatprep.subr.bf16.mxu0 0
        %1273 = vmatpush2.bf16.msra.mxu0 0
        %1274 = vmatprep.subr.bf16.mxu0 0
        %1275 = vmatpush2.bf16.msra.mxu0 0
        %1276 = vmatprep.subr.bf16.mxu0 0
        %1277 = vmatpush2.bf16.msra.mxu0 0
        %1278 = vmatprep.mubr.bf16.mxu0 0
        %1279 = vmatmul.mubr.bf16.gmra.mxu0 %v1244
        %v1280 = vpop.f32.mrf.mxu0
        %v1281 = vadd.f32 %v1229, %v1280
        %v1282 = vpop.f32.mrf.mxu0
        %v1283 = vpop.f32.mrf.mxu0
        %v1284 = vpop.f32.mrf.mxu0
        %1285 = vdwg.mxu0
        %v1286 = vmax.f32 %v1281, 0.0
        %v1287 = vpack.c.bf16 %v1286, %v1286
        %v1288 = vld [vmem:[%s10] sm:$0xf]
        %v1289 = vld [vmem:[%s10 + $0x4] sm:$0xf]
        %v1290 = vld [vmem:[%s10 + $0x8] sm:$0xf]
        %v1291 = vld [vmem:[%s10 + $0xc] sm:$0xf]
        %v1292 = vld [vmem:[%s10 + $0x10] sm:$0xf]
        %v1293 = vld [vmem:[%s10 + $0x14] sm:$0xf]
        %v1294 = vld [vmem:[%s10 + $0x18] sm:$0xf]
        %v1295 = vld [vmem:[%s10 + $0x1c] sm:$0xf]
        %v1296 = vld [vmem:[%s11] sm:$0x1]
        %v1298 = vlaneseq
        %v1299 = vshrl.u32 %v1298, 7
        %v1300 = vsub.s32 0, %v1299
        %v1301 = vrot.slane %v1296, %v1300
        %v1311 = vunpack.c.l.b16 %v1288
        %v1312 = vunpack.c.l.b16 %v1289
        %v1313 = vunpack.c.l.b16 %v1290
        %v1314 = vunpack.c.l.b16 %v1291
        %v1315 = vunpack.c.l.b16 %v1292
        %v1316 = vunpack.c.l.b16 %v1293
        %v1317 = vunpack.c.l.b16 %v1294
        %v1318 = vunpack.c.l.b16 %v1295
        %v1319 = vpack.c.b16 %v1312, %v1311
        %v1320 = vpack.c.b16 %v1314, %v1313
        %v1321 = vpack.c.b16 %v1316, %v1315
        %v1322 = vpack.c.b16 %v1318, %v1317
        %vm1327 = vcmask 523264
        %v1329 = vsel %vm1327, %v1287, 0
        %1331 = vmatprep.subr.bf16.mxu0 0
        %1332 = vmatpush1.bf16.msra.mxu0 0
        %1333 = vmatprep.subr.bf16.mxu0 0
        %1334 = vmatpush1.bf16.msra.mxu0 0
        %1335 = vmatprep.subr.bf16.mxu0 0
        %1336 = vmatpush1.bf16.msra.mxu0 0
        %1337 = vmatprep.subr.bf16.mxu0 0
        %1338 = vmatpush1.bf16.msra.mxu0 0
        %1339 = vmatprep.subr.bf16.mxu0 0
        %1340 = vmatpush1.bf16.msra.mxu0 %v1322
        %1341 = vmatprep.subr.bf16.mxu0 0
        %1342 = vmatpush1.bf16.msra.mxu0 %v1321
        %1343 = vmatprep.subr.bf16.mxu0 0
        %1344 = vmatpush1.bf16.msra.mxu0 %v1320
        %1345 = vmatprep.subr.bf16.mxu0 0
        %1346 = vmatpush1.bf16.msra.mxu0 %v1319
        %1347 = vmatprep.subr.bf16.mxu0 0
        %1348 = vmatpush2.bf16.msra.mxu0 0
        %1349 = vmatprep.subr.bf16.mxu0 0
        %1350 = vmatpush2.bf16.msra.mxu0 0
        %1351 = vmatprep.subr.bf16.mxu0 0
        %1352 = vmatpush2.bf16.msra.mxu0 0
        %1353 = vmatprep.subr.bf16.mxu0 0
        %1354 = vmatpush2.bf16.msra.mxu0 0
        %1355 = vmatprep.subr.bf16.mxu0 0
        %1356 = vmatpush2.bf16.msra.mxu0 0
        %1357 = vmatprep.subr.bf16.mxu0 0
        %1358 = vmatpush2.bf16.msra.mxu0 0
        %1359 = vmatprep.subr.bf16.mxu0 0
        %1360 = vmatpush2.bf16.msra.mxu0 0
        %1361 = vmatprep.subr.bf16.mxu0 0
        %1362 = vmatpush2.bf16.msra.mxu0 0
        %1363 = vmatprep.mubr.bf16.mxu0 0
        %1364 = vmatmul.mubr.bf16.gmra.mxu0 %v1329
        %v1365 = vpop.f32.mrf.mxu0
        %v1366 = vadd.f32 %v1301, %v1365
        %v1367 = vpop.f32.mrf.mxu0
        %v1368 = vpop.f32.mrf.mxu0
        %v1369 = vpop.f32.mrf.mxu0
        %1370 = vdwg.mxu0
        %v1371 = vadd.f32 %v1218, %v1366
        %v1372 = vsel %vm1145, %v1371, 0.0
        %1373 = vadd.xlane.f32.xlu0 %v1372
        %v1374 = vpop.xlane.xlu0 %1373
        %v1375 = vmul.f32 %v1374, %v1192
        %v1376 = vsub.f32 %v1371, %v1375
        %v1377 = vmul.f32 %v1376, %v1376
        %v1378 = vsel %vm1145, %v1377, 0.0
        %1379 = vadd.xlane.f32.xlu0 %v1378
        %v1380 = vpop.xlane.xlu0 %1379
        %v1381 = vmul.f32 %v1380, %v1192
        %v1382 = vadd.f32 %v1381, 1e-05
        %v1383 = vrsqrt.pop %v1382
        %v1384 = vmul.f32 %v1376, %v1383
        %v1385 = vld [vmem:[%s12] sm:$0x1]
        %v1387 = vlaneseq
        %v1388 = vshrl.u32 %v1387, 7
        %v1389 = vsub.s32 0, %v1388
        %v1390 = vrot.slane %v1385, %v1389
        %v1392 = vmul.f32 %v1384, %v1390
        %v1393 = vld [vmem:[%s13] sm:$0x1]
        %v1395 = vlaneseq
        %v1396 = vshrl.u32 %v1395, 7
        %v1397 = vsub.s32 0, %v1396
        %v1398 = vrot.slane %v1393, %v1397
        %v1400 = vadd.f32 %v1392, %v1398
        %1401 = vst.msk [vmem:[%s591] sm:$0xff] %vm1145, %v1400
        %s1402 = sand.u32 %s368, 1
        %s1403 = scalar_lea.sflag [#allocation4], %s1402
        %s1404 = sand.u32 %s368, 1
        %s1405 = smul.addr %s1404, 8
        %s1406 = scalar_lea.vmem [#allocation3], %s1405
        // Predicated region
        $region125: #{tpu_custom_call.1} parent=112 // pred_check
          %p1407 = pneg %p378
        $region126: #{tpu_custom_call.1} parent=112 // pred_check_branch
          %1409 = sbr.rel (%p1407) target = $region128
        $region127: #{tpu_custom_call.1} parent=112 // pred_region
          %s1411 = ssub.s32 128, 128
          %1412 = vsyncadd %s1403, %s1411
          %s1413 = smul.addr %s32, 2
          %s1414 = sadd.s32 %s33, %s1413
          %s1415 = smul.addr %s1414, 128
          %s1416 = scalar_lea.hbm %s14, %s1415
          %s1418 = sshll.u32 %s1406, 4
          %s1419 = int_to_ptr.vmem [resolvable:$true] %s1418
          %1421 = dma.vmem_to_hbm [thread:$0]  %s1419, 128, %s1416, %s1403
        $region128: #{tpu_custom_call.1} parent=112 // pred_fallthru
          _
      $region113: #{tpu_custom_call.1} parent=5 // pred_fallthru
        _
      %p1422 = scmp.le.s32.totalorder 2, %s23
      // Predicated region
      $region129: #{tpu_custom_call.1} parent=5 // pred_check
        %p1423 = pneg %p1422
      $region130: #{tpu_custom_call.1} parent=5 // pred_check_branch
        %1425 = sbr.rel (%p1423) target = $region132
      $region131: #{tpu_custom_call.1} parent=5 // pred_region
        %s1426 = ssub.s32 %s23, 2
        // Predicated region
        $region133: #{tpu_custom_call.1} parent=131 // pred_check
          %p1427 = pneg %p384
        $region134: #{tpu_custom_call.1} parent=131 // pred_check_branch
          %1429 = sbr.rel (%p1427) target = $region136
        $region135: #{tpu_custom_call.1} parent=131 // pred_region
          %s1430 = sand.u32 %s369, 1
          %s1431 = scalar_lea.sflag [#allocation4], %s1430
          %s1432 = sand.u32 %s369, 1
          %s1433 = smul.addr %s1432, 8
          %s1434 = scalar_lea.vmem [#allocation3], %s1433
          %1435 = dma.done %s1431, 128
        $region136: #{tpu_custom_call.1} parent=131 // pred_fallthru
          _
      $region132: #{tpu_custom_call.1} parent=5 // pred_fallthru
        _
    $region6: #{tpu_custom_call.1} parent=1 // loop_footer
      %s27 = sadd.s32 1, %s23
    $region7: #{tpu_custom_call.1} parent=1 // loop_footer_branch
      %22 = sbr.rel target = $region3
    $region8: #{tpu_custom_call.1} parent=1 // loop_exit
      _
    %1436 = vsyncpa [#allocation4], 1
    %s1437 = scalar_lea.sflag [#allocation4], 1
    %1438 = vsyncpa %s1437, 1

// kernel: tpu_custom_call.1
$region0: #{tpu_custom_call.1}
  #allocation0 [shape = 'u32[]', space=smem, size = 0x4, offset = 0x4, fixed_abs, tag = 'smem constant byte address 0x4 - core index']
  #allocation1 [shape = 'u32[144,128]{1,0:T(1,128)}', space=vmem, size = 0x12000, scoped, tag = 'internal scratch']
  %s0 = inlined_call_operand.vmem [shape: f32[2,16,32], index: 0, kind: input, shape index: {}]
  %s1 = inlined_call_operand.vmem [shape: bf16[2,4,16,8], index: 1, kind: input, shape index: {}]
  %s2 = inlined_call_operand.vmem [shape: bf16[2,4,16,8], index: 2, kind: input, shape index: {}]
  %s3 = inlined_call_operand.vmem [shape: bf16[2,4,16,8], index: 3, kind: input, shape index: {}]
  %s4 = inlined_call_operand.vmem [shape: bf16[32,32], index: 4, kind: input, shape index: {}]
  %s5 = inlined_call_operand.vmem [shape: f32[1,32], index: 5, kind: input, shape index: {}]
  %s6 = inlined_call_operand.vmem [shape: f32[1,32], index: 6, kind: input, shape index: {}]
  %s7 = inlined_call_operand.vmem [shape: f32[1,32], index: 7, kind: input, shape index: {}]
  %s8 = inlined_call_operand.vmem [shape: bf16[32,64], index: 8, kind: input, shape index: {}]
  %s9 = inlined_call_operand.vmem [shape: f32[1,64], index: 9, kind: input, shape index: {}]
  %s10 = inlined_call_operand.vmem [shape: bf16[64,32], index: 10, kind: input, shape index: {}]
  %s11 = inlined_call_operand.vmem [shape: f32[1,32], index: 11, kind: input, shape index: {}]
  %s12 = inlined_call_operand.vmem [shape: f32[1,32], index: 12, kind: input, shape index: {}]
  %s13 = inlined_call_operand.vmem [shape: f32[1,32], index: 13, kind: input, shape index: {}]
  %s14 = inlined_call_operand.hbm [shape: f32[2,16,32], index: 14, kind: output, shape index: {}]
  %s15 = sld [smem:[#allocation0]]
  $region137: #{tpu_custom_call.1} parent=0
    _
  %s17 = ssub.s32 1, %s15
  %s18 = scalar_select 0, %s17, %s15
  $region1: #{tpu_custom_call.1} parent=0
    #allocation2 [shape = 'u8[16384]{0}', space=vmem, size = 0x4000, scoped, tag = 'input window, operand 1']
    #allocation3 [shape = 'u8[8192]{0}', space=vmem, size = 0x2000, scoped, tag = 'output window, operand 0']
    #allocation4 [shape = 's32[2]{0}', space=sflag, size = 0x8, scoped, tag = 'scoped memory for tpu_custom_call.1']
    %19 = vsyncpa [#allocation4], 0
    %s20 = scalar_lea.sflag [#allocation4], 1
    %21 = vsyncpa %s20, 0
    loop: start=0, step=1, limit=6
    $region2: #{tpu_custom_call.1} parent=1 // loop_pre_header
      _
    $region3: #{tpu_custom_call.1} parent=1 // loop_header
      %s23 = sphi 0, %s27
      %p24 = scmp.ge.s32.totalorder %s23, 6
      %s30 = sphi 0, %s42
      %s31 = sphi 0, %s38
      %s32 = sphi 0, %s30
      %s33 = sphi 0, %s31
      %s34 = sphi 0, %s32
      %s35 = sphi 0, %s33
      %s47 = sphi 0, %s49
      %s50 = sphi 0, %s47
      %s51 = sphi 0, %s50
      %s67 = sphi 0, %s51
      %s75 = sphi 0, %s77
      %s78 = sphi 0, %s75
      %s79 = sphi 0, %s78
      %s95 = sphi 0, %s79
      %s101 = sphi 0, %s103
      %s104 = sphi 0, %s101
      %s105 = sphi 0, %s104
      %s121 = sphi 0, %s105
      %s127 = sphi 0, %s129
      %s130 = sphi 0, %s127
      %s131 = sphi 0, %s130
      %s147 = sphi 0, %s131
      %s151 = sphi 0, %s151
      %s153 = sphi 0, %s151
      %s154 = sphi 0, %s153
      %s168 = sphi 0, %s154
      %s172 = sphi 0, %s172
      %s174 = sphi 0, %s172
      %s175 = sphi 0, %s174
      %s189 = sphi 0, %s175
      %s193 = sphi 0, %s193
      %s195 = sphi 0, %s193
      %s196 = sphi 0, %s195
      %s210 = sphi 0, %s196
      %s214 = sphi 0, %s214
      %s216 = sphi 0, %s214
      %s217 = sphi 0, %s216
      %s231 = sphi 0, %s217
      %s235 = sphi 0, %s235
      %s237 = sphi 0, %s235
      %s238 = sphi 0, %s237
      %s252 = sphi 0, %s238
      %s256 = sphi 0, %s256
      %s258 = sphi 0, %s256
      %s259 = sphi 0, %s258
      %s273 = sphi 0, %s259
      %s277 = sphi 0, %s277
      %s279 = sphi 0, %s277
      %s280 = sphi 0, %s279
      %s294 = sphi 0, %s280
      %s298 = sphi 0, %s298
      %s300 = sphi 0, %s298
      %s301 = sphi 0, %s300
      %s315 = sphi 0, %s301
      %s319 = sphi 0, %s319
      %s321 = sphi 0, %s319
      %s322 = sphi 0, %s321
      %s336 = sphi 0, %s322
      %s340 = sphi 0, %s340
      %s342 = sphi 0, %s340
      %s343 = sphi 0, %s342
      %s357 = sphi 0, %s343
      %s365 = sphi 0, %s367
      %s368 = sphi 0, %s365
      %s369 = sphi 0, %s368
      %s385 = sphi 0, %s369
    $region4: #{tpu_custom_call.1} parent=1 // loop_header_branch
      %26 = sbr.rel (%p24) target = $region8
    $region5: #{tpu_custom_call.1} parent=1 // loop_body
      %s28 = ssub.s32 %s23, 1
      %s29 = ssub.s32 %s23, 2
      %s36 = sadd.s32 1, %s31
      %p37 = scmp.ge.s32.totalorder %s36, 2
      %s38 = scalar_select %p37, 0, %s36
      %s39 = sadd.s32 1, %s30
      %s40 = scalar_select %p37, %s39, %s30
      %p41 = scmp.ge.s32.totalorder %s40, 2
      %s42 = scalar_select %p41, 0, %s40
      %s43 = ssub.s32 %s30, %s42
      %s44 = ssub.s32 %s31, %s38
      %s45 = sor.u32 %s43, %s44
      %p46 = scmp.eq.s32.totalorder %s45, 0
      %s48 = sadd.s32 %s47, 1
      %s49 = scalar_select %p46, %s47, %s48
      %p52 = pneg %p46
      %p53 = scmp.eq.s32.totalorder %s23, 3
      %p54 = por %p52, %p53
      %p55 = scmp.ne.s32.totalorder %s47, %s50
      %p56 = scmp.eq.s32.totalorder %s23, 0
      %p57 = por %p55, %p56
      %p58 = scmp.ne.s32.totalorder %s47, %s50
      %p59 = scmp.eq.s32.totalorder %s28, 3
      %p60 = por %p58, %p59
      %p61 = scmp.ne.s32.totalorder %s50, %s51
      %p62 = scmp.eq.s32.totalorder %s28, 0
      %p63 = por %p61, %p62
      %p64 = scmp.ne.s32.totalorder %s50, %s51
      %p65 = scmp.eq.s32.totalorder %s29, 3
      %p66 = por %p64, %p65
      %p68 = scmp.ne.s32.totalorder %s51, %s67
      %p69 = scmp.eq.s32.totalorder %s29, 0
      %p70 = por %p68, %p69
      %s71 = ssub.s32 %s30, %s42
      %s72 = ssub.s32 %s31, %s38
      %s73 = sor.u32 %s71, %s72
      %p74 = scmp.eq.s32.totalorder %s73, 0
      %s76 = sadd.s32 %s75, 1
      %s77 = scalar_select %p74, %s75, %s76
      %p80 = pneg %p74
      %p81 = scmp.eq.s32.totalorder %s23, 3
      %p82 = por %p80, %p81
      %p83 = scmp.ne.s32.totalorder %s75, %s78
      %p84 = scmp.eq.s32.totalorder %s23, 0
      %p85 = por %p83, %p84
      %p86 = scmp.ne.s32.totalorder %s75, %s78
      %p87 = scmp.eq.s32.totalorder %s28, 3
      %p88 = por %p86, %p87
      %p89 = scmp.ne.s32.totalorder %s78, %s79
      %p90 = scmp.eq.s32.totalorder %s28, 0
      %p91 = por %p89, %p90
      %p92 = scmp.ne.s32.totalorder %s78, %s79
      %p93 = scmp.eq.s32.totalorder %s29, 3
      %p94 = por %p92, %p93
      %p96 = scmp.ne.s32.totalorder %s79, %s95
      %p97 = scmp.eq.s32.totalorder %s29, 0
      %p98 = por %p96, %p97
      %s99 = ssub.s32 %s30, %s42
      %p100 = scmp.eq.s32.totalorder %s99, 0
      %s102 = sadd.s32 %s101, 1
      %s103 = scalar_select %p100, %s101, %s102
      %p106 = pneg %p100
      %p107 = scmp.eq.s32.totalorder %s23, 3
      %p108 = por %p106, %p107
      %p109 = scmp.ne.s32.totalorder %s101, %s104
      %p110 = scmp.eq.s32.totalorder %s23, 0
      %p111 = por %p109, %p110
      %p112 = scmp.ne.s32.totalorder %s101, %s104
      %p113 = scmp.eq.s32.totalorder %s28, 3
      %p114 = por %p112, %p113
      %p115 = scmp.ne.s32.totalorder %s104, %s105
      %p116 = scmp.eq.s32.totalorder %s28, 0
      %p117 = por %p115, %p116
      %p118 = scmp.ne.s32.totalorder %s104, %s105
      %p119 = scmp.eq.s32.totalorder %s29, 3
      %p120 = por %p118, %p119
      %p122 = scmp.ne.s32.totalorder %s105, %s121
      %p123 = scmp.eq.s32.totalorder %s29, 0
      %p124 = por %p122, %p123
      %s125 = ssub.s32 %s30, %s42
      %p126 = scmp.eq.s32.totalorder %s125, 0
      %s128 = sadd.s32 %s127, 1
      %s129 = scalar_select %p126, %s127, %s128
      %p132 = pneg %p126
      %p133 = scmp.eq.s32.totalorder %s23, 3
      %p134 = por %p132, %p133
      %p135 = scmp.ne.s32.totalorder %s127, %s130
      %p136 = scmp.eq.s32.totalorder %s23, 0
      %p137 = por %p135, %p136
      %p138 = scmp.ne.s32.totalorder %s127, %s130
      %p139 = scmp.eq.s32.totalorder %s28, 3
      %p140 = por %p138, %p139
      %p141 = scmp.ne.s32.totalorder %s130, %s131
      %p142 = scmp.eq.s32.totalorder %s28, 0
      %p143 = por %p141, %p142
      %p144 = scmp.ne.s32.totalorder %s130, %s131
      %p145 = scmp.eq.s32.totalorder %s29, 3
      %p146 = por %p144, %p145
      %p148 = scmp.ne.s32.totalorder %s131, %s147
      %p149 = scmp.eq.s32.totalorder %s29, 0
      %p150 = por %p148, %p149
      %s152 = sadd.s32 %s151, 1
      %p155 = scmp.eq.s32.totalorder %s23, 3
      %p156 = scmp.ne.s32.totalorder %s151, %s153
      %p157 = scmp.eq.s32.totalorder %s23, 0
      %p158 = por %p156, %p157
      %p159 = scmp.ne.s32.totalorder %s151, %s153
      %p160 = scmp.eq.s32.totalorder %s28, 3
      %p161 = por %p159, %p160
      %p162 = scmp.ne.s32.totalorder %s153, %s154
      %p163 = scmp.eq.s32.totalorder %s28, 0
      %p164 = por %p162, %p163
      %p165 = scmp.ne.s32.totalorder %s153, %s154
      %p166 = scmp.eq.s32.totalorder %s29, 3
      %p167 = por %p165, %p166
      %p169 = scmp.ne.s32.totalorder %s154, %s168
      %p170 = scmp.eq.s32.totalorder %s29, 0
      %p171 = por %p169, %p170
      %s173 = sadd.s32 %s172, 1
      %p176 = scmp.eq.s32.totalorder %s23, 3
      %p177 = scmp.ne.s32.totalorder %s172, %s174
      %p178 = scmp.eq.s32.totalorder %s23, 0
      %p179 = por %p177, %p178
      %p180 = scmp.ne.s32.totalorder %s172, %s174
      %p181 = scmp.eq.s32.totalorder %s28, 3
      %p182 = por %p180, %p181
      %p183 = scmp.ne.s32.totalorder %s174, %s175
      %p184 = scmp.eq.s32.totalorder %s28, 0
      %p185 = por %p183, %p184
      %p186 = scmp.ne.s32.totalorder %s174, %s175
      %p187 = scmp.eq.s32.totalorder %s29, 3
      %p188 = por %p186, %p187
      %p190 = scmp.ne.s32.totalorder %s175, %s189
      %p191 = scmp.eq.s32.totalorder %s29, 0
      %p192 = por %p190, %p191
      %s194 = sadd.s32 %s193, 1
      %p197 = scmp.eq.s32.totalorder %s23, 3
      %p198 = scmp.ne.s32.totalorder %s193, %s195
      %p199 = scmp.eq.s32.totalorder %s23, 0
      %p200 = por %p198, %p199
      %p201 = scmp.ne.s32.totalorder %s193, %s195
      %p202 = scmp.eq.s32.totalorder %s28, 3
      %p203 = por %p201, %p202
      %p204 = scmp.ne.s32.totalorder %s195, %s196
      %p205 = scmp.eq.s32.totalorder %s28, 0
      %p206 = por %p204, %p205
      %p207 = scmp.ne.s32.totalorder %s195, %s196
      %p208 = scmp.eq.s32.totalorder %s29, 3
      %p209 = por %p207, %p208
      %p211 = scmp.ne.s32.totalorder %s196, %s210
      %p212 = scmp.eq.s32.totalorder %s29, 0
      %p213 = por %p211, %p212
      %s215 = sadd.s32 %s214, 1
      %p218 = scmp.eq.s32.totalorder %s23, 3
      %p219 = scmp.ne.s32.totalorder %s214, %s216
      %p220 = scmp.eq.s32.totalorder %s23, 0
      %p221 = por %p219, %p220
      %p222 = scmp.ne.s32.totalorder %s214, %s216
      %p223 = scmp.eq.s32.totalorder %s28, 3
      %p224 = por %p222, %p223
      %p225 = scmp.ne.s32.totalorder %s216, %s217
      %p226 = scmp.eq.s32.totalorder %s28, 0
      %p227 = por %p225, %p226
      %p228 = scmp.ne.s32.totalorder %s216, %s217
      %p229 = scmp.eq.s32.totalorder %s29, 3
      %p230 = por %p228, %p229
      %p232 = scmp.ne.s32.totalorder %s217, %s231
      %p233 = scmp.eq.s32.totalorder %s29, 0
      %p234 = por %p232, %p233
      %s236 = sadd.s32 %s235, 1
      %p239 = scmp.eq.s32.totalorder %s23, 3
      %p240 = scmp.ne.s32.totalorder %s235, %s237
      %p241 = scmp.eq.s32.totalorder %s23, 0
      %p242 = por %p240, %p241
      %p243 = scmp.ne.s32.totalorder %s235, %s237
      %p244 = scmp.eq.s32.totalorder %s28, 3
      %p245 = por %p243, %p244
      %p246 = scmp.ne.s32.totalorder %s237, %s238
      %p247 = scmp.eq.s32.totalorder %s28, 0
      %p248 = por %p246, %p247
      %p249 = scmp.ne.s32.totalorder %s237, %s238
      %p250 = scmp.eq.s32.totalorder %s29, 3
      %p251 = por %p249, %p250
      %p253 = scmp.ne.s32.totalorder %s238, %s252
      %p254 = scmp.eq.s32.totalorder %s29, 0
      %p255 = por %p253, %p254
      %s257 = sadd.s32 %s256, 1
      %p260 = scmp.eq.s32.totalorder %s23, 3
      %p261 = scmp.ne.s32.totalorder %s256, %s258
      %p262 = scmp.eq.s32.totalorder %s23, 0
      %p263 = por %p261, %p262
      %p264 = scmp.ne.s32.totalorder %s256, %s258
      %p265 = scmp.eq.s32.totalorder %s28, 3
      %p266 = por %p264, %p265
      %p267 = scmp.ne.s32.totalorder %s258, %s259
      %p268 = scmp.eq.s32.totalorder %s28, 0
      %p269 = por %p267, %p268
      %p270 = scmp.ne.s32.totalorder %s258, %s259
      %p271 = scmp.eq.s32.totalorder %s29, 3
      %p272 = por %p270, %p271
      %p274 = scmp.ne.s32.totalorder %s259, %s273
      %p275 = scmp.eq.s32.totalorder %s29, 0
      %p276 = por %p274, %p275
      %s278 = sadd.s32 %s277, 1
      %p281 = scmp.eq.s32.totalorder %s23, 3
      %p282 = scmp.ne.s32.totalorder %s277, %s279
      %p283 = scmp.eq.s32.totalorder %s23, 0
      %p284 = por %p282, %p283
      %p285 = scmp.ne.s32.totalorder %s277, %s279
      %p286 = scmp.eq.s32.totalorder %s28, 3
      %p287 = por %p285, %p286
      %p288 = scmp.ne.s32.totalorder %s279, %s280
      %p289 = scmp.eq.s32.totalorder %s28, 0
      %p290 = por %p288, %p289
      %p291 = scmp.ne.s32.totalorder %s279, %s280
      %p292 = scmp.eq.s32.totalorder %s29, 3
      %p293 = por %p291, %p292
      %p295 = scmp.ne.s32.totalorder %s280, %s294
      %p296 = scmp.eq.s32.totalorder %s29, 0
      %p297 = por %p295, %p296
      %s299 = sadd.s32 %s298, 1
      %p302 = scmp.eq.s32.totalorder %s23, 3
      %p303 = scmp.ne.s32.totalorder %s298, %s300
      %p304 = scmp.eq.s32.totalorder %s23, 0
      %p305 = por %p303, %p304
      %p306 = scmp.ne.s32.totalorder %s298, %s300
      %p307 = scmp.eq.s32.totalorder %s28, 3
      %p308 = por %p306, %p307
      %p309 = scmp.ne.s32.totalorder %s300, %s301
      %p310 = scmp.eq.s32.totalorder %s28, 0
      %p311 = por %p309, %p310
      %p312 = scmp.ne.s32.totalorder %s300, %s301
      %p313 = scmp.eq.s32.totalorder %s29, 3
      %p314 = por %p312, %p313
      %p316 = scmp.ne.s32.totalorder %s301, %s315
      %p317 = scmp.eq.s32.totalorder %s29, 0
      %p318 = por %p316, %p317
      %s320 = sadd.s32 %s319, 1
      %p323 = scmp.eq.s32.totalorder %s23, 3
      %p324 = scmp.ne.s32.totalorder %s319, %s321
      %p325 = scmp.eq.s32.totalorder %s23, 0
      %p326 = por %p324, %p325
      %p327 = scmp.ne.s32.totalorder %s319, %s321
      %p328 = scmp.eq.s32.totalorder %s28, 3
      %p329 = por %p327, %p328
      %p330 = scmp.ne.s32.totalorder %s321, %s322
      %p331 = scmp.eq.s32.totalorder %s28, 0
      %p332 = por %p330, %p331
      %p333 = scmp.ne.s32.totalorder %s321, %s322
      %p334 = scmp.eq.s32.totalorder %s29, 3
      %p335 = por %p333, %p334
      %p337 = scmp.ne.s32.totalorder %s322, %s336
      %p338 = scmp.eq.s32.totalorder %s29, 0
      %p339 = por %p337, %p338
      %s341 = sadd.s32 %s340, 1
      %p344 = scmp.eq.s32.totalorder %s23, 3
      %p345 = scmp.ne.s32.totalorder %s340, %s342
      %p346 = scmp.eq.s32.totalorder %s23, 0
      %p347 = por %p345, %p346
      %p348 = scmp.ne.s32.totalorder %s340, %s342
      %p349 = scmp.eq.s32.totalorder %s28, 3
      %p350 = por %p348, %p349
      %p351 = scmp.ne.s32.totalorder %s342, %s343
      %p352 = scmp.eq.s32.totalorder %s28, 0
      %p353 = por %p351, %p352
      %p354 = scmp.ne.s32.totalorder %s342, %s343
      %p355 = scmp.eq.s32.totalorder %s29, 3
      %p356 = por %p354, %p355
      %p358 = scmp.ne.s32.totalorder %s343, %s357
      %p359 = scmp.eq.s32.totalorder %s29, 0
      %p360 = por %p358, %p359
      %s361 = ssub.s32 %s30, %s42
      %s362 = ssub.s32 %s31, %s38
      %s363 = sor.u32 %s361, %s362
      %p364 = scmp.eq.s32.totalorder %s363, 0
      %s366 = sadd.s32 %s365, 1
      %s367 = scalar_select %p364, %s365, %s366
      %p370 = pneg %p364
      %p371 = scmp.eq.s32.totalorder %s23, 3
      %p372 = por %p370, %p371
      %p373 = scmp.ne.s32.totalorder %s365, %s368
      %p374 = scmp.eq.s32.totalorder %s23, 0
      %p375 = por %p373, %p374
      %p376 = scmp.ne.s32.totalorder %s365, %s368
      %p377 = scmp.eq.s32.totalorder %s28, 3
      %p378 = por %p376, %p377
      %p379 = scmp.ne.s32.totalorder %s368, %s369
      %p380 = scmp.eq.s32.totalorder %s28, 0
      %p381 = por %p379, %p380
      %p382 = scmp.ne.s32.totalorder %s368, %s369
      %p383 = scmp.eq.s32.totalorder %s29, 3
      %p384 = por %p382, %p383
      %p386 = scmp.ne.s32.totalorder %s369, %s385
      %p387 = scmp.eq.s32.totalorder %s29, 0
      %p388 = por %p386, %p387
      %p389 = scmp.le.s32.totalorder 1, %s23
      %p390 = scmp.lt.s32.totalorder %s23, 5
      %p391 = pnand %p389, %p390
      %p392 = pneg %p391
      // Predicated region
      $region9: #{tpu_custom_call.1} parent=5 // pred_check
        _
      $region10: #{tpu_custom_call.1} parent=5 // pred_check_branch
        %394 = sbr.rel (%p391) target = $region12
      $region11: #{tpu_custom_call.1} parent=5 // pred_region
        %s395 = ssub.s32 %s23, 1
        // Predicated region
        $region13: #{tpu_custom_call.1} parent=11 // pred_check
          %p396 = pneg %p164
        $region14: #{tpu_custom_call.1} parent=11 // pred_check_branch
          %398 = sbr.rel (%p396) target = $region16
        $region15: #{tpu_custom_call.1} parent=11 // pred_region
          _
        $region16: #{tpu_custom_call.1} parent=11 // pred_fallthru
          _
        // Predicated region
        $region17: #{tpu_custom_call.1} parent=11 // pred_check
          %p399 = pneg %p185
        $region18: #{tpu_custom_call.1} parent=11 // pred_check_branch
          %401 = sbr.rel (%p399) target = $region20
        $region19: #{tpu_custom_call.1} parent=11 // pred_region
          _
        $region20: #{tpu_custom_call.1} parent=11 // pred_fallthru
          _
        // Predicated region
        $region21: #{tpu_custom_call.1} parent=11 // pred_check
          %p402 = pneg %p206
        $region22: #{tpu_custom_call.1} parent=11 // pred_check_branch
          %404 = sbr.rel (%p402) target = $region24
        $region23: #{tpu_custom_call.1} parent=11 // pred_region
          _
        $region24: #{tpu_custom_call.1} parent=11 // pred_fallthru
          _
        // Predicated region
        $region25: #{tpu_custom_call.1} parent=11 // pred_check
          %p405 = pneg %p227
        $region26: #{tpu_custom_call.1} parent=11 // pred_check_branch
          %407 = sbr.rel (%p405) target = $region28
        $region27: #{tpu_custom_call.1} parent=11 // pred_region
          _
        $region28: #{tpu_custom_call.1} parent=11 // pred_fallthru
          _
        // Predicated region
        $region29: #{tpu_custom_call.1} parent=11 // pred_check
          %p408 = pneg %p248
        $region30: #{tpu_custom_call.1} parent=11 // pred_check_branch
          %410 = sbr.rel (%p408) target = $region32
        $region31: #{tpu_custom_call.1} parent=11 // pred_region
          _
        $region32: #{tpu_custom_call.1} parent=11 // pred_fallthru
          _
        // Predicated region
        $region33: #{tpu_custom_call.1} parent=11 // pred_check
          %p411 = pneg %p269
        $region34: #{tpu_custom_call.1} parent=11 // pred_check_branch
          %413 = sbr.rel (%p411) target = $region36
        $region35: #{tpu_custom_call.1} parent=11 // pred_region
          _
        $region36: #{tpu_custom_call.1} parent=11 // pred_fallthru
          _
        // Predicated region
        $region37: #{tpu_custom_call.1} parent=11 // pred_check
          %p414 = pneg %p290
        $region38: #{tpu_custom_call.1} parent=11 // pred_check_branch
          %416 = sbr.rel (%p414) target = $region40
        $region39: #{tpu_custom_call.1} parent=11 // pred_region
          _
        $region40: #{tpu_custom_call.1} parent=11 // pred_fallthru
          _
        // Predicated region
        $region41: #{tpu_custom_call.1} parent=11 // pred_check
          %p417 = pneg %p311
        $region42: #{tpu_custom_call.1} parent=11 // pred_check_branch
          %419 = sbr.rel (%p417) target = $region44
        $region43: #{tpu_custom_call.1} parent=11 // pred_region
          _
        $region44: #{tpu_custom_call.1} parent=11 // pred_fallthru
          _
        // Predicated region
        $region45: #{tpu_custom_call.1} parent=11 // pred_check
          %p420 = pneg %p332
        $region46: #{tpu_custom_call.1} parent=11 // pred_check_branch
          %422 = sbr.rel (%p420) target = $region48
        $region47: #{tpu_custom_call.1} parent=11 // pred_region
          _
        $region48: #{tpu_custom_call.1} parent=11 // pred_fallthru
          _
        // Predicated region
        $region49: #{tpu_custom_call.1} parent=11 // pred_check
          %p423 = pneg %p353
        $region50: #{tpu_custom_call.1} parent=11 // pred_check_branch
          %425 = sbr.rel (%p423) target = $region52
        $region51: #{tpu_custom_call.1} parent=11 // pred_region
          _
        $region52: #{tpu_custom_call.1} parent=11 // pred_fallthru
          _
      $region12: #{tpu_custom_call.1} parent=5 // pred_fallthru
        _
      %p426 = scmp.lt.s32.totalorder %s23, 4
      // Predicated region
      $region53: #{tpu_custom_call.1} parent=5 // pred_check
        %p427 = pneg %p426
      $region54: #{tpu_custom_call.1} parent=5 // pred_check_branch
        %429 = sbr.rel (%p427) target = $region56
      $region55: #{tpu_custom_call.1} parent=5 // pred_region
        // Predicated region
        $region57: #{tpu_custom_call.1} parent=55 // pred_check
          %p430 = pneg %p57
        $region58: #{tpu_custom_call.1} parent=55 // pred_check_branch
          %432 = sbr.rel (%p430) target = $region60
        $region59: #{tpu_custom_call.1} parent=55 // pred_region
          %p433 = scmp.lt.s32.totalorder %s30, 1
          %s434 = scalar_select %p433, %s30, 1
          %p435 = scmp.lt.s32.totalorder %s31, 1
          %s436 = scalar_select %p435, %s31, 1
          %s437 = smul.addr %s434, 2
          %s438 = sadd.s32 %s436, %s437
          %s439 = smul.addr %s438, 8
          %s440 = scalar_lea.vmem %s0, %s439
        $region60: #{tpu_custom_call.1} parent=55 // pred_fallthru
          _
        // Predicated region
        $region61: #{tpu_custom_call.1} parent=55 // pred_check
          %p441 = pneg %p85
        $region62: #{tpu_custom_call.1} parent=55 // pred_check_branch
          %443 = sbr.rel (%p441) target = $region64
        $region63: #{tpu_custom_call.1} parent=55 // pred_region
          %s444 = sand.u32 %s75, 1
          %s445 = sand.u32 %s75, 1
          %s446 = smul.addr %s445, 16
          %s447 = scalar_lea.vmem [#allocation2], %s446
          %s448 = smul.addr %s30, 8
          %s449 = sadd.s32 %s31, %s448
          %s450 = smul.addr %s449, 4
          %s451 = scalar_lea.vmem %s1, %s450
          // Predicated region
          $region65: #{tpu_custom_call.1} parent=63 // pred_check
            _
          $region66: #{tpu_custom_call.1} parent=63 // pred_check_branch
            %453 = sbr.rel (0) target = $region68
          $region67: #{tpu_custom_call.1} parent=63 // pred_region
            // Predicated region
            $region69: #{tpu_custom_call.1} parent=67 // pred_check
              _
            $region70: #{tpu_custom_call.1} parent=67 // pred_check_branch
              %455 = sbr.rel target = $region72
            $region71: #{tpu_custom_call.1} parent=67 // pred_region
              // Predicated region
              $region84: #{tpu_custom_call.1} parent=71 // pred_check
                _
              $region85: #{tpu_custom_call.1} parent=71 // pred_check_branch
                %477 = sbr.rel (0) target = $region87
              $region86: #{tpu_custom_call.1} parent=71 // pred_region
                loop: start=0, step=1, limit=1
                $region88: #{tpu_custom_call.1} parent=86 // loop_pre_header
                  _
                $region89: #{tpu_custom_call.1} parent=86 // loop_header
                  %s479 = sphi 0, %s483
                  %p480 = scmp.ge.s32.totalorder %s479, 1
                  %s484 = sphi %s451, %s451
                  %s485 = sphi %s447, %s447
                $region90: #{tpu_custom_call.1} parent=86 // loop_header_branch
                  %482 = sbr.rel (%p480) target = $region94
                $region91: #{tpu_custom_call.1} parent=86 // loop_body
                  _
                $region92: #{tpu_custom_call.1} parent=86 // loop_footer
                  %s483 = sadd.s32 1, %s479
                $region93: #{tpu_custom_call.1} parent=86 // loop_footer_branch
                  %478 = sbr.rel target = $region89
                $region94: #{tpu_custom_call.1} parent=86 // loop_exit
                  _
                %s487 = ssub.s32 16, 1
                loop: start=0, step=1, limit=1
                $region95: #{tpu_custom_call.1} parent=86 // loop_pre_header
                  _
                $region96: #{tpu_custom_call.1} parent=86 // loop_header
                  %s489 = sphi 0, %s493
                  %p490 = scmp.ge.s32.totalorder %s489, 1
                  %s494 = sphi %s451, %s451
                  %s495 = sphi %s447, %s447
                $region97: #{tpu_custom_call.1} parent=86 // loop_header_branch
                  %492 = sbr.rel (%p490) target = $region101
                $region98: #{tpu_custom_call.1} parent=86 // loop_body
                  %v496 = vld [vmem:[%s494] sm:%s487]
                  %497 = vst [vmem:[%s495] sm:%s487] %v496
                  %v498 = vld [vmem:[%s494 + $0x8] sm:%s487]
                  %499 = vst [vmem:[%s495 + $0x4] sm:%s487] %v498
                  %v500 = vld [vmem:[%s494 + $0x10] sm:%s487]
                  %501 = vst [vmem:[%s495 + $0x8] sm:%s487] %v500
                  %v502 = vld [vmem:[%s494 + $0x18] sm:%s487]
                  %503 = vst [vmem:[%s495 + $0xc] sm:%s487] %v502
                $region99: #{tpu_custom_call.1} parent=86 // loop_footer
                  %s493 = sadd.s32 1, %s489
                $region100: #{tpu_custom_call.1} parent=86 // loop_footer_branch
                  %488 = sbr.rel target = $region96
                $region101: #{tpu_custom_call.1} parent=86 // loop_exit
                  _
              $region87: #{tpu_custom_call.1} parent=71 // pred_fallthru
                _
            $region72: #{tpu_custom_call.1} parent=67 // pred_fallthru
              _
            // Predicated region
            $region73: #{tpu_custom_call.1} parent=67 // pred_check
              _
            $region74: #{tpu_custom_call.1} parent=67 // pred_check_branch
              %457 = sbr.rel (0) target = $region76
            $region75: #{tpu_custom_call.1} parent=67 // pred_region
              %s459 = ssub.s32 16, 1
              loop: start=0, step=1, limit=1
              $region77: #{tpu_custom_call.1} parent=75 // loop_pre_header
                _
              $region78: #{tpu_custom_call.1} parent=75 // loop_header
                %s461 = sphi 0, %s465
                %p462 = scmp.ge.s32.totalorder %s461, 1
                %s466 = sphi %s451, %s451
                %s467 = sphi %s447, %s447
              $region79: #{tpu_custom_call.1} parent=75 // loop_header_branch
                %464 = sbr.rel (%p462) target = $region83
              $region80: #{tpu_custom_call.1} parent=75 // loop_body
                %v468 = vld [vmem:[%s466] sm:%s459]
                %469 = vst [vmem:[%s467] sm:%s459] %v468
                %v470 = vld [vmem:[%s466 + $0x8] sm:%s459]
                %471 = vst [vmem:[%s467 + $0x4] sm:%s459] %v470
                %v472 = vld [vmem:[%s466 + $0x10] sm:%s459]
                %473 = vst [vmem:[%s467 + $0x8] sm:%s459] %v472
                %v474 = vld [vmem:[%s466 + $0x18] sm:%s459]
                %475 = vst [vmem:[%s467 + $0xc] sm:%s459] %v474
              $region81: #{tpu_custom_call.1} parent=75 // loop_footer
                %s465 = sadd.s32 1, %s461
              $region82: #{tpu_custom_call.1} parent=75 // loop_footer_branch
                %460 = sbr.rel target = $region78
              $region83: #{tpu_custom_call.1} parent=75 // loop_exit
                _
            $region76: #{tpu_custom_call.1} parent=67 // pred_fallthru
              _
          $region68: #{tpu_custom_call.1} parent=63 // pred_fallthru
            _
          %504 = vnop
        $region64: #{tpu_custom_call.1} parent=55 // pred_fallthru
          _
        // Predicated region
        $region102: #{tpu_custom_call.1} parent=55 // pred_check
          %p505 = pneg %p111
        $region103: #{tpu_custom_call.1} parent=55 // pred_check_branch
          %507 = sbr.rel (%p505) target = $region105
        $region104: #{tpu_custom_call.1} parent=55 // pred_region
          %p508 = scmp.lt.s32.totalorder %s30, 1
          %s509 = scalar_select %p508, %s30, 1
          %s510 = smul.addr %s509, 8
          %s511 = smul.addr %s510, 4
          %s512 = scalar_lea.vmem %s2, %s511
        $region105: #{tpu_custom_call.1} parent=55 // pred_fallthru
          _
        // Predicated region
        $region106: #{tpu_custom_call.1} parent=55 // pred_check
          %p513 = pneg %p137
        $region107: #{tpu_custom_call.1} parent=55 // pred_check_branch
          %515 = sbr.rel (%p513) target = $region109
        $region108: #{tpu_custom_call.1} parent=55 // pred_region
          %p516 = scmp.lt.s32.totalorder %s30, 1
          %s517 = scalar_select %p516, %s30, 1
          %s518 = smul.addr %s517, 8
          %s519 = smul.addr %s518, 4
          %s520 = scalar_lea.vmem %s3, %s519
        $region109: #{tpu_custom_call.1} parent=55 // pred_fallthru
          _
      $region56: #{tpu_custom_call.1} parent=5 // pred_fallthru
        _
      %p521 = scmp.le.s32.totalorder 1, %s23
      %p522 = scmp.lt.s32.totalorder %s23, 5
      %p523 = pnand %p521, %p522
      %p524 = pneg %p523
      // Predicated region
      $region110: #{tpu_custom_call.1} parent=5 // pred_check
        _
      $region111: #{tpu_custom_call.1} parent=5 // pred_check_branch
        %526 = sbr.rel (%p523) target = $region113
      $region112: #{tpu_custom_call.1} parent=5 // pred_region
        %s527 = ssub.s32 %s23, 1
        %s528 = sand.u32 %s78, 1
        %s529 = sand.u32 %s78, 1
        %s530 = smul.addr %s529, 16
        %s531 = scalar_lea.vmem [#allocation2], %s530
        // Predicated region
        $region114: #{tpu_custom_call.1} parent=112 // pred_check
          %p532 = pneg %p91
        $region115: #{tpu_custom_call.1} parent=112 // pred_check_branch
          %534 = sbr.rel (%p532) target = $region117
        $region116: #{tpu_custom_call.1} parent=112 // pred_region
          _
        $region117: #{tpu_custom_call.1} parent=112 // pred_fallthru
          _
        %p535 = scmp.lt.s32.totalorder %s32, 1
        %s536 = scalar_select %p535, %s32, 1
        %p537 = scmp.lt.s32.totalorder %s33, 1
        %s538 = scalar_select %p537, %s33, 1
        %s539 = smul.addr %s536, 2
        %s540 = sadd.s32 %s538, %s539
        %s541 = smul.addr %s540, 8
        %s542 = scalar_lea.vmem %s0, %s541
        %p543 = pneg %p63
        %p544 = pneg %p60
        %s545 = sand.u32 %s78, 1
        %s546 = sand.u32 %s78, 1
        %s547 = smul.addr %s546, 16
        %s548 = scalar_lea.vmem [#allocation2], %s547
        %p549 = pneg %p91
        %p550 = pneg %p88
        %p551 = scmp.lt.s32.totalorder %s32, 1
        %s552 = scalar_select %p551, %s32, 1
        %s553 = smul.addr %s552, 8
        %s554 = smul.addr %s553, 4
        %s555 = scalar_lea.vmem %s2, %s554
        %p556 = pneg %p117
        %p557 = pneg %p114
        %p558 = scmp.lt.s32.totalorder %s32, 1
        %s559 = scalar_select %p558, %s32, 1
        %s560 = smul.addr %s559, 8
        %s561 = smul.addr %s560, 4
        %s562 = scalar_lea.vmem %s3, %s561
        %p563 = pneg %p143
        %p564 = pneg %p140
        %p565 = pneg %p164
        %p566 = pneg %p161
        %p567 = pneg %p185
        %p568 = pneg %p182
        %p569 = pneg %p206
        %p570 = pneg %p203
        %p571 = pneg %p227
        %p572 = pneg %p224
        %p573 = pneg %p248
        %p574 = pneg %p245
        %p575 = pneg %p269
        %p576 = pneg %p266
        %p577 = pneg %p290
        %p578 = pneg %p287
        %p579 = pneg %p311
        %p580 = pneg %p308
        %p581 = pneg %p332
        %p582 = pneg %p329
        %p583 = pneg %p353
        %p584 = pneg %p350
        %p585 = pneg %p381
        %p586 = pneg %p378
        %s587 = sand.u32 %s368, 1
        %s588 = scalar_lea.sflag [#allocation4], %s587
        %s589 = sand.u32 %s368, 1
        %s590 = smul.addr %s589, 8
        %s591 = scalar_lea.vmem [#allocation3], %s590
        %p592 = scmp.lt.s32.totalorder %s32, 1
        %s593 = scalar_select %p592, %s32, 1
        %p594 = scmp.lt.s32.totalorder %s33, 1
        %s595 = scalar_select %p594, %s33, 1
        %s596 = smul.addr %s593, 2
        %s597 = sadd.s32 %s595, %s596
        %s598 = smul.addr %s597, 8
        %s599 = scalar_lea.vmem %s0, %s598
        %p600 = scmp.lt.s32.totalorder %s32, 1
        %s601 = scalar_select %p600, %s32, 1
        %s602 = smul.addr %s601, 8
        %s603 = smul.addr %s602, 4
        %s604 = scalar_lea.vmem %s2, %s603
        %p605 = scmp.lt.s32.totalorder %s32, 1
        %s606 = scalar_select %p605, %s32, 1
        %s607 = smul.addr %s606, 8
        %s608 = smul.addr %s607, 4
        %s609 = scalar_lea.vmem %s3, %s608
        %v611 = vld [vmem:[%s599] sm:$0xff]
        %v612 = vld [vmem:[%s531] sm:$0xf]
        %v613 = vld [vmem:[%s531 + $0x4] sm:$0xf]
        %v614 = vld [vmem:[%s531 + $0x8] sm:$0xf]
        %v615 = vld [vmem:[%s531 + $0xc] sm:$0xf]
        loop: start=0, step=1, limit=2
        $region118: #{tpu_custom_call.1} parent=112 // loop_pre_header
          _
        $region119: #{tpu_custom_call.1} parent=112 // loop_header
          %s617 = sphi 0, %s621
          %p618 = scmp.ge.s32.totalorder %s617, 2
          %v622 = vphi -inf, %v846
          %v623 = vphi -inf, %v847
          %v624 = vphi -inf, %v848
          %v625 = vphi -inf, %v849
          %v626 = vphi 0.0, %v890
          %v627 = vphi 0.0, %v891
          %v628 = vphi 0.0, %v892
          %v629 = vphi 0.0, %v893
          %v630 = vphi 0.0, %v1087
          %v631 = vphi 0.0, %v1088
          %v632 = vphi 0.0, %v1089
          %v633 = vphi 0.0, %v1090
        $region120: #{tpu_custom_call.1} parent=112 // loop_header_branch
          %620 = sbr.rel (%p618) target = $region124
        $region121: #{tpu_custom_call.1} parent=112 // loop_body
          %s634 = smul.u32 %s617, 8
          %s635 = sshra.s32 %s634, 3
          %s636 = sand.u32 %s634, 7
          %s637 = smul.addr %s635, 4
          %s638 = scalar_lea.vmem %s604, %s637
          %v639 = vld [vmem:[%s638] sm:$0xf]
          %v640 = vld [vmem:[%s638 + $0x8] sm:$0xf]
          %v641 = vld [vmem:[%s638 + $0x10] sm:$0xf]
          %v642 = vld [vmem:[%s638 + $0x18] sm:$0xf]
          %s643 = smul.addr %s635, 4
          %s644 = scalar_lea.vmem %s609, %s643
          %v645 = vld [vmem:[%s644] sm:$0xf]
          %v646 = vld [vmem:[%s644 + $0x8] sm:$0xf]
          %v647 = vld [vmem:[%s644 + $0x10] sm:$0xf]
          %v648 = vld [vmem:[%s644 + $0x18] sm:$0xf]
          %vm649 = vcmask 64512
          %v651 = vsel %vm649, %v612, 0
          %v654 = vsel %vm649, %v639, 0
          %656 = vmatprep.subr.bf16.mxu0 0
          %657 = vmatpush1.bf16.xpose.msra.mxu0 0
          %658 = vmatprep.subr.bf16.mxu0 0
          %659 = vmatpush1.bf16.xpose.msra.mxu0 0
          %660 = vmatprep.subr.bf16.mxu0 0
          %661 = vmatpush1.bf16.xpose.msra.mxu0 0
          %662 = vmatprep.subr.bf16.mxu0 0
          %663 = vmatpush1.bf16.xpose.msra.mxu0 0
          %664 = vmatprep.subr.bf16.mxu0 0
          %665 = vmatpush1.bf16.xpose.msra.mxu0 0
          %666 = vmatprep.subr.bf16.mxu0 0
          %667 = vmatpush1.bf16.xpose.msra.mxu0 0
          %668 = vmatprep.subr.bf16.mxu0 0
          %669 = vmatpush1.bf16.xpose.msra.mxu0 0
          %670 = vmatprep.subr.bf16.mxu0 0
          %671 = vmatpush1.bf16.xpose.msra.mxu0 %v654
          %672 = vmatprep.subr.bf16.mxu0 0
          %673 = vmatpush2.bf16.xpose.msra.mxu0 0
          %674 = vmatprep.subr.bf16.mxu0 0
          %675 = vmatpush2.bf16.xpose.msra.mxu0 0
          %676 = vmatprep.subr.bf16.mxu0 0
          %677 = vmatpush2.bf16.xpose.msra.mxu0 0
          %678 = vmatprep.subr.bf16.mxu0 0
          %679 = vmatpush2.bf16.xpose.msra.mxu0 0
          %680 = vmatprep.subr.bf16.mxu0 0
          %681 = vmatpush2.bf16.xpose.msra.mxu0 0
          %682 = vmatprep.subr.bf16.mxu0 0
          %683 = vmatpush2.bf16.xpose.msra.mxu0 0
          %684 = vmatprep.subr.bf16.mxu0 0
          %685 = vmatpush2.bf16.xpose.msra.mxu0 0
          %686 = vmatprep.subr.bf16.mxu0 0
          %687 = vmatpush2.bf16.xpose.msra.mxu0 0
          %688 = vmatprep.mubr.bf16.mxu0 0
          %689 = vmatmul.mubr.bf16.gmra.mxu0 %v651
          %v690 = vpop.f32.mrf.mxu0
          %v691 = vadd.f32 0.0, %v690
          %v692 = vpop.f32.mrf.mxu0
          %v693 = vpop.f32.mrf.mxu0
          %v694 = vpop.f32.mrf.mxu0
          %695 = vdwg.mxu0
          %v697 = vsel %vm649, %v613, 0
          %v700 = vsel %vm649, %v640, 0
          %702 = vmatprep.subr.bf16.mxu0 0
          %703 = vmatpush1.bf16.xpose.msra.mxu0 0
          %704 = vmatprep.subr.bf16.mxu0 0
          %705 = vmatpush1.bf16.xpose.msra.mxu0 0
          %706 = vmatprep.subr.bf16.mxu0 0
          %707 = vmatpush1.bf16.xpose.msra.mxu0 0
          %708 = vmatprep.subr.bf16.mxu0 0
          %709 = vmatpush1.bf16.xpose.msra.mxu0 0
          %710 = vmatprep.subr.bf16.mxu0 0
          %711 = vmatpush1.bf16.xpose.msra.mxu0 0
          %712 = vmatprep.subr.bf16.mxu0 0
          %713 = vmatpush1.bf16.xpose.msra.mxu0 0
          %714 = vmatprep.subr.bf16.mxu0 0
          %715 = vmatpush1.bf16.xpose.msra.mxu0 0
          %716 = vmatprep.subr.bf16.mxu0 0
          %717 = vmatpush1.bf16.xpose.msra.mxu0 %v700
          %718 = vmatprep.subr.bf16.mxu0 0
          %719 = vmatpush2.bf16.xpose.msra.mxu0 0
          %720 = vmatprep.subr.bf16.mxu0 0
          %721 = vmatpush2.bf16.xpose.msra.mxu0 0
          %722 = vmatprep.subr.bf16.mxu0 0
          %723 = vmatpush2.bf16.xpose.msra.mxu0 0
          %724 = vmatprep.subr.bf16.mxu0 0
          %725 = vmatpush2.bf16.xpose.msra.mxu0 0
          %726 = vmatprep.subr.bf16.mxu0 0
          %727 = vmatpush2.bf16.xpose.msra.mxu0 0
          %728 = vmatprep.subr.bf16.mxu0 0
          %729 = vmatpush2.bf16.xpose.msra.mxu0 0
          %730 = vmatprep.subr.bf16.mxu0 0
          %731 = vmatpush2.bf16.xpose.msra.mxu0 0
          %732 = vmatprep.subr.bf16.mxu0 0
          %733 = vmatpush2.bf16.xpose.msra.mxu0 0
          %734 = vmatprep.mubr.bf16.mxu0 0
          %735 = vmatmul.mubr.bf16.gmra.mxu0 %v697
          %v736 = vpop.f32.mrf.mxu0
          %v737 = vadd.f32 0.0, %v736
          %v738 = vpop.f32.mrf.mxu0
          %v739 = vpop.f32.mrf.mxu0
          %v740 = vpop.f32.mrf.mxu0
          %741 = vdwg.mxu0
          %v743 = vsel %vm649, %v614, 0
          %v746 = vsel %vm649, %v641, 0
          %748 = vmatprep.subr.bf16.mxu0 0
          %749 = vmatpush1.bf16.xpose.msra.mxu0 0
          %750 = vmatprep.subr.bf16.mxu0 0
          %751 = vmatpush1.bf16.xpose.msra.mxu0 0
          %752 = vmatprep.subr.bf16.mxu0 0
          %753 = vmatpush1.bf16.xpose.msra.mxu0 0
          %754 = vmatprep.subr.bf16.mxu0 0
          %755 = vmatpush1.bf16.xpose.msra.mxu0 0
          %756 = vmatprep.subr.bf16.mxu0 0
          %757 = vmatpush1.bf16.xpose.msra.mxu0 0
          %758 = vmatprep.subr.bf16.mxu0 0
          %759 = vmatpush1.bf16.xpose.msra.mxu0 0
          %760 = vmatprep.subr.bf16.mxu0 0
          %761 = vmatpush1.bf16.xpose.msra.mxu0 0
          %762 = vmatprep.subr.bf16.mxu0 0
          %763 = vmatpush1.bf16.xpose.msra.mxu0 %v746
          %764 = vmatprep.subr.bf16.mxu0 0
          %765 = vmatpush2.bf16.xpose.msra.mxu0 0
          %766 = vmatprep.subr.bf16.mxu0 0
          %767 = vmatpush2.bf16.xpose.msra.mxu0 0
          %768 = vmatprep.subr.bf16.mxu0 0
          %769 = vmatpush2.bf16.xpose.msra.mxu0 0
          %770 = vmatprep.subr.bf16.mxu0 0
          %771 = vmatpush2.bf16.xpose.msra.mxu0 0
          %772 = vmatprep.subr.bf16.mxu0 0
          %773 = vmatpush2.bf16.xpose.msra.mxu0 0
          %774 = vmatprep.subr.bf16.mxu0 0
          %775 = vmatpush2.bf16.xpose.msra.mxu0 0
          %776 = vmatprep.subr.bf16.mxu0 0
          %777 = vmatpush2.bf16.xpose.msra.mxu0 0
          %778 = vmatprep.subr.bf16.mxu0 0
          %779 = vmatpush2.bf16.xpose.msra.mxu0 0
          %780 = vmatprep.mubr.bf16.mxu0 0
          %781 = vmatmul.mubr.bf16.gmra.mxu0 %v743
          %v782 = vpop.f32.mrf.mxu0
          %v783 = vadd.f32 0.0, %v782
          %v784 = vpop.f32.mrf.mxu0
          %v785 = vpop.f32.mrf.mxu0
          %v786 = vpop.f32.mrf.mxu0
          %787 = vdwg.mxu0
          %v789 = vsel %vm649, %v615, 0
          %v792 = vsel %vm649, %v642, 0
          %794 = vmatprep.subr.bf16.mxu0 0
          %795 = vmatpush1.bf16.xpose.msra.mxu0 0
          %796 = vmatprep.subr.bf16.mxu0 0
          %797 = vmatpush1.bf16.xpose.msra.mxu0 0
          %798 = vmatprep.subr.bf16.mxu0 0
          %799 = vmatpush1.bf16.xpose.msra.mxu0 0
          %800 = vmatprep.subr.bf16.mxu0 0
          %801 = vmatpush1.bf16.xpose.msra.mxu0 0
          %802 = vmatprep.subr.bf16.mxu0 0
          %803 = vmatpush1.bf16.xpose.msra.mxu0 0
          %804 = vmatprep.subr.bf16.mxu0 0
          %805 = vmatpush1.bf16.xpose.msra.mxu0 0
          %806 = vmatprep.subr.bf16.mxu0 0
          %807 = vmatpush1.bf16.xpose.msra.mxu0 0
          %808 = vmatprep.subr.bf16.mxu0 0
          %809 = vmatpush1.bf16.xpose.msra.mxu0 %v792
          %810 = vmatprep.subr.bf16.mxu0 0
          %811 = vmatpush2.bf16.xpose.msra.mxu0 0
          %812 = vmatprep.subr.bf16.mxu0 0
          %813 = vmatpush2.bf16.xpose.msra.mxu0 0
          %814 = vmatprep.subr.bf16.mxu0 0
          %815 = vmatpush2.bf16.xpose.msra.mxu0 0
          %816 = vmatprep.subr.bf16.mxu0 0
          %817 = vmatpush2.bf16.xpose.msra.mxu0 0
          %818 = vmatprep.subr.bf16.mxu0 0
          %819 = vmatpush2.bf16.xpose.msra.mxu0 0
          %820 = vmatprep.subr.bf16.mxu0 0
          %821 = vmatpush2.bf16.xpose.msra.mxu0 0
          %822 = vmatprep.subr.bf16.mxu0 0
          %823 = vmatpush2.bf16.xpose.msra.mxu0 0
          %824 = vmatprep.subr.bf16.mxu0 0
          %825 = vmatpush2.bf16.xpose.msra.mxu0 0
          %826 = vmatprep.mubr.bf16.mxu0 0
          %827 = vmatmul.mubr.bf16.gmra.mxu0 %v789
          %v828 = vpop.f32.mrf.mxu0
          %v829 = vadd.f32 0.0, %v828
          %v830 = vpop.f32.mrf.mxu0
          %v831 = vpop.f32.mrf.mxu0
          %v832 = vpop.f32.mrf.mxu0
          %833 = vdwg.mxu0
          %v834 = vsel %vm649, %v691, -inf
          %835 = vmax.xlane.f32.xlu0 %v834
          %v836 = vpop.xlane.xlu0 %835
          %v837 = vsel %vm649, %v737, -inf
          %838 = vmax.xlane.f32.xlu0 %v837
          %v839 = vpop.xlane.xlu0 %838
          %v840 = vsel %vm649, %v783, -inf
          %841 = vmax.xlane.f32.xlu0 %v840
          %v842 = vpop.xlane.xlu0 %841
          %v843 = vsel %vm649, %v829, -inf
          %844 = vmax.xlane.f32.xlu0 %v843
          %v845 = vpop.xlane.xlu0 %844
          %v846 = vmax.f32 %v622, %v836
          %v847 = vmax.f32 %v623, %v839
          %v848 = vmax.f32 %v624, %v842
          %v849 = vmax.f32 %v625, %v845
          %v850 = vsub.f32 %v691, %v846
          %v851 = vsub.f32 %v737, %v847
          %v852 = vsub.f32 %v783, %v848
          %v853 = vsub.f32 %v829, %v849
          %v854 = vmul.f32 %v850, 1.442695
          %v855 = vpow.pop %v854
          %v856 = vmul.f32 %v851, 1.442695
          %v857 = vpow.pop %v856
          %v858 = vmul.f32 %v852, 1.442695
          %v859 = vpow.pop %v858
          %v860 = vmul.f32 %v853, 1.442695
          %v861 = vpow.pop %v860
          %v862 = vsub.f32 %v622, %v846
          %v863 = vsub.f32 %v623, %v847
          %v864 = vsub.f32 %v624, %v848
          %v865 = vsub.f32 %v625, %v849
          %v866 = vmul.f32 %v862, 1.442695
          %v867 = vpow.pop %v866
          %v868 = vmul.f32 %v863, 1.442695
          %v869 = vpow.pop %v868
          %v870 = vmul.f32 %v864, 1.442695
          %v871 = vpow.pop %v870
          %v872 = vmul.f32 %v865, 1.442695
          %v873 = vpow.pop %v872
          %v874 = vmul.f32 %v867, %v626
          %v875 = vmul.f32 %v869, %v627
          %v876 = vmul.f32 %v871, %v628
          %v877 = vmul.f32 %v873, %v629
          %v878 = vsel %vm649, %v855, 0.0
          %879 = vadd.xlane.f32.xlu0 %v878
          %v880 = vpop.xlane.xlu0 %879
          %v881 = vsel %vm649, %v857, 0.0
          %882 = vadd.xlane.f32.xlu0 %v881
          %v883 = vpop.xlane.xlu0 %882
          %v884 = vsel %vm649, %v859, 0.0
          %885 = vadd.xlane.f32.xlu0 %v884
          %v886 = vpop.xlane.xlu0 %885
          %v887 = vsel %vm649, %v861, 0.0
          %888 = vadd.xlane.f32.xlu0 %v887
          %v889 = vpop.xlane.xlu0 %888
          %v890 = vadd.f32 %v874, %v880
          %v891 = vadd.f32 %v875, %v883
          %v892 = vadd.f32 %v876, %v886
          %v893 = vadd.f32 %v877, %v889
          %v894 = vmul.f32 %v867, %v630
          %v895 = vmul.f32 %v869, %v631
          %v896 = vmul.f32 %v871, %v632
          %v897 = vmul.f32 %v873, %v633
          %v898 = vpack.c.bf16 %v855, %v855
          %v899 = vpack.c.bf16 %v857, %v857
          %v900 = vpack.c.bf16 %v859, %v859
          %v901 = vpack.c.bf16 %v861, %v861
          %v903 = vsel %vm649, %v898, 0
          %vm905 = vcmask 1043456
          %v907 = vsel %vm905, %v645, 0
          %909 = vmatprep.subr.bf16.mxu0 0
          %910 = vmatpush1.bf16.msra.mxu0 0
          %911 = vmatprep.subr.bf16.mxu0 0
          %912 = vmatpush1.bf16.msra.mxu0 0
          %913 = vmatprep.subr.bf16.mxu0 0
          %914 = vmatpush1.bf16.msra.mxu0 0
          %915 = vmatprep.subr.bf16.mxu0 0
          %916 = vmatpush1.bf16.msra.mxu0 0
          %917 = vmatprep.subr.bf16.mxu0 0
          %918 = vmatpush1.bf16.msra.mxu0 0
          %919 = vmatprep.subr.bf16.mxu0 0
          %920 = vmatpush1.bf16.msra.mxu0 0
          %921 = vmatprep.subr.bf16.mxu0 0
          %922 = vmatpush1.bf16.msra.mxu0 0
          %923 = vmatprep.subr.bf16.mxu0 0
          %924 = vmatpush1.bf16.msra.mxu0 %v907
          %925 = vmatprep.subr.bf16.mxu0 0
          %926 = vmatpush2.bf16.msra.mxu0 0
          %927 = vmatprep.subr.bf16.mxu0 0
          %928 = vmatpush2.bf16.msra.mxu0 0
          %929 = vmatprep.subr.bf16.mxu0 0
          %930 = vmatpush2.bf16.msra.mxu0 0
          %931 = vmatprep.subr.bf16.mxu0 0
          %932 = vmatpush2.bf16.msra.mxu0 0
          %933 = vmatprep.subr.bf16.mxu0 0
          %934 = vmatpush2.bf16.msra.mxu0 0
          %935 = vmatprep.subr.bf16.mxu0 0
          %936 = vmatpush2.bf16.msra.mxu0 0
          %937 = vmatprep.subr.bf16.mxu0 0
          %938 = vmatpush2.bf16.msra.mxu0 0
          %939 = vmatprep.subr.bf16.mxu0 0
          %940 = vmatpush2.bf16.msra.mxu0 0
          %941 = vmatprep.mubr.bf16.mxu0 0
          %942 = vmatmul.mubr.bf16.gmra.mxu0 %v903
          %v943 = vpop.f32.mrf.mxu0
          %v944 = vadd.f32 0.0, %v943
          %v945 = vpop.f32.mrf.mxu0
          %v946 = vpop.f32.mrf.mxu0
          %v947 = vpop.f32.mrf.mxu0
          %948 = vdwg.mxu0
          %v950 = vsel %vm649, %v899, 0
          %v953 = vsel %vm905, %v646, 0
          %955 = vmatprep.subr.bf16.mxu0 0
          %956 = vmatpush1.bf16.msra.mxu0 0
          %957 = vmatprep.subr.bf16.mxu0 0
          %958 = vmatpush1.bf16.msra.mxu0 0
          %959 = vmatprep.subr.bf16.mxu0 0
          %960 = vmatpush1.bf16.msra.mxu0 0
          %961 = vmatprep.subr.bf16.mxu0 0
          %962 = vmatpush1.bf16.msra.mxu0 0
          %963 = vmatprep.subr.bf16.mxu0 0
          %964 = vmatpush1.bf16.msra.mxu0 0
          %965 = vmatprep.subr.bf16.mxu0 0
          %966 = vmatpush1.bf16.msra.mxu0 0
          %967 = vmatprep.subr.bf16.mxu0 0
          %968 = vmatpush1.bf16.msra.mxu0 0
          %969 = vmatprep.subr.bf16.mxu0 0
          %970 = vmatpush1.bf16.msra.mxu0 %v953
          %971 = vmatprep.subr.bf16.mxu0 0
          %972 = vmatpush2.bf16.msra.mxu0 0
          %973 = vmatprep.subr.bf16.mxu0 0
          %974 = vmatpush2.bf16.msra.mxu0 0
          %975 = vmatprep.subr.bf16.mxu0 0
          %976 = vmatpush2.bf16.msra.mxu0 0
          %977 = vmatprep.subr.bf16.mxu0 0
          %978 = vmatpush2.bf16.msra.mxu0 0
          %979 = vmatprep.subr.bf16.mxu0 0
          %980 = vmatpush2.bf16.msra.mxu0 0
          %981 = vmatprep.subr.bf16.mxu0 0
          %982 = vmatpush2.bf16.msra.mxu0 0
          %983 = vmatprep.subr.bf16.mxu0 0
          %984 = vmatpush2.bf16.msra.mxu0 0
          %985 = vmatprep.subr.bf16.mxu0 0
          %986 = vmatpush2.bf16.msra.mxu0 0
          %987 = vmatprep.mubr.bf16.mxu0 0
          %988 = vmatmul.mubr.bf16.gmra.mxu0 %v950
          %v989 = vpop.f32.mrf.mxu0
          %v990 = vadd.f32 0.0, %v989
          %v991 = vpop.f32.mrf.mxu0
          %v992 = vpop.f32.mrf.mxu0
          %v993 = vpop.f32.mrf.mxu0
          %994 = vdwg.mxu0
          %v996 = vsel %vm649, %v900, 0
          %v999 = vsel %vm905, %v647, 0
          %1001 = vmatprep.subr.bf16.mxu0 0
          %1002 = vmatpush1.bf16.msra.mxu0 0
          %1003 = vmatprep.subr.bf16.mxu0 0
          %1004 = vmatpush1.bf16.msra.mxu0 0
          %1005 = vmatprep.subr.bf16.mxu0 0
          %1006 = vmatpush1.bf16.msra.mxu0 0
          %1007 = vmatprep.subr.bf16.mxu0 0
          %1008 = vmatpush1.bf16.msra.mxu0 0
          %1009 = vmatprep.subr.bf16.mxu0 0
          %1010 = vmatpush1.bf16.msra.mxu0 0
          %1011 = vmatprep.subr.bf16.mxu0 0
          %1012 = vmatpush1.bf16.msra.mxu0 0
          %1013 = vmatprep.subr.bf16.mxu0 0
          %1014 = vmatpush1.bf16.msra.mxu0 0
          %1015 = vmatprep.subr.bf16.mxu0 0
          %1016 = vmatpush1.bf16.msra.mxu0 %v999
          %1017 = vmatprep.subr.bf16.mxu0 0
          %1018 = vmatpush2.bf16.msra.mxu0 0
          %1019 = vmatprep.subr.bf16.mxu0 0
          %1020 = vmatpush2.bf16.msra.mxu0 0
          %1021 = vmatprep.subr.bf16.mxu0 0
          %1022 = vmatpush2.bf16.msra.mxu0 0
          %1023 = vmatprep.subr.bf16.mxu0 0
          %1024 = vmatpush2.bf16.msra.mxu0 0
          %1025 = vmatprep.subr.bf16.mxu0 0
          %1026 = vmatpush2.bf16.msra.mxu0 0
          %1027 = vmatprep.subr.bf16.mxu0 0
          %1028 = vmatpush2.bf16.msra.mxu0 0
          %1029 = vmatprep.subr.bf16.mxu0 0
          %1030 = vmatpush2.bf16.msra.mxu0 0
          %1031 = vmatprep.subr.bf16.mxu0 0
          %1032 = vmatpush2.bf16.msra.mxu0 0
          %1033 = vmatprep.mubr.bf16.mxu0 0
          %1034 = vmatmul.mubr.bf16.gmra.mxu0 %v996
          %v1035 = vpop.f32.mrf.mxu0
          %v1036 = vadd.f32 0.0, %v1035
          %v1037 = vpop.f32.mrf.mxu0
          %v1038 = vpop.f32.mrf.mxu0
          %v1039 = vpop.f32.mrf.mxu0
          %1040 = vdwg.mxu0
          %v1042 = vsel %vm649, %v901, 0
          %v1045 = vsel %vm905, %v648, 0
          %1047 = vmatprep.subr.bf16.mxu0 0
          %1048 = vmatpush1.bf16.msra.mxu0 0
          %1049 = vmatprep.subr.bf16.mxu0 0
          %1050 = vmatpush1.bf16.msra.mxu0 0
          %1051 = vmatprep.subr.bf16.mxu0 0
          %1052 = vmatpush1.bf16.msra.mxu0 0
          %1053 = vmatprep.subr.bf16.mxu0 0
          %1054 = vmatpush1.bf16.msra.mxu0 0
          %1055 = vmatprep.subr.bf16.mxu0 0
          %1056 = vmatpush1.bf16.msra.mxu0 0
          %1057 = vmatprep.subr.bf16.mxu0 0
          %1058 = vmatpush1.bf16.msra.mxu0 0
          %1059 = vmatprep.subr.bf16.mxu0 0
          %1060 = vmatpush1.bf16.msra.mxu0 0
          %1061 = vmatprep.subr.bf16.mxu0 0
          %1062 = vmatpush1.bf16.msra.mxu0 %v1045
          %1063 = vmatprep.subr.bf16.mxu0 0
          %1064 = vmatpush2.bf16.msra.mxu0 0
          %1065 = vmatprep.subr.bf16.mxu0 0
          %1066 = vmatpush2.bf16.msra.mxu0 0
          %1067 = vmatprep.subr.bf16.mxu0 0
          %1068 = vmatpush2.bf16.msra.mxu0 0
          %1069 = vmatprep.subr.bf16.mxu0 0
          %1070 = vmatpush2.bf16.msra.mxu0 0
          %1071 = vmatprep.subr.bf16.mxu0 0
          %1072 = vmatpush2.bf16.msra.mxu0 0
          %1073 = vmatprep.subr.bf16.mxu0 0
          %1074 = vmatpush2.bf16.msra.mxu0 0
          %1075 = vmatprep.subr.bf16.mxu0 0
          %1076 = vmatpush2.bf16.msra.mxu0 0
          %1077 = vmatprep.subr.bf16.mxu0 0
          %1078 = vmatpush2.bf16.msra.mxu0 0
          %1079 = vmatprep.mubr.bf16.mxu0 0
          %1080 = vmatmul.mubr.bf16.gmra.mxu0 %v1042
          %v1081 = vpop.f32.mrf.mxu0
          %v1082 = vadd.f32 0.0, %v1081
          %v1083 = vpop.f32.mrf.mxu0
          %v1084 = vpop.f32.mrf.mxu0
          %v1085 = vpop.f32.mrf.mxu0
          %1086 = vdwg.mxu0
          %v1087 = vadd.f32 %v894, %v944
          %v1088 = vadd.f32 %v895, %v990
          %v1089 = vadd.f32 %v896, %v1036
          %v1090 = vadd.f32 %v897, %v1082
        $region122: #{tpu_custom_call.1} parent=112 // loop_footer
          %s621 = sadd.s32 1, %s617
        $region123: #{tpu_custom_call.1} parent=112 // loop_footer_branch
          %616 = sbr.rel target = $region119
        $region124: #{tpu_custom_call.1} parent=112 // loop_exit
          _
        %v1091 = vrcp.pop %v626
        %v1092 = vrcp.pop %v627
        %v1093 = vrcp.pop %v628
        %v1094 = vrcp.pop %v629
        %v1095 = vmul.f32 %v630, %v1091
        %v1096 = vmul.f32 %v631, %v1092
        %v1097 = vmul.f32 %v632, %v1093
        %v1098 = vmul.f32 %v633, %v1094
        %v1099 = vpack.c.bf16 %v1095, %v1095
        %v1100 = vpack.c.bf16 %v1096, %v1096
        %v1101 = vpack.c.bf16 %v1097, %v1097
        %v1102 = vpack.c.bf16 %v1098, %v1098
        %1104 = vrot.lane.b32.xlu0 %v1100, 8
        %v1105 = vpop.permute.xlu0 %1104
        %1107 = vrot.lane.b32.xlu0 %v1101, 16
        %v1108 = vpop.permute.xlu0 %1107
        %1110 = vrot.lane.b32.xlu0 %v1102, 24
        %v1111 = vpop.permute.xlu0 %1110
        %vm1112 = vcmask 64512
        %v1115 = vsel %vm1112, %v1099, %v1105
        %vm1116 = vcmask 130048
        %v1118 = vsel %vm1116, %v1115, %v1108
        %vm1119 = vcmask 195584
        %v1121 = vsel %vm1119, %v1118, %v1111
        %v1122 = vld [vmem:[%s4] sm:$0xf]
        %v1123 = vld [vmem:[%s4 + $0x4] sm:$0xf]
        %v1124 = vld [vmem:[%s4 + $0x8] sm:$0xf]
        %v1125 = vld [vmem:[%s4 + $0xc] sm:$0xf]
        %v1126 = vld [vmem:[%s5] sm:$0x1]
        %v1128 = vlaneseq
        %v1129 = vshrl.u32 %v1128, 7
        %v1130 = vsub.s32 0, %v1129
        %v1131 = vrot.slane %v1126, %v1130
        %v1137 = vunpack.c.l.b16 %v1122
        %v1138 = vunpack.c.l.b16 %v1123
        %v1139 = vunpack.c.l.b16 %v1124
        %v1140 = vunpack.c.l.b16 %v1125
        %v1141 = vpack.c.b16 %v1138, %v1137
        %v1142 = vpack.c.b16 %v1140, %v1139
        %vm1145 = vcmask 261120
        %v1146 = vsel %vm1145, %v1121, 0
        %1148 = vmatprep.subr.bf16.mxu0 0
        %1149 = vmatpush1.bf16.msra.mxu0 0
        %1150 = vmatprep.subr.bf16.mxu0 0
        %1151 = vmatpush1.bf16.msra.mxu0 0
        %1152 = vmatprep.subr.bf16.mxu0 0
        %1153 = vmatpush1.bf16.msra.mxu0 0
        %1154 = vmatprep.subr.bf16.mxu0 0
        %1155 = vmatpush1.bf16.msra.mxu0 0
        %1156 = vmatprep.subr.bf16.mxu0 0
        %1157 = vmatpush1.bf16.msra.mxu0 0
        %1158 = vmatprep.subr.bf16.mxu0 0
        %1159 = vmatpush1.bf16.msra.mxu0 0
        %1160 = vmatprep.subr.bf16.mxu0 0
        %1161 = vmatpush1.bf16.msra.mxu0 %v1142
        %1162 = vmatprep.subr.bf16.mxu0 0
        %1163 = vmatpush1.bf16.msra.mxu0 %v1141
        %1164 = vmatprep.subr.bf16.mxu0 0
        %1165 = vmatpush2.bf16.msra.mxu0 0
        %1166 = vmatprep.subr.bf16.mxu0 0
        %1167 = vmatpush2.bf16.msra.mxu0 0
        %1168 = vmatprep.subr.bf16.mxu0 0
        %1169 = vmatpush2.bf16.msra.mxu0 0
        %1170 = vmatprep.subr.bf16.mxu0 0
        %1171 = vmatpush2.bf16.msra.mxu0 0
        %1172 = vmatprep.subr.bf16.mxu0 0
        %1173 = vmatpush2.bf16.msra.mxu0 0
        %1174 = vmatprep.subr.bf16.mxu0 0
        %1175 = vmatpush2.bf16.msra.mxu0 0
        %1176 = vmatprep.subr.bf16.mxu0 0
        %1177 = vmatpush2.bf16.msra.mxu0 0
        %1178 = vmatprep.subr.bf16.mxu0 0
        %1179 = vmatpush2.bf16.msra.mxu0 0
        %1180 = vmatprep.mubr.bf16.mxu0 0
        %1181 = vmatmul.mubr.bf16.gmra.mxu0 %v1146
        %v1182 = vpop.f32.mrf.mxu0
        %v1183 = vadd.f32 %v1131, %v1182
        %v1184 = vpop.f32.mrf.mxu0
        %v1185 = vpop.f32.mrf.mxu0
        %v1186 = vpop.f32.mrf.mxu0
        %1187 = vdwg.mxu0
        %v1188 = vadd.f32 %v611, %v1183
        %v1189 = vsel %vm1145, %v1188, 0.0
        %1190 = vadd.xlane.f32.xlu0 %v1189
        %v1191 = vpop.xlane.xlu0 %1190
        %v1192 = vrcp.pop 32.0
        %v1193 = vmul.f32 %v1191, %v1192
        %v1194 = vsub.f32 %v1188, %v1193
        %v1195 = vmul.f32 %v1194, %v1194
        %v1196 = vsel %vm1145, %v1195, 0.0
        %1197 = vadd.xlane.f32.xlu0 %v1196
        %v1198 = vpop.xlane.xlu0 %1197
        %v1199 = vmul.f32 %v1198, %v1192
        %v1200 = vadd.f32 %v1199, 1e-05
        %v1201 = vrsqrt.pop %v1200
        %v1202 = vmul.f32 %v1194, %v1201
        %v1203 = vld [vmem:[%s6] sm:$0x1]
        %v1205 = vlaneseq
        %v1206 = vshrl.u32 %v1205, 7
        %v1207 = vsub.s32 0, %v1206
        %v1208 = vrot.slane %v1203, %v1207
        %v1210 = vmul.f32 %v1202, %v1208
        %v1211 = vld [vmem:[%s7] sm:$0x1]
        %v1213 = vlaneseq
        %v1214 = vshrl.u32 %v1213, 7
        %v1215 = vsub.s32 0, %v1214
        %v1216 = vrot.slane %v1211, %v1215
        %v1218 = vadd.f32 %v1210, %v1216
        %v1219 = vpack.c.bf16 %v1218, %v1218
        %v1220 = vld [vmem:[%s8] sm:$0xf]
        %v1221 = vld [vmem:[%s8 + $0x4] sm:$0xf]
        %v1222 = vld [vmem:[%s8 + $0x8] sm:$0xf]
        %v1223 = vld [vmem:[%s8 + $0xc] sm:$0xf]
        %v1224 = vld [vmem:[%s9] sm:$0x1]
        %v1226 = vlaneseq
        %v1227 = vshrl.u32 %v1226, 7
        %v1228 = vsub.s32 0, %v1227
        %v1229 = vrot.slane %v1224, %v1228
        %v1235 = vunpack.c.l.b16 %v1220
        %v1236 = vunpack.c.l.b16 %v1221
        %v1237 = vunpack.c.l.b16 %v1222
        %v1238 = vunpack.c.l.b16 %v1223
        %v1239 = vpack.c.b16 %v1236, %v1235
        %v1240 = vpack.c.b16 %v1238, %v1237
        %v1244 = vsel %vm1145, %v1219, 0
        %1246 = vmatprep.subr.bf16.mxu0 0
        %1247 = vmatpush1.bf16.msra.mxu0 0
        %1248 = vmatprep.subr.bf16.mxu0 0
        %1249 = vmatpush1.bf16.msra.mxu0 0
        %1250 = vmatprep.subr.bf16.mxu0 0
        %1251 = vmatpush1.bf16.msra.mxu0 0
        %1252 = vmatprep.subr.bf16.mxu0 0
        %1253 = vmatpush1.bf16.msra.mxu0 0
        %1254 = vmatprep.subr.bf16.mxu0 0
        %1255 = vmatpush1.bf16.msra.mxu0 0
        %1256 = vmatprep.subr.bf16.mxu0 0
        %1257 = vmatpush1.bf16.msra.mxu0 0
        %1258 = vmatprep.subr.bf16.mxu0 0
        %1259 = vmatpush1.bf16.msra.mxu0 %v1240
        %1260 = vmatprep.subr.bf16.mxu0 0
        %1261 = vmatpush1.bf16.msra.mxu0 %v1239
        %1262 = vmatprep.subr.bf16.mxu0 0
        %1263 = vmatpush2.bf16.msra.mxu0 0
        %1264 = vmatprep.subr.bf16.mxu0 0
        %1265 = vmatpush2.bf16.msra.mxu0 0
        %1266 = vmatprep.subr.bf16.mxu0 0
        %1267 = vmatpush2.bf16.msra.mxu0 0
        %1268 = vmatprep.subr.bf16.mxu0 0
        %1269 = vmatpush2.bf16.msra.mxu0 0
        %1270 = vmatprep.subr.bf16.mxu0 0
        %1271 = vmatpush2.bf16.msra.mxu0 0
        %1272 = vmatprep.subr.bf16.mxu0 0
        %1273 = vmatpush2.bf16.msra.mxu0 0
        %1274 = vmatprep.subr.bf16.mxu0 0
        %1275 = vmatpush2.bf16.msra.mxu0 0
        %1276 = vmatprep.subr.bf16.mxu0 0
        %1277 = vmatpush2.bf16.msra.mxu0 0
        %1278 = vmatprep.mubr.bf16.mxu0 0
        %1279 = vmatmul.mubr.bf16.gmra.mxu0 %v1244
        %v1280 = vpop.f32.mrf.mxu0
        %v1281 = vadd.f32 %v1229, %v1280
        %v1282 = vpop.f32.mrf.mxu0
        %v1283 = vpop.f32.mrf.mxu0
        %v1284 = vpop.f32.mrf.mxu0
        %1285 = vdwg.mxu0
        %v1286 = vmax.f32 %v1281, 0.0
        %v1287 = vpack.c.bf16 %v1286, %v1286
        %v1288 = vld [vmem:[%s10] sm:$0xf]
        %v1289 = vld [vmem:[%s10 + $0x4] sm:$0xf]
        %v1290 = vld [vmem:[%s10 + $0x8] sm:$0xf]
        %v1291 = vld [vmem:[%s10 + $0xc] sm:$0xf]
        %v1292 = vld [vmem:[%s10 + $0x10] sm:$0xf]
        %v1293 = vld [vmem:[%s10 + $0x14] sm:$0xf]
        %v1294 = vld [vmem:[%s10 + $0x18] sm:$0xf]
        %v1295 = vld [vmem:[%s10 + $0x1c] sm:$0xf]
        %v1296 = vld [vmem:[%s11] sm:$0x1]
        %v1298 = vlaneseq
        %v1299 = vshrl.u32 %v1298, 7
        %v1300 = vsub.s32 0, %v1299
        %v1301 = vrot.slane %v1296, %v1300
        %v1311 = vunpack.c.l.b16 %v1288
        %v1312 = vunpack.c.l.b16 %v1289
        %v1313 = vunpack.c.l.b16 %v1290
        %v1314 = vunpack.c.l.b16 %v1291
        %v1315 = vunpack.c.l.b16 %v1292
        %v1316 = vunpack.c.l.b16 %v1293
        %v1317 = vunpack.c.l.b16 %v1294
        %v1318 = vunpack.c.l.b16 %v1295
        %v1319 = vpack.c.b16 %v1312, %v1311
        %v1320 = vpack.c.b16 %v1314, %v1313
        %v1321 = vpack.c.b16 %v1316, %v1315
        %v1322 = vpack.c.b16 %v1318, %v1317
        %vm1327 = vcmask 523264
        %v1329 = vsel %vm1327, %v1287, 0
        %1331 = vmatprep.subr.bf16.mxu0 0
        %1332 = vmatpush1.bf16.msra.mxu0 0
        %1333 = vmatprep.subr.bf16.mxu0 0
        %1334 = vmatpush1.bf16.msra.mxu0 0
        %1335 = vmatprep.subr.bf16.mxu0 0
        %1336 = vmatpush1.bf16.msra.mxu0 0
        %1337 = vmatprep.subr.bf16.mxu0 0
        %1338 = vmatpush1.bf16.msra.mxu0 0
        %1339 = vmatprep.subr.bf16.mxu0 0
        %1340 = vmatpush1.bf16.msra.mxu0 %v1322
        %1341 = vmatprep.subr.bf16.mxu0 0
        %1342 = vmatpush1.bf16.msra.mxu0 %v1321
        %1343 = vmatprep.subr.bf16.mxu0 0
        %1344 = vmatpush1.bf16.msra.mxu0 %v1320
        %1345 = vmatprep.subr.bf16.mxu0 0
        %1346 = vmatpush1.bf16.msra.mxu0 %v1319
        %1347 = vmatprep.subr.bf16.mxu0 0
        %1348 = vmatpush2.bf16.msra.mxu0 0
        %1349 = vmatprep.subr.bf16.mxu0 0
        %1350 = vmatpush2.bf16.msra.mxu0 0
        %1351 = vmatprep.subr.bf16.mxu0 0
        %1352 = vmatpush2.bf16.msra.mxu0 0
        %1353 = vmatprep.subr.bf16.mxu0 0
        %1354 = vmatpush2.bf16.msra.mxu0 0
        %1355 = vmatprep.subr.bf16.mxu0 0
        %1356 = vmatpush2.bf16.msra.mxu0 0
        %1357 = vmatprep.subr.bf16.mxu0 0
        %1358 = vmatpush2.bf16.msra.mxu0 0
        %1359 = vmatprep.subr.bf16.mxu0 0
        %1360 = vmatpush2.bf16.msra.mxu0 0
        %1361 = vmatprep.subr.bf16.mxu0 0
        %1362 = vmatpush2.bf16.msra.mxu0 0
        %1363 = vmatprep.mubr.bf16.mxu0 0
        %1364 = vmatmul.mubr.bf16.gmra.mxu0 %v1329
        %v1365 = vpop.f32.mrf.mxu0
        %v1366 = vadd.f32 %v1301, %v1365
        %v1367 = vpop.f32.mrf.mxu0
        %v1368 = vpop.f32.mrf.mxu0
        %v1369 = vpop.f32.mrf.mxu0
        %1370 = vdwg.mxu0
        %v1371 = vadd.f32 %v1218, %v1366
        %v1372 = vsel %vm1145, %v1371, 0.0
        %1373 = vadd.xlane.f32.xlu0 %v1372
        %v1374 = vpop.xlane.xlu0 %1373
        %v1375 = vmul.f32 %v1374, %v1192
        %v1376 = vsub.f32 %v1371, %v1375
        %v1377 = vmul.f32 %v1376, %v1376
        %v1378 = vsel %vm1145, %v1377, 0.0
        %1379 = vadd.xlane.f32.xlu0 %v1378
        %v1380 = vpop.xlane.xlu0 %1379
        %v1381 = vmul.f32 %v1380, %v1192
        %v1382 = vadd.f32 %v1381, 1e-05
        %v1383 = vrsqrt.pop %v1382
        %v1384 = vmul.f32 %v1376, %v1383
        %v1385 = vld [vmem:[%s12] sm:$0x1]
        %v1387 = vlaneseq
        %v1388 = vshrl.u32 %v1387, 7
        %v1389 = vsub.s32 0, %v1388
        %v1390 = vrot.slane %v1385, %v1389
        %v1392 = vmul.f32 %v1384, %v1390
        %v1393 = vld [vmem:[%s13] sm:$0x1]
        %v1395 = vlaneseq
        %v1396 = vshrl.u32 %v1395, 7
        %v1397 = vsub.s32 0, %v1396
        %v1398 = vrot.slane %v1393, %v1397
        %v1400 = vadd.f32 %v1392, %v1398
        %1401 = vst.msk [vmem:[%s591] sm:$0xff] %vm1145, %v1400
        %s1402 = sand.u32 %s368, 1
        %s1403 = scalar_lea.sflag [#allocation4], %s1402
        %s1404 = sand.u32 %s368, 1
        %s1405 = smul.addr %s1404, 8
        %s1406 = scalar_lea.vmem [#allocation3], %s1405
        // Predicated region
        $region125: #{tpu_custom_call.1} parent=112 // pred_check
          %p1407 = pneg %p378
        $region126: #{tpu_custom_call.1} parent=112 // pred_check_branch
          %1409 = sbr.rel (%p1407) target = $region128
        $region127: #{tpu_custom_call.1} parent=112 // pred_region
          %s1411 = ssub.s32 128, 128
          %1412 = vsyncadd %s1403, %s1411
          %s1413 = smul.addr %s32, 2
          %s1414 = sadd.s32 %s33, %s1413
          %s1415 = smul.addr %s1414, 128
          %s1416 = scalar_lea.hbm %s14, %s1415
          %s1418 = sshll.u32 %s1406, 4
          %s1419 = int_to_ptr.vmem [resolvable:$true] %s1418
          %1421 = dma.vmem_to_hbm [thread:$0]  %s1419, 128, %s1416, %s1403
        $region128: #{tpu_custom_call.1} parent=112 // pred_fallthru
          _
      $region113: #{tpu_custom_call.1} parent=5 // pred_fallthru
        _
      %p1422 = scmp.le.s32.totalorder 2, %s23
      // Predicated region
      $region129: #{tpu_custom_call.1} parent=5 // pred_check
        %p1423 = pneg %p1422
      $region130: #{tpu_custom_call.1} parent=5 // pred_check_branch
        %1425 = sbr.rel (%p1423) target = $region132
      $region131: #{tpu_custom_call.1} parent=5 // pred_region
        %s1426 = ssub.s32 %s23, 2
        // Predicated region
        $region133: #{tpu_custom_call.1} parent=131 // pred_check
          %p1427 = pneg %p384
        $region134: #{tpu_custom_call.1} parent=131 // pred_check_branch
          %1429 = sbr.rel (%p1427) target = $region136
        $region135: #{tpu_custom_call.1} parent=131 // pred_region
          %s1430 = sand.u32 %s369, 1
          %s1431 = scalar_lea.sflag [#allocation4], %s1430
          %s1432 = sand.u32 %s369, 1
          %s1433 = smul.addr %s1432, 8
          %s1434 = scalar_lea.vmem [#allocation3], %s1433
          %1435 = dma.done %s1431, 128
        $region136: #{tpu_custom_call.1} parent=131 // pred_fallthru
          _
      $region132: #{tpu_custom_call.1} parent=5 // pred_fallthru
        _
    $region6: #{tpu_custom_call.1} parent=1 // loop_footer
      %s27 = sadd.s32 1, %s23
    $region7: #{tpu_custom_call.1} parent=1 // loop_footer_branch
      %22 = sbr.rel target = $region3
    $region8: #{tpu_custom_call.1} parent=1 // loop_exit
      _
    %1436 = vsyncpa [#allocation4], 1
    %s1437 = scalar_lea.sflag [#allocation4], 1
    %1438 = vsyncpa %s1437, 1

</llo_original>
